<compile_context>
chip_gen: v7x
topology: tpu7x:2x2x1
jax: 0.10.0
libtpu: 0.0.40
codegen_flags: <defaults>
</compile_context>

<pallas_src>
import math
import numpy as np
import jax
import jax.numpy as jnp
from jax.experimental import pallas as pl
from jax.experimental.pallas import tpu as pltpu


def make_decoder_kernel(nhead, head_dim, nb, L, S, eps=1e-5):
    """nb = batches folded into one grid program (static)."""
    scale = 1.0 / math.sqrt(head_dim)
    H, hd = nhead, head_dim

    def kernel(tgt_ref, mem_ref, posd_ref, pose_ref,
               wq_ref, wk_ref, wv_ref, woh_ref, w1_ref, w2_ref,
               vec_ref, bf1_ref, out_ref):
        f32 = jnp.float32
        bf16 = jnp.bfloat16
        D = wq_ref.shape[1]
        Dkv = mem_ref.shape[2]

        # packed (9, D) parameter slab: biases + LayerNorm gamma/beta
        vec = vec_ref[...]
        bq, bk, bv, bo = vec[0:1], vec[1:2], vec[2:3], vec[3:4]
        g1, be1 = vec[4:5], vec[5:6]
        bf2 = vec[6:7]
        g2, be2 = vec[7:8], vec[8:9]

        # ---- fold the batch group into the matmul M dimension --------------
        # (leading-dim collapse; layout-trivial because L, S are multiples of 8)
        tgt = tgt_ref[...].reshape(nb * L, D)
        posd = posd_ref[...].reshape(nb * L, D)
        mem = mem_ref[...].reshape(nb * S, Dkv)
        pose = pose_ref[...].reshape(nb * S, Dkv)

        q_in = (tgt + posd).astype(bf16)   # with_pos_embed(tgt, pos_dec)
        k_in = (mem + pose).astype(bf16)   # with_pos_embed(memory, pos_enc)
        v_in = mem.astype(bf16)

        # ---- fused q/k/v projections on all rows of the group (bf16 -> f32) -
        q = jnp.dot(q_in, wq_ref[...], preferred_element_type=f32) + bq   # (nb*L, D)
        k = jnp.dot(k_in, wk_ref[...], preferred_element_type=f32) + bk   # (nb*S, D)
        v = jnp.dot(v_in, wv_ref[...], preferred_element_type=f32) + bv   # (nb*S, D)
        q = (q * scale).astype(bf16)                                      # hoisted scaling
        k = k.astype(bf16)
        v = v.astype(bf16)

        # ---- split heads once: static (row, lane) slices stacked on a
        #      combined (batch*head) axis -----------------------------------
        qh = jnp.stack([q[b * L:(b + 1) * L, h * hd:(h + 1) * hd]
                        for b in range(nb) for h in range(H)], 0)          # (nb*H, L, hd)
        kh = jnp.stack([k[b * S:(b + 1) * S, h * hd:(h + 1) * hd]
                        for b in range(nb) for h in range(H)], 0)          # (nb*H, S, hd)
        vh = jnp.stack([v[b * S:(b + 1) * S, h * hd:(h + 1) * hd]
                        for b in range(nb) for h in range(H)], 0)          # (nb*H, S, hd)

        # ---- attention: single batched MXU pass over all batches*heads -----
        # TODO(synk): attn_mask / key_padding_mask not supported (this forward is called with None)
        s = jnp.einsum('bld,bsd->bls', qh, kh,
                       preferred_element_type=f32)                          # (nb*H, L, S)
        s = s - jnp.max(s, axis=-1, keepdims=True)
        p = jnp.exp(s)
        p = p * pl.reciprocal(jnp.sum(p, axis=-1, keepdims=True), approx=True)
        ctx = jnp.einsum('bls,bsd->bld', p.astype(bf16), vh,
                         preferred_element_type=f32)                        # (nb*H, L, hd)

        # merge heads via per-head output-projection weights + head-axis sum
        part = jnp.einsum('bld,bde->ble', ctx.astype(bf16), woh_ref[...],
                          preferred_element_type=f32)                       # (nb*H, L, D)
        attn = jnp.sum(part.reshape(nb, H, L, D), axis=1).reshape(nb * L, D) + bo

        # ---- residual + LayerNorm 1 (f32) ----------------------------------
        x = tgt + attn
        mu = jnp.mean(x, axis=-1, keepdims=True)
        xc = x - mu
        var = jnp.mean(xc * xc, axis=-1, keepdims=True)
        xn = xc * jax.lax.rsqrt(var + eps) * g1 + be1

        # ---- FFN: linear1 -> relu -> linear2 (bf16 operands, f32 accumulate)
        hmid = jnp.dot(xn.astype(bf16), w1_ref[...],
                       preferred_element_type=f32) + bf1_ref[...]           # (nb*L, F)
        hmid = jnp.maximum(hmid, 0.0)
        ffn = jnp.dot(hmid.astype(bf16), w2_ref[...],
                      preferred_element_type=f32) + bf2                     # (nb*L, D)

        # ---- residual + LayerNorm 2 (f32) ----------------------------------
        y = xn + ffn
        mu2 = jnp.mean(y, axis=-1, keepdims=True)
        yc = y - mu2
        var2 = jnp.mean(yc * yc, axis=-1, keepdims=True)
        out = yc * jax.lax.rsqrt(var2 + eps) * g2 + be2

        # single lane-dense store of the whole group
        out_ref[...] = out.reshape(nb, L, D).astype(out_ref.dtype)

    return kernel


def decoder_forward(tgt, memory, params, nhead, pos_dec=None, pos_enc=None,
                    batch_group=None):
    """tgt: (L, N, D) seq-major, memory: (S, N, Dkv) seq-major (PyTorch MHA layout)."""
    L, N, D = tgt.shape
    S, _, Dkv = memory.shape
    hd = D // nhead
    F_ = params["w1"].shape[0]

    if pos_dec is None:
        pos_dec = jnp.zeros_like(tgt)
    if pos_enc is None:
        pos_enc = jnp.zeros_like(memory)

    # batch-major for the kernel
    tgt_b = jnp.transpose(tgt, (1, 0, 2))
    mem_b = jnp.transpose(memory, (1, 0, 2))
    posd_b = jnp.transpose(pos_dec, (1, 0, 2))
    pose_b = jnp.transpose(pos_enc, (1, 0, 2))

    # 2-wide parallel grid when the batch splits evenly (feeds both v7x TCs);
    # each program folds its NB batches into the matmul M dimension.
    if batch_group is None:
        G = 2 if (N % 2 == 0 and N >= 2) else 1
        NB = N // G
    else:
        NB = batch_group
        assert N % NB == 0
        G = N // NB

    bf16 = jnp.bfloat16
    # weights pre-laid-out as (in, out) and cast to bf16 for the MXU
    wq_t = params["wq"].T.astype(bf16)                               # (D, D)
    wk_t = params["wk"].T.astype(bf16)                               # (Dkv, D)
    wv_t = params["wv"].T.astype(bf16)                               # (Dkv, D)
    wo_h = params["wo"].T.reshape(nhead, hd, D).astype(bf16)         # (H, hd, D)
    wo_h = jnp.tile(wo_h, (NB, 1, 1))                                # (NB*H, hd, D)
    w1_t = params["w1"].T.astype(bf16)                               # (D, F)
    w2_t = params["w2"].T.astype(bf16)                               # (F, D)

    # pack the 9 D-length vectors (biases + LN params) into one (9, D) slab
    vec = jnp.stack([params["bq"], params["bk"], params["bv"], params["bo"],
                     params["g1"], params["be1"], params["bf2"],
                     params["g2"], params["be2"]], axis=0).astype(jnp.float32)
    bf1 = params["bf1"].reshape(1, F_).astype(jnp.float32)

    def grp_spec(ln, d):
        return pl.BlockSpec((NB, ln, d), lambda g: (g, 0, 0))

    def full2(a):
        return pl.BlockSpec(a.shape, lambda g: (0, 0))

    def full3(a):
        return pl.BlockSpec(a.shape, lambda g: (0, 0, 0))

    in_specs = [grp_spec(L, D), grp_spec(S, Dkv), grp_spec(L, D), grp_spec(S, Dkv),
                full2(wq_t), full2(wk_t), full2(wv_t), full3(wo_h),
                full2(w1_t), full2(w2_t), full2(vec), full2(bf1)]

    out = pl.pallas_call(
        make_decoder_kernel(nhead, hd, NB, L, S),
        out_shape=jax.ShapeDtypeStruct((N, L, D), jnp.float32),
        grid=(G,),
        in_specs=in_specs,
        out_specs=pl.BlockSpec((NB, L, D), lambda g: (g, 0, 0)),
        compiler_params=pltpu.CompilerParams(dimension_semantics=("parallel",)),
    )(tgt_b, mem_b, posd_b, pose_b, wq_t, wk_t, wv_t, wo_h, w1_t, w2_t, vec, bf1)

    return jnp.transpose(out, (1, 0, 2))


def decoder_reference(tgt, memory, params, nhead, pos_dec=None, pos_enc=None):
    """Pure-JAX (f32) mirror of the PyTorch forward (eval mode) for verification."""
    L, N, D = tgt.shape
    S = memory.shape[0]
    hd = D // nhead
    q_in = tgt if pos_dec is None else tgt + pos_dec
    k_in = memory if pos_enc is None else memory + pos_enc
    q = q_in @ params["wq"].T + params["bq"]
    k = k_in @ params["wk"].T + params["bk"]
    v = memory @ params["wv"].T + params["bv"]

    def split(x, Ld):
        return x.reshape(Ld, N, nhead, hd).transpose(1, 2, 0, 3)  # (N,H,Ld,hd)

    qh, kh, vh = split(q, L), split(k, S), split(v, S)
    s = jnp.einsum("nhld,nhsd->nhls", qh / math.sqrt(hd), kh)
    p = jax.nn.softmax(s, axis=-1)
    ctx = jnp.einsum("nhls,nhsd->nhld", p, vh)
    ctx = ctx.transpose(2, 0, 1, 3).reshape(L, N, D)
    attn = ctx @ params["wo"].T + params["bo"]

    def ln(x, g, b, eps=1e-5):
        mu = x.mean(-1, keepdims=True)
        var = ((x - mu) ** 2).mean(-1, keepdims=True)
        return (x - mu) / jnp.sqrt(var + eps) * g + b

    x = ln(tgt + attn, params["g1"], params["be1"])
    f = jnp.maximum(x @ params["w1"].T + params["bf1"], 0.0) @ params["w2"].T + params["bf2"]
    return ln(x + f, params["g2"], params["be2"])


if __name__ == "__main__":
    # FusionModule's Decoder config: d_model=256, nhead=8, dim_kv=256, dim_ff=1024
    d_model, nhead, dim_kv, dim_ff = 256, 8, 256, 1024
    L, S, N = 8, 16, 4   # small seq lengths, batch 4 (2 programs x 2 folded batches)

    key = jax.random.PRNGKey(0)
    ks = jax.random.split(key, 20)

    def rnd(k, shape, scale=0.05):
        return (scale * jax.random.normal(k, shape)).astype(jnp.float32)

    params = {
        "wq": rnd(ks[0], (d_model, d_model)),
        "wk": rnd(ks[1], (d_model, dim_kv)),
        "wv": rnd(ks[2], (d_model, dim_kv)),
        "bq": rnd(ks[3], (d_model,)),
        "bk": rnd(ks[4], (d_model,)),
        "bv": rnd(ks[5], (d_model,)),
        "wo": rnd(ks[6], (d_model, d_model)),
        "bo": rnd(ks[7], (d_model,)),
        "g1": jnp.ones((d_model,), jnp.float32),
        "be1": jnp.zeros((d_model,), jnp.float32),
        "w1": rnd(ks[8], (dim_ff, d_model)),
        "bf1": rnd(ks[9], (dim_ff,)),
        "w2": rnd(ks[10], (d_model, dim_ff)),
        "bf2": rnd(ks[11], (d_model,)),
        "g2": jnp.ones((d_model,), jnp.float32),
        "be2": jnp.zeros((d_model,), jnp.float32),
    }

    tgt = rnd(ks[12], (L, N, d_model), 1.0)
    memory = rnd(ks[13], (S, N, dim_kv), 1.0)
    pos_dec = rnd(ks[14], (L, N, d_model), 0.1)
    pos_enc = rnd(ks[15], (S, N, dim_kv), 0.1)

    out = decoder_forward(tgt, memory, params, nhead, pos_dec=pos_dec, pos_enc=pos_enc)
    out = jax.block_until_ready(out)

    ref = decoder_reference(tgt, memory, params, nhead, pos_dec=pos_dec, pos_enc=pos_enc)
    # tolerance covers bf16 MXU operands (f32 accumulate) + approx softmax
    # reciprocal compared against a pure-f32 reference.
    np.testing.assert_allclose(np.asarray(out), np.asarray(ref), rtol=2e-2, atol=2e-2)
    print("KERNEL_OK")
</pallas_src>

<mosaic_0001>
module attributes {stable_mosaic.version = 11 : i64} {
  func.func @kernel(%arg0: i32, %arg1: memref<2x8x256xf32, #tpu.memory_space<vmem>>, %arg2: memref<2x16x256xf32, #tpu.memory_space<vmem>>, %arg3: memref<2x8x256xf32, #tpu.memory_space<vmem>>, %arg4: memref<2x16x256xf32, #tpu.memory_space<vmem>>, %arg5: memref<256x256xbf16, #tpu.memory_space<vmem>>, %arg6: memref<256x256xbf16, #tpu.memory_space<vmem>>, %arg7: memref<256x256xbf16, #tpu.memory_space<vmem>>, %arg8: memref<16x32x256xbf16, #tpu.memory_space<vmem>>, %arg9: memref<256x1024xbf16, #tpu.memory_space<vmem>>, %arg10: memref<1024x256xbf16, #tpu.memory_space<vmem>>, %arg11: memref<9x256xf32, #tpu.memory_space<vmem>>, %arg12: memref<1x1024xf32, #tpu.memory_space<vmem>>, %arg13: memref<2x8x256xf32, #tpu.memory_space<vmem>>) attributes {dimension_semantics = [#tpu.dimension_semantics<parallel>], iteration_bounds = array<i64: 2>, scalar_prefetch = 0 : i64, scratch_operands = 0 : i64, tpu.core_type = #tpu.core_type<tc>, window_params = [{transform_indices = @transform_0, window_bounds = array<i64: 2, 8, 256>}, {transform_indices = @transform_1, window_bounds = array<i64: 2, 16, 256>}, {transform_indices = @transform_2, window_bounds = array<i64: 2, 8, 256>}, {transform_indices = @transform_3, window_bounds = array<i64: 2, 16, 256>}, {pipeline_mode = #tpu.pipeline_mode<synchronous>, transform_indices = @transform_4, window_bounds = array<i64: 256, 256>}, {pipeline_mode = #tpu.pipeline_mode<synchronous>, transform_indices = @transform_5, window_bounds = array<i64: 256, 256>}, {pipeline_mode = #tpu.pipeline_mode<synchronous>, transform_indices = @transform_6, window_bounds = array<i64: 256, 256>}, {pipeline_mode = #tpu.pipeline_mode<synchronous>, transform_indices = @transform_7, window_bounds = array<i64: 16, 32, 256>}, {pipeline_mode = #tpu.pipeline_mode<synchronous>, transform_indices = @transform_8, window_bounds = array<i64: 256, 1024>}, {pipeline_mode = #tpu.pipeline_mode<synchronous>, transform_indices = @transform_9, window_bounds = array<i64: 1024, 256>}, {pipeline_mode = #tpu.pipeline_mode<synchronous>, transform_indices = @transform_10, window_bounds = array<i64: 9, 256>}, {pipeline_mode = #tpu.pipeline_mode<synchronous>, transform_indices = @transform_11, window_bounds = array<i64: 1, 1024>}, {transform_indices = @transform_12, window_bounds = array<i64: 2, 8, 256>}]} {
    %c0 = arith.constant 0 : index
    %c0_0 = arith.constant 0 : index
    %0 = vector.load %arg11[%c0, %c0_0] : memref<9x256xf32, #tpu.memory_space<vmem>>, vector<9x256xf32>
    %1 = vector.extract_strided_slice %0 {offsets = [0, 0], sizes = [1, 256], strides = [1, 1]} : vector<9x256xf32> to vector<1x256xf32>
    %2 = vector.extract_strided_slice %0 {offsets = [1, 0], sizes = [1, 256], strides = [1, 1]} : vector<9x256xf32> to vector<1x256xf32>
    %3 = vector.extract_strided_slice %0 {offsets = [2, 0], sizes = [1, 256], strides = [1, 1]} : vector<9x256xf32> to vector<1x256xf32>
    %4 = vector.extract_strided_slice %0 {offsets = [3, 0], sizes = [1, 256], strides = [1, 1]} : vector<9x256xf32> to vector<1x256xf32>
    %5 = vector.extract_strided_slice %0 {offsets = [4, 0], sizes = [1, 256], strides = [1, 1]} : vector<9x256xf32> to vector<1x256xf32>
    %6 = vector.extract_strided_slice %0 {offsets = [5, 0], sizes = [1, 256], strides = [1, 1]} : vector<9x256xf32> to vector<1x256xf32>
    %7 = vector.extract_strided_slice %0 {offsets = [6, 0], sizes = [1, 256], strides = [1, 1]} : vector<9x256xf32> to vector<1x256xf32>
    %8 = vector.extract_strided_slice %0 {offsets = [7, 0], sizes = [1, 256], strides = [1, 1]} : vector<9x256xf32> to vector<1x256xf32>
    %9 = vector.extract_strided_slice %0 {offsets = [8, 0], sizes = [1, 256], strides = [1, 1]} : vector<9x256xf32> to vector<1x256xf32>
    %c0_1 = arith.constant 0 : index
    %c0_2 = arith.constant 0 : index
    %c0_3 = arith.constant 0 : index
    %10 = vector.load %arg1[%c0_1, %c0_2, %c0_3] : memref<2x8x256xf32, #tpu.memory_space<vmem>>, vector<2x8x256xf32>
    %11 = vector.shape_cast %10 : vector<2x8x256xf32> to vector<16x256xf32>
    %c0_4 = arith.constant 0 : index
    %c0_5 = arith.constant 0 : index
    %c0_6 = arith.constant 0 : index
    %12 = vector.load %arg3[%c0_4, %c0_5, %c0_6] : memref<2x8x256xf32, #tpu.memory_space<vmem>>, vector<2x8x256xf32>
    %13 = vector.shape_cast %12 : vector<2x8x256xf32> to vector<16x256xf32>
    %c0_7 = arith.constant 0 : index
    %c0_8 = arith.constant 0 : index
    %c0_9 = arith.constant 0 : index
    %14 = vector.load %arg2[%c0_7, %c0_8, %c0_9] : memref<2x16x256xf32, #tpu.memory_space<vmem>>, vector<2x16x256xf32>
    %15 = vector.shape_cast %14 : vector<2x16x256xf32> to vector<32x256xf32>
    %c0_10 = arith.constant 0 : index
    %c0_11 = arith.constant 0 : index
    %c0_12 = arith.constant 0 : index
    %16 = vector.load %arg4[%c0_10, %c0_11, %c0_12] : memref<2x16x256xf32, #tpu.memory_space<vmem>>, vector<2x16x256xf32>
    %17 = vector.shape_cast %16 : vector<2x16x256xf32> to vector<32x256xf32>
    %18 = arith.addf %11, %13 : vector<16x256xf32>
    %19 = arith.truncf %18 : vector<16x256xf32> to vector<16x256xbf16>
    %20 = arith.addf %15, %17 : vector<32x256xf32>
    %21 = arith.truncf %20 : vector<32x256xf32> to vector<32x256xbf16>
    %22 = arith.truncf %15 : vector<32x256xf32> to vector<32x256xbf16>
    %c0_13 = arith.constant 0 : index
    %c0_14 = arith.constant 0 : index
    %23 = vector.load %arg5[%c0_13, %c0_14] : memref<256x256xbf16, #tpu.memory_space<vmem>>, vector<256x256xbf16>
    %cst = arith.constant dense<0.000000e+00> : vector<16x256xf32>
    %24 = tpu.matmul %19, %23, %cst {dimension_numbers = #tpu.dot_dimension_numbers<[1], [0], [0], [1], [0, 0, 1, 1], [], []>} : vector<16x256xbf16>, vector<256x256xbf16>, vector<16x256xf32> -> vector<16x256xf32>
    %25 = vector.broadcast %1 : vector<1x256xf32> to vector<16x256xf32>
    %26 = arith.addf %24, %25 : vector<16x256xf32>
    %c0_15 = arith.constant 0 : index
    %c0_16 = arith.constant 0 : index
    %27 = vector.load %arg6[%c0_15, %c0_16] : memref<256x256xbf16, #tpu.memory_space<vmem>>, vector<256x256xbf16>
    %cst_17 = arith.constant dense<0.000000e+00> : vector<32x256xf32>
    %28 = tpu.matmul %21, %27, %cst_17 {dimension_numbers = #tpu.dot_dimension_numbers<[1], [0], [0], [1], [0, 0, 1, 1], [], []>} : vector<32x256xbf16>, vector<256x256xbf16>, vector<32x256xf32> -> vector<32x256xf32>
    %29 = vector.broadcast %2 : vector<1x256xf32> to vector<32x256xf32>
    %30 = arith.addf %28, %29 : vector<32x256xf32>
    %c0_18 = arith.constant 0 : index
    %c0_19 = arith.constant 0 : index
    %31 = vector.load %arg7[%c0_18, %c0_19] : memref<256x256xbf16, #tpu.memory_space<vmem>>, vector<256x256xbf16>
    %cst_20 = arith.constant dense<0.000000e+00> : vector<32x256xf32>
    %32 = tpu.matmul %22, %31, %cst_20 {dimension_numbers = #tpu.dot_dimension_numbers<[1], [0], [0], [1], [0, 0, 1, 1], [], []>} : vector<32x256xbf16>, vector<256x256xbf16>, vector<32x256xf32> -> vector<32x256xf32>
    %33 = vector.broadcast %3 : vector<1x256xf32> to vector<32x256xf32>
    %34 = arith.addf %32, %33 : vector<32x256xf32>
    %cst_21 = arith.constant 0.176776692 : f32
    %35 = vector.broadcast %cst_21 : f32 to vector<16x256xf32>
    %36 = arith.mulf %26, %35 : vector<16x256xf32>
    %37 = arith.truncf %36 : vector<16x256xf32> to vector<16x256xbf16>
    %38 = arith.truncf %30 : vector<32x256xf32> to vector<32x256xbf16>
    %39 = arith.truncf %34 : vector<32x256xf32> to vector<32x256xbf16>
    %40 = vector.extract_strided_slice %37 {offsets = [0, 0], sizes = [8, 32], strides = [1, 1]} : vector<16x256xbf16> to vector<8x32xbf16>
    %41 = vector.extract_strided_slice %37 {offsets = [0, 32], sizes = [8, 32], strides = [1, 1]} : vector<16x256xbf16> to vector<8x32xbf16>
    %42 = vector.extract_strided_slice %37 {offsets = [0, 64], sizes = [8, 32], strides = [1, 1]} : vector<16x256xbf16> to vector<8x32xbf16>
    %43 = vector.extract_strided_slice %37 {offsets = [0, 96], sizes = [8, 32], strides = [1, 1]} : vector<16x256xbf16> to vector<8x32xbf16>
    %44 = vector.extract_strided_slice %37 {offsets = [0, 128], sizes = [8, 32], strides = [1, 1]} : vector<16x256xbf16> to vector<8x32xbf16>
    %45 = vector.extract_strided_slice %37 {offsets = [0, 160], sizes = [8, 32], strides = [1, 1]} : vector<16x256xbf16> to vector<8x32xbf16>
    %46 = vector.extract_strided_slice %37 {offsets = [0, 192], sizes = [8, 32], strides = [1, 1]} : vector<16x256xbf16> to vector<8x32xbf16>
    %47 = vector.extract_strided_slice %37 {offsets = [0, 224], sizes = [8, 32], strides = [1, 1]} : vector<16x256xbf16> to vector<8x32xbf16>
    %48 = vector.extract_strided_slice %37 {offsets = [8, 0], sizes = [8, 32], strides = [1, 1]} : vector<16x256xbf16> to vector<8x32xbf16>
    %49 = vector.extract_strided_slice %37 {offsets = [8, 32], sizes = [8, 32], strides = [1, 1]} : vector<16x256xbf16> to vector<8x32xbf16>
    %50 = vector.extract_strided_slice %37 {offsets = [8, 64], sizes = [8, 32], strides = [1, 1]} : vector<16x256xbf16> to vector<8x32xbf16>
    %51 = vector.extract_strided_slice %37 {offsets = [8, 96], sizes = [8, 32], strides = [1, 1]} : vector<16x256xbf16> to vector<8x32xbf16>
    %52 = vector.extract_strided_slice %37 {offsets = [8, 128], sizes = [8, 32], strides = [1, 1]} : vector<16x256xbf16> to vector<8x32xbf16>
    %53 = vector.extract_strided_slice %37 {offsets = [8, 160], sizes = [8, 32], strides = [1, 1]} : vector<16x256xbf16> to vector<8x32xbf16>
    %54 = vector.extract_strided_slice %37 {offsets = [8, 192], sizes = [8, 32], strides = [1, 1]} : vector<16x256xbf16> to vector<8x32xbf16>
    %55 = vector.extract_strided_slice %37 {offsets = [8, 224], sizes = [8, 32], strides = [1, 1]} : vector<16x256xbf16> to vector<8x32xbf16>
    %56 = vector.shape_cast %40 : vector<8x32xbf16> to vector<1x8x32xbf16>
    %57 = vector.shape_cast %41 : vector<8x32xbf16> to vector<1x8x32xbf16>
    %58 = vector.shape_cast %42 : vector<8x32xbf16> to vector<1x8x32xbf16>
    %59 = vector.shape_cast %43 : vector<8x32xbf16> to vector<1x8x32xbf16>
    %60 = vector.shape_cast %44 : vector<8x32xbf16> to vector<1x8x32xbf16>
    %61 = vector.shape_cast %45 : vector<8x32xbf16> to vector<1x8x32xbf16>
    %62 = vector.shape_cast %46 : vector<8x32xbf16> to vector<1x8x32xbf16>
    %63 = vector.shape_cast %47 : vector<8x32xbf16> to vector<1x8x32xbf16>
    %64 = vector.shape_cast %48 : vector<8x32xbf16> to vector<1x8x32xbf16>
    %65 = vector.shape_cast %49 : vector<8x32xbf16> to vector<1x8x32xbf16>
    %66 = vector.shape_cast %50 : vector<8x32xbf16> to vector<1x8x32xbf16>
    %67 = vector.shape_cast %51 : vector<8x32xbf16> to vector<1x8x32xbf16>
    %68 = vector.shape_cast %52 : vector<8x32xbf16> to vector<1x8x32xbf16>
    %69 = vector.shape_cast %53 : vector<8x32xbf16> to vector<1x8x32xbf16>
    %70 = vector.shape_cast %54 : vector<8x32xbf16> to vector<1x8x32xbf16>
    %71 = vector.shape_cast %55 : vector<8x32xbf16> to vector<1x8x32xbf16>
    %72 = tpu.concatenate %56, %57, %58, %59, %60, %61, %62, %63, %64, %65, %66, %67, %68, %69, %70, %71 in 0 : vector<1x8x32xbf16>, vector<1x8x32xbf16>, vector<1x8x32xbf16>, vector<1x8x32xbf16>, vector<1x8x32xbf16>, vector<1x8x32xbf16>, vector<1x8x32xbf16>, vector<1x8x32xbf16>, vector<1x8x32xbf16>, vector<1x8x32xbf16>, vector<1x8x32xbf16>, vector<1x8x32xbf16>, vector<1x8x32xbf16>, vector<1x8x32xbf16>, vector<1x8x32xbf16>, vector<1x8x32xbf16> -> vector<16x8x32xbf16>
    %73 = vector.extract_strided_slice %38 {offsets = [0, 0], sizes = [16, 32], strides = [1, 1]} : vector<32x256xbf16> to vector<16x32xbf16>
    %74 = vector.extract_strided_slice %38 {offsets = [0, 32], sizes = [16, 32], strides = [1, 1]} : vector<32x256xbf16> to vector<16x32xbf16>
    %75 = vector.extract_strided_slice %38 {offsets = [0, 64], sizes = [16, 32], strides = [1, 1]} : vector<32x256xbf16> to vector<16x32xbf16>
    %76 = vector.extract_strided_slice %38 {offsets = [0, 96], sizes = [16, 32], strides = [1, 1]} : vector<32x256xbf16> to vector<16x32xbf16>
    %77 = vector.extract_strided_slice %38 {offsets = [0, 128], sizes = [16, 32], strides = [1, 1]} : vector<32x256xbf16> to vector<16x32xbf16>
    %78 = vector.extract_strided_slice %38 {offsets = [0, 160], sizes = [16, 32], strides = [1, 1]} : vector<32x256xbf16> to vector<16x32xbf16>
    %79 = vector.extract_strided_slice %38 {offsets = [0, 192], sizes = [16, 32], strides = [1, 1]} : vector<32x256xbf16> to vector<16x32xbf16>
    %80 = vector.extract_strided_slice %38 {offsets = [0, 224], sizes = [16, 32], strides = [1, 1]} : vector<32x256xbf16> to vector<16x32xbf16>
    %81 = vector.extract_strided_slice %38 {offsets = [16, 0], sizes = [16, 32], strides = [1, 1]} : vector<32x256xbf16> to vector<16x32xbf16>
    %82 = vector.extract_strided_slice %38 {offsets = [16, 32], sizes = [16, 32], strides = [1, 1]} : vector<32x256xbf16> to vector<16x32xbf16>
    %83 = vector.extract_strided_slice %38 {offsets = [16, 64], sizes = [16, 32], strides = [1, 1]} : vector<32x256xbf16> to vector<16x32xbf16>
    %84 = vector.extract_strided_slice %38 {offsets = [16, 96], sizes = [16, 32], strides = [1, 1]} : vector<32x256xbf16> to vector<16x32xbf16>
    %85 = vector.extract_strided_slice %38 {offsets = [16, 128], sizes = [16, 32], strides = [1, 1]} : vector<32x256xbf16> to vector<16x32xbf16>
    %86 = vector.extract_strided_slice %38 {offsets = [16, 160], sizes = [16, 32], strides = [1, 1]} : vector<32x256xbf16> to vector<16x32xbf16>
    %87 = vector.extract_strided_slice %38 {offsets = [16, 192], sizes = [16, 32], strides = [1, 1]} : vector<32x256xbf16> to vector<16x32xbf16>
    %88 = vector.extract_strided_slice %38 {offsets = [16, 224], sizes = [16, 32], strides = [1, 1]} : vector<32x256xbf16> to vector<16x32xbf16>
    %89 = vector.shape_cast %73 : vector<16x32xbf16> to vector<1x16x32xbf16>
    %90 = vector.shape_cast %74 : vector<16x32xbf16> to vector<1x16x32xbf16>
    %91 = vector.shape_cast %75 : vector<16x32xbf16> to vector<1x16x32xbf16>
    %92 = vector.shape_cast %76 : vector<16x32xbf16> to vector<1x16x32xbf16>
    %93 = vector.shape_cast %77 : vector<16x32xbf16> to vector<1x16x32xbf16>
    %94 = vector.shape_cast %78 : vector<16x32xbf16> to vector<1x16x32xbf16>
    %95 = vector.shape_cast %79 : vector<16x32xbf16> to vector<1x16x32xbf16>
    %96 = vector.shape_cast %80 : vector<16x32xbf16> to vector<1x16x32xbf16>
    %97 = vector.shape_cast %81 : vector<16x32xbf16> to vector<1x16x32xbf16>
    %98 = vector.shape_cast %82 : vector<16x32xbf16> to vector<1x16x32xbf16>
    %99 = vector.shape_cast %83 : vector<16x32xbf16> to vector<1x16x32xbf16>
    %100 = vector.shape_cast %84 : vector<16x32xbf16> to vector<1x16x32xbf16>
    %101 = vector.shape_cast %85 : vector<16x32xbf16> to vector<1x16x32xbf16>
    %102 = vector.shape_cast %86 : vector<16x32xbf16> to vector<1x16x32xbf16>
    %103 = vector.shape_cast %87 : vector<16x32xbf16> to vector<1x16x32xbf16>
    %104 = vector.shape_cast %88 : vector<16x32xbf16> to vector<1x16x32xbf16>
    %105 = tpu.concatenate %89, %90, %91, %92, %93, %94, %95, %96, %97, %98, %99, %100, %101, %102, %103, %104 in 0 : vector<1x16x32xbf16>, vector<1x16x32xbf16>, vector<1x16x32xbf16>, vector<1x16x32xbf16>, vector<1x16x32xbf16>, vector<1x16x32xbf16>, vector<1x16x32xbf16>, vector<1x16x32xbf16>, vector<1x16x32xbf16>, vector<1x16x32xbf16>, vector<1x16x32xbf16>, vector<1x16x32xbf16>, vector<1x16x32xbf16>, vector<1x16x32xbf16>, vector<1x16x32xbf16>, vector<1x16x32xbf16> -> vector<16x16x32xbf16>
    %106 = vector.extract_strided_slice %39 {offsets = [0, 0], sizes = [16, 32], strides = [1, 1]} : vector<32x256xbf16> to vector<16x32xbf16>
    %107 = vector.extract_strided_slice %39 {offsets = [0, 32], sizes = [16, 32], strides = [1, 1]} : vector<32x256xbf16> to vector<16x32xbf16>
    %108 = vector.extract_strided_slice %39 {offsets = [0, 64], sizes = [16, 32], strides = [1, 1]} : vector<32x256xbf16> to vector<16x32xbf16>
    %109 = vector.extract_strided_slice %39 {offsets = [0, 96], sizes = [16, 32], strides = [1, 1]} : vector<32x256xbf16> to vector<16x32xbf16>
    %110 = vector.extract_strided_slice %39 {offsets = [0, 128], sizes = [16, 32], strides = [1, 1]} : vector<32x256xbf16> to vector<16x32xbf16>
    %111 = vector.extract_strided_slice %39 {offsets = [0, 160], sizes = [16, 32], strides = [1, 1]} : vector<32x256xbf16> to vector<16x32xbf16>
    %112 = vector.extract_strided_slice %39 {offsets = [0, 192], sizes = [16, 32], strides = [1, 1]} : vector<32x256xbf16> to vector<16x32xbf16>
    %113 = vector.extract_strided_slice %39 {offsets = [0, 224], sizes = [16, 32], strides = [1, 1]} : vector<32x256xbf16> to vector<16x32xbf16>
    %114 = vector.extract_strided_slice %39 {offsets = [16, 0], sizes = [16, 32], strides = [1, 1]} : vector<32x256xbf16> to vector<16x32xbf16>
    %115 = vector.extract_strided_slice %39 {offsets = [16, 32], sizes = [16, 32], strides = [1, 1]} : vector<32x256xbf16> to vector<16x32xbf16>
    %116 = vector.extract_strided_slice %39 {offsets = [16, 64], sizes = [16, 32], strides = [1, 1]} : vector<32x256xbf16> to vector<16x32xbf16>
    %117 = vector.extract_strided_slice %39 {offsets = [16, 96], sizes = [16, 32], strides = [1, 1]} : vector<32x256xbf16> to vector<16x32xbf16>
    %118 = vector.extract_strided_slice %39 {offsets = [16, 128], sizes = [16, 32], strides = [1, 1]} : vector<32x256xbf16> to vector<16x32xbf16>
    %119 = vector.extract_strided_slice %39 {offsets = [16, 160], sizes = [16, 32], strides = [1, 1]} : vector<32x256xbf16> to vector<16x32xbf16>
    %120 = vector.extract_strided_slice %39 {offsets = [16, 192], sizes = [16, 32], strides = [1, 1]} : vector<32x256xbf16> to vector<16x32xbf16>
    %121 = vector.extract_strided_slice %39 {offsets = [16, 224], sizes = [16, 32], strides = [1, 1]} : vector<32x256xbf16> to vector<16x32xbf16>
    %122 = vector.shape_cast %106 : vector<16x32xbf16> to vector<1x16x32xbf16>
    %123 = vector.shape_cast %107 : vector<16x32xbf16> to vector<1x16x32xbf16>
    %124 = vector.shape_cast %108 : vector<16x32xbf16> to vector<1x16x32xbf16>
    %125 = vector.shape_cast %109 : vector<16x32xbf16> to vector<1x16x32xbf16>
    %126 = vector.shape_cast %110 : vector<16x32xbf16> to vector<1x16x32xbf16>
    %127 = vector.shape_cast %111 : vector<16x32xbf16> to vector<1x16x32xbf16>
    %128 = vector.shape_cast %112 : vector<16x32xbf16> to vector<1x16x32xbf16>
    %129 = vector.shape_cast %113 : vector<16x32xbf16> to vector<1x16x32xbf16>
    %130 = vector.shape_cast %114 : vector<16x32xbf16> to vector<1x16x32xbf16>
    %131 = vector.shape_cast %115 : vector<16x32xbf16> to vector<1x16x32xbf16>
    %132 = vector.shape_cast %116 : vector<16x32xbf16> to vector<1x16x32xbf16>
    %133 = vector.shape_cast %117 : vector<16x32xbf16> to vector<1x16x32xbf16>
    %134 = vector.shape_cast %118 : vector<16x32xbf16> to vector<1x16x32xbf16>
    %135 = vector.shape_cast %119 : vector<16x32xbf16> to vector<1x16x32xbf16>
    %136 = vector.shape_cast %120 : vector<16x32xbf16> to vector<1x16x32xbf16>
    %137 = vector.shape_cast %121 : vector<16x32xbf16> to vector<1x16x32xbf16>
    %138 = tpu.concatenate %122, %123, %124, %125, %126, %127, %128, %129, %130, %131, %132, %133, %134, %135, %136, %137 in 0 : vector<1x16x32xbf16>, vector<1x16x32xbf16>, vector<1x16x32xbf16>, vector<1x16x32xbf16>, vector<1x16x32xbf16>, vector<1x16x32xbf16>, vector<1x16x32xbf16>, vector<1x16x32xbf16>, vector<1x16x32xbf16>, vector<1x16x32xbf16>, vector<1x16x32xbf16>, vector<1x16x32xbf16>, vector<1x16x32xbf16>, vector<1x16x32xbf16>, vector<1x16x32xbf16>, vector<1x16x32xbf16> -> vector<16x16x32xbf16>
    "tpu.trace_start"() <{level = 10 : i32, message = "bld,bsd->bls"}> : () -> ()
    %cst_22 = arith.constant dense<0.000000e+00> : vector<16x8x16xf32>
    %139 = tpu.matmul %72, %105, %cst_22 {dimension_numbers = #tpu.dot_dimension_numbers<[2], [2], [1], [1], [0, 0, 0, 1, 1, 1], [0], [0]>} : vector<16x8x32xbf16>, vector<16x16x32xbf16>, vector<16x8x16xf32> -> vector<16x8x16xf32>
    "tpu.trace_stop"() : () -> ()
    %cst_23 = arith.constant dense<0xFF800000> : vector<16x8xf32>
    %140 = vector.multi_reduction <maximumf>, %139, %cst_23 [2] : vector<16x8x16xf32> to vector<16x8xf32>
    %141 = vector.shape_cast %140 : vector<16x8xf32> to vector<16x8x1xf32>
    %142 = vector.broadcast %141 : vector<16x8x1xf32> to vector<16x8x16xf32>
    %143 = arith.subf %139, %142 : vector<16x8x16xf32>
    %144 = math.exp %143 : vector<16x8x16xf32>
    %cst_24 = arith.constant dense<0.000000e+00> : vector<16x8xf32>
    %145 = vector.multi_reduction <add>, %144, %cst_24 [2] : vector<16x8x16xf32> to vector<16x8xf32>
    %146 = vector.shape_cast %145 : vector<16x8xf32> to vector<16x8x1xf32>
    %147 = tpu.reciprocal %146 {approx = true} : vector<16x8x1xf32> -> vector<16x8x1xf32>
    %148 = vector.broadcast %147 : vector<16x8x1xf32> to vector<16x8x16xf32>
    %149 = arith.mulf %144, %148 : vector<16x8x16xf32>
    %150 = arith.truncf %149 : vector<16x8x16xf32> to vector<16x8x16xbf16>
    "tpu.trace_start"() <{level = 10 : i32, message = "bls,bsd->bld"}> : () -> ()
    %cst_25 = arith.constant dense<0.000000e+00> : vector<16x8x32xf32>
    %151 = tpu.matmul %150, %138, %cst_25 {dimension_numbers = #tpu.dot_dimension_numbers<[2], [1], [1], [2], [0, 0, 0, 1, 1, 2], [0], [0]>} : vector<16x8x16xbf16>, vector<16x16x32xbf16>, vector<16x8x32xf32> -> vector<16x8x32xf32>
    "tpu.trace_stop"() : () -> ()
    %152 = arith.truncf %151 : vector<16x8x32xf32> to vector<16x8x32xbf16>
    %c0_26 = arith.constant 0 : index
    %c0_27 = arith.constant 0 : index
    %c0_28 = arith.constant 0 : index
    %153 = vector.load %arg8[%c0_26, %c0_27, %c0_28] : memref<16x32x256xbf16, #tpu.memory_space<vmem>>, vector<16x32x256xbf16>
    "tpu.trace_start"() <{level = 10 : i32, message = "bld,bde->ble"}> : () -> ()
    %cst_29 = arith.constant dense<0.000000e+00> : vector<16x8x256xf32>
    %154 = tpu.matmul %152, %153, %cst_29 {dimension_numbers = #tpu.dot_dimension_numbers<[2], [1], [1], [2], [0, 0, 0, 1, 1, 2], [0], [0]>} : vector<16x8x32xbf16>, vector<16x32x256xbf16>, vector<16x8x256xf32> -> vector<16x8x256xf32>
    "tpu.trace_stop"() : () -> ()
    %155 = vector.shape_cast %154 : vector<16x8x256xf32> to vector<2x8x8x256xf32>
    %cst_30 = arith.constant dense<0.000000e+00> : vector<2x8x256xf32>
    %156 = vector.multi_reduction <add>, %155, %cst_30 [1] : vector<2x8x8x256xf32> to vector<2x8x256xf32>
    %157 = vector.shape_cast %156 : vector<2x8x256xf32> to vector<16x256xf32>
    %158 = vector.broadcast %4 : vector<1x256xf32> to vector<16x256xf32>
    %159 = arith.addf %157, %158 : vector<16x256xf32>
    %160 = arith.addf %11, %159 : vector<16x256xf32>
    %cst_31 = arith.constant dense<0.000000e+00> : vector<16xf32>
    %161 = vector.multi_reduction <add>, %160, %cst_31 [1] : vector<16x256xf32> to vector<16xf32>
    %162 = vector.shape_cast %161 : vector<16xf32> to vector<16x1xf32>
    %cst_32 = arith.constant 2.560000e+02 : f32
    %163 = vector.broadcast %cst_32 : f32 to vector<16x1xf32>
    %164 = arith.divf %162, %163 : vector<16x1xf32>
    %165 = vector.broadcast %164 : vector<16x1xf32> to vector<16x256xf32>
    %166 = arith.subf %160, %165 : vector<16x256xf32>
    %167 = arith.mulf %166, %166 : vector<16x256xf32>
    %cst_33 = arith.constant dense<0.000000e+00> : vector<16xf32>
    %168 = vector.multi_reduction <add>, %167, %cst_33 [1] : vector<16x256xf32> to vector<16xf32>
    %169 = vector.shape_cast %168 : vector<16xf32> to vector<16x1xf32>
    %cst_34 = arith.constant 2.560000e+02 : f32
    %170 = vector.broadcast %cst_34 : f32 to vector<16x1xf32>
    %171 = arith.divf %169, %170 : vector<16x1xf32>
    %cst_35 = arith.constant 9.99999974E-6 : f32
    %172 = vector.broadcast %cst_35 : f32 to vector<16x1xf32>
    %173 = arith.addf %171, %172 : vector<16x1xf32>
    %174 = math.rsqrt %173 : vector<16x1xf32>
    %175 = vector.broadcast %174 : vector<16x1xf32> to vector<16x256xf32>
    %176 = arith.mulf %166, %175 : vector<16x256xf32>
    %177 = vector.broadcast %5 : vector<1x256xf32> to vector<16x256xf32>
    %178 = arith.mulf %176, %177 : vector<16x256xf32>
    %179 = vector.broadcast %6 : vector<1x256xf32> to vector<16x256xf32>
    %180 = arith.addf %178, %179 : vector<16x256xf32>
    %181 = arith.truncf %180 : vector<16x256xf32> to vector<16x256xbf16>
    %c0_36 = arith.constant 0 : index
    %c0_37 = arith.constant 0 : index
    %182 = vector.load %arg9[%c0_36, %c0_37] : memref<256x1024xbf16, #tpu.memory_space<vmem>>, vector<256x1024xbf16>
    %cst_38 = arith.constant dense<0.000000e+00> : vector<16x1024xf32>
    %183 = tpu.matmul %181, %182, %cst_38 {dimension_numbers = #tpu.dot_dimension_numbers<[1], [0], [0], [1], [0, 0, 1, 1], [], []>} : vector<16x256xbf16>, vector<256x1024xbf16>, vector<16x1024xf32> -> vector<16x1024xf32>
    %c0_39 = arith.constant 0 : index
    %c0_40 = arith.constant 0 : index
    %184 = vector.load %arg12[%c0_39, %c0_40] : memref<1x1024xf32, #tpu.memory_space<vmem>>, vector<1x1024xf32>
    %185 = vector.broadcast %184 : vector<1x1024xf32> to vector<16x1024xf32>
    %186 = arith.addf %183, %185 : vector<16x1024xf32>
    %cst_41 = arith.constant 0.000000e+00 : f32
    %187 = vector.broadcast %cst_41 : f32 to vector<16x1024xf32>
    %188 = arith.maximumf %186, %187 : vector<16x1024xf32>
    %189 = arith.truncf %188 : vector<16x1024xf32> to vector<16x1024xbf16>
    %c0_42 = arith.constant 0 : index
    %c0_43 = arith.constant 0 : index
    %190 = vector.load %arg10[%c0_42, %c0_43] : memref<1024x256xbf16, #tpu.memory_space<vmem>>, vector<1024x256xbf16>
    %cst_44 = arith.constant dense<0.000000e+00> : vector<16x256xf32>
    %191 = tpu.matmul %189, %190, %cst_44 {dimension_numbers = #tpu.dot_dimension_numbers<[1], [0], [0], [1], [0, 0, 1, 1], [], []>} : vector<16x1024xbf16>, vector<1024x256xbf16>, vector<16x256xf32> -> vector<16x256xf32>
    %192 = vector.broadcast %7 : vector<1x256xf32> to vector<16x256xf32>
    %193 = arith.addf %191, %192 : vector<16x256xf32>
    %194 = arith.addf %180, %193 : vector<16x256xf32>
    %cst_45 = arith.constant dense<0.000000e+00> : vector<16xf32>
    %195 = vector.multi_reduction <add>, %194, %cst_45 [1] : vector<16x256xf32> to vector<16xf32>
    %196 = vector.shape_cast %195 : vector<16xf32> to vector<16x1xf32>
    %cst_46 = arith.constant 2.560000e+02 : f32
    %197 = vector.broadcast %cst_46 : f32 to vector<16x1xf32>
    %198 = arith.divf %196, %197 : vector<16x1xf32>
    %199 = vector.broadcast %198 : vector<16x1xf32> to vector<16x256xf32>
    %200 = arith.subf %194, %199 : vector<16x256xf32>
    %201 = arith.mulf %200, %200 : vector<16x256xf32>
    %cst_47 = arith.constant dense<0.000000e+00> : vector<16xf32>
    %202 = vector.multi_reduction <add>, %201, %cst_47 [1] : vector<16x256xf32> to vector<16xf32>
    %203 = vector.shape_cast %202 : vector<16xf32> to vector<16x1xf32>
    %cst_48 = arith.constant 2.560000e+02 : f32
    %204 = vector.broadcast %cst_48 : f32 to vector<16x1xf32>
    %205 = arith.divf %203, %204 : vector<16x1xf32>
    %cst_49 = arith.constant 9.99999974E-6 : f32
    %206 = vector.broadcast %cst_49 : f32 to vector<16x1xf32>
    %207 = arith.addf %205, %206 : vector<16x1xf32>
    %208 = math.rsqrt %207 : vector<16x1xf32>
    %209 = vector.broadcast %208 : vector<16x1xf32> to vector<16x256xf32>
    %210 = arith.mulf %200, %209 : vector<16x256xf32>
    %211 = vector.broadcast %8 : vector<1x256xf32> to vector<16x256xf32>
    %212 = arith.mulf %210, %211 : vector<16x256xf32>
    %213 = vector.broadcast %9 : vector<1x256xf32> to vector<16x256xf32>
    %214 = arith.addf %212, %213 : vector<16x256xf32>
    %215 = vector.shape_cast %214 : vector<16x256xf32> to vector<2x8x256xf32>
    %c0_50 = arith.constant 0 : index
    %c0_51 = arith.constant 0 : index
    %c0_52 = arith.constant 0 : index
    %216 = vector.load %arg13[%c0_50, %c0_51, %c0_52] : memref<2x8x256xf32, #tpu.memory_space<vmem>>, vector<2x8x256xf32>
    tpu.vector_store %arg13[%c0_50, %c0_51, %c0_52], %215 {strides = array<i32>} : memref<2x8x256xf32, #tpu.memory_space<vmem>>, vector<2x8x256xf32>,
    return
  }
  func.func @transform_0(%arg0: i32) -> (i32, i32, i32) {
    %c0_i32 = arith.constant 0 : i32
    %c0_i32_0 = arith.constant 0 : i32
    %c0_i32_1 = arith.constant 0 : i32
    return %arg0, %c0_i32, %c0_i32_0 : i32, i32, i32
  }
  func.func @transform_1(%arg0: i32) -> (i32, i32, i32) {
    %c0_i32 = arith.constant 0 : i32
    %c0_i32_0 = arith.constant 0 : i32
    %c0_i32_1 = arith.constant 0 : i32
    return %arg0, %c0_i32, %c0_i32_0 : i32, i32, i32
  }
  func.func @transform_2(%arg0: i32) -> (i32, i32, i32) {
    %c0_i32 = arith.constant 0 : i32
    %c0_i32_0 = arith.constant 0 : i32
    %c0_i32_1 = arith.constant 0 : i32
    return %arg0, %c0_i32, %c0_i32_0 : i32, i32, i32
  }
  func.func @transform_3(%arg0: i32) -> (i32, i32, i32) {
    %c0_i32 = arith.constant 0 : i32
    %c0_i32_0 = arith.constant 0 : i32
    %c0_i32_1 = arith.constant 0 : i32
    return %arg0, %c0_i32, %c0_i32_0 : i32, i32, i32
  }
  func.func @transform_4(%arg0: i32) -> (i32, i32) {
    %c0_i32 = arith.constant 0 : i32
    %c0_i32_0 = arith.constant 0 : i32
    %c0_i32_1 = arith.constant 0 : i32
    return %c0_i32, %c0_i32_0 : i32, i32
  }
  func.func @transform_5(%arg0: i32) -> (i32, i32) {
    %c0_i32 = arith.constant 0 : i32
    %c0_i32_0 = arith.constant 0 : i32
    %c0_i32_1 = arith.constant 0 : i32
    return %c0_i32, %c0_i32_0 : i32, i32
  }
  func.func @transform_6(%arg0: i32) -> (i32, i32) {
    %c0_i32 = arith.constant 0 : i32
    %c0_i32_0 = arith.constant 0 : i32
    %c0_i32_1 = arith.constant 0 : i32
    return %c0_i32, %c0_i32_0 : i32, i32
  }
  func.func @transform_7(%arg0: i32) -> (i32, i32, i32) {
    %c0_i32 = arith.constant 0 : i32
    %c0_i32_0 = arith.constant 0 : i32
    %c0_i32_1 = arith.constant 0 : i32
    %c0_i32_2 = arith.constant 0 : i32
    return %c0_i32, %c0_i32_0, %c0_i32_1 : i32, i32, i32
  }
  func.func @transform_8(%arg0: i32) -> (i32, i32) {
    %c0_i32 = arith.constant 0 : i32
    %c0_i32_0 = arith.constant 0 : i32
    %c0_i32_1 = arith.constant 0 : i32
    return %c0_i32, %c0_i32_0 : i32, i32
  }
  func.func @transform_9(%arg0: i32) -> (i32, i32) {
    %c0_i32 = arith.constant 0 : i32
    %c0_i32_0 = arith.constant 0 : i32
    %c0_i32_1 = arith.constant 0 : i32
    return %c0_i32, %c0_i32_0 : i32, i32
  }
  func.func @transform_10(%arg0: i32) -> (i32, i32) {
    %c0_i32 = arith.constant 0 : i32
    %c0_i32_0 = arith.constant 0 : i32
    %c0_i32_1 = arith.constant 0 : i32
    return %c0_i32, %c0_i32_0 : i32, i32
  }
  func.func @transform_11(%arg0: i32) -> (i32, i32) {
    %c0_i32 = arith.constant 0 : i32
    %c0_i32_0 = arith.constant 0 : i32
    %c0_i32_1 = arith.constant 0 : i32
    return %c0_i32, %c0_i32_0 : i32, i32
  }
  func.func @transform_12(%arg0: i32) -> (i32, i32, i32) {
    %c0_i32 = arith.constant 0 : i32
    %c0_i32_0 = arith.constant 0 : i32
    %c0_i32_1 = arith.constant 0 : i32
    return %arg0, %c0_i32, %c0_i32_0 : i32, i32, i32
  }
}

</mosaic_0001>

<llo_original>
// kernel: tpu_custom_call.1
$region0: #{tpu_custom_call.1}
  #allocation0 [shape = 'u32[]', space=smem, size = 0x4, offset = 0x4, fixed_abs, tag = 'smem constant byte address 0x4 - core index']
  #allocation1 [shape = 'u32[144,128]{1,0:T(1,128)}', space=vmem, size = 0x12000, scoped, tag = 'internal scratch']
  %s0 = inlined_call_operand.hbm [shape: f32[4,8,256], index: 0, kind: input, shape index: {}]
  %s1 = inlined_call_operand.hbm [shape: f32[4,16,256], index: 1, kind: input, shape index: {}]
  %s2 = inlined_call_operand.hbm [shape: f32[4,8,256], index: 2, kind: input, shape index: {}]
  %s3 = inlined_call_operand.hbm [shape: f32[4,16,256], index: 3, kind: input, shape index: {}]
  %s4 = inlined_call_operand.hbm [shape: bf16[256,256], index: 4, kind: input, shape index: {}]
  %s5 = inlined_call_operand.hbm [shape: bf16[256,256], index: 5, kind: input, shape index: {}]
  %s6 = inlined_call_operand.hbm [shape: bf16[256,256], index: 6, kind: input, shape index: {}]
  %s7 = inlined_call_operand.hbm [shape: bf16[16,32,256], index: 7, kind: input, shape index: {}]
  %s8 = inlined_call_operand.hbm [shape: bf16[256,1024], index: 8, kind: input, shape index: {}]
  %s9 = inlined_call_operand.hbm [shape: bf16[1024,256], index: 9, kind: input, shape index: {}]
  %s10 = inlined_call_operand.vmem [shape: f32[9,256], index: 10, kind: input, shape index: {}]
  %s11 = inlined_call_operand.vmem [shape: f32[1,1024], index: 11, kind: input, shape index: {}]
  %s12 = inlined_call_operand.hbm [shape: f32[4,8,256], index: 12, kind: output, shape index: {}]
  %s13 = sld [smem:[#allocation0]]
  $region121: #{tpu_custom_call.1} parent=0
    _
  %s15 = ssub.s32 1, %s13
  %s16 = scalar_select 0, %s15, %s13
  $region1: #{tpu_custom_call.1} parent=0
    #allocation2 [shape = 'u8[32768]{0}', space=vmem, size = 0x8000, scoped, tag = 'input window, operand 0']
    #allocation3 [shape = 's32[2]{0}', space=sflag, size = 0x8, scoped, tag = 'scoped memory for tpu_custom_call.1']
    #allocation4 [shape = 's32[2]{0}', space=sflag, size = 0x8, scoped, tag = 'scoped memory for tpu_custom_call.1']
    #allocation5 [shape = 'u8[65536]{0}', space=vmem, size = 0x10000, scoped, tag = 'input window, operand 1']
    #allocation6 [shape = 's32[2]{0}', space=sflag, size = 0x8, scoped, tag = 'scoped memory for tpu_custom_call.1']
    #allocation7 [shape = 'u8[32768]{0}', space=vmem, size = 0x8000, scoped, tag = 'input window, operand 2']
    #allocation8 [shape = 'u8[65536]{0}', space=vmem, size = 0x10000, scoped, tag = 'input window, operand 3']
    #allocation9 [shape = 's32[2]{0}', space=sflag, size = 0x8, scoped, tag = 'scoped memory for tpu_custom_call.1']
    #allocation10 [shape = 'u8[131072]{0}', space=vmem, size = 0x20000, scoped, tag = 'input window, operand 4, single buffered']
    #allocation11 [shape = 'u8[131072]{0}', space=vmem, size = 0x20000, scoped, tag = 'input window, operand 5, single buffered']
    #allocation12 [shape = 's32[1]{0}', space=sflag, size = 0x4, scoped, tag = 'scoped memory for tpu_custom_call.1']
    #allocation13 [shape = 'u8[131072]{0}', space=vmem, size = 0x20000, scoped, tag = 'input window, operand 6, single buffered']
    #allocation14 [shape = 'u8[262144]{0}', space=vmem, size = 0x40000, scoped, tag = 'input window, operand 7, single buffered']
    #allocation15 [shape = 's32[1]{0}', space=sflag, size = 0x4, scoped, tag = 'scoped memory for tpu_custom_call.1']
    #allocation16 [shape = 'u8[524288]{0}', space=vmem, size = 0x80000, scoped, tag = 'input window, operand 8, single buffered']
    #allocation17 [shape = 'u8[524288]{0}', space=vmem, size = 0x80000, scoped, tag = 'input window, operand 9, single buffered']
    #allocation18 [shape = 's32[1]{0}', space=sflag, size = 0x4, scoped, tag = 'scoped memory for tpu_custom_call.1']
    #allocation19 [shape = 'u8[32768]{0}', space=vmem, size = 0x8000, scoped, tag = 'output window, operand 0']
    %17 = vsyncpa [#allocation3], 0
    %s18 = scalar_lea.sflag [#allocation3], 1
    %19 = vsyncpa %s18, 0
    %20 = vsyncpa [#allocation6], 0
    %s21 = scalar_lea.sflag [#allocation6], 1
    %22 = vsyncpa %s21, 0
    %23 = vsyncpa [#allocation9], 0
    %s24 = scalar_lea.sflag [#allocation9], 1
    %25 = vsyncpa %s24, 0
    %26 = vsyncpa [#allocation12], 0
    %27 = vsyncpa [#allocation15], 0
    %28 = vsyncpa [#allocation18], 0
    %29 = vsyncpa [#allocation4], 0
    %s30 = scalar_lea.sflag [#allocation4], 1
    %31 = vsyncpa %s30, 0
    loop: start=0, step=1, limit=4
    $region2: #{tpu_custom_call.1} parent=1 // loop_pre_header
      _
    $region3: #{tpu_custom_call.1} parent=1 // loop_header
      %s33 = sphi 0, %s37
      %p34 = scmp.ge.s32.totalorder %s33, 4
      %s43 = sphi 0, %s45
      %s46 = sphi 0, %s43
      %s47 = sphi 0, %s46
      %s63 = sphi 0, %s47
      %s69 = sphi 0, %s71
      %s72 = sphi 0, %s69
      %s73 = sphi 0, %s72
      %s89 = sphi 0, %s73
      %s95 = sphi 0, %s97
      %s98 = sphi 0, %s95
      %s99 = sphi 0, %s98
      %s115 = sphi 0, %s99
      %s121 = sphi 0, %s123
      %s124 = sphi 0, %s121
      %s125 = sphi 0, %s124
      %s141 = sphi 0, %s125
      %s145 = sphi 0, %s145
      %s147 = sphi 0, %s145
      %s148 = sphi 0, %s147
      %s162 = sphi 0, %s148
      %s166 = sphi 0, %s166
      %s168 = sphi 0, %s166
      %s169 = sphi 0, %s168
      %s183 = sphi 0, %s169
      %s187 = sphi 0, %s187
      %s189 = sphi 0, %s187
      %s190 = sphi 0, %s189
      %s204 = sphi 0, %s190
      %s208 = sphi 0, %s208
      %s210 = sphi 0, %s208
      %s211 = sphi 0, %s210
      %s225 = sphi 0, %s211
      %s229 = sphi 0, %s229
      %s231 = sphi 0, %s229
      %s232 = sphi 0, %s231
      %s246 = sphi 0, %s232
      %s250 = sphi 0, %s250
      %s252 = sphi 0, %s250
      %s253 = sphi 0, %s252
      %s267 = sphi 0, %s253
      %s271 = sphi 0, %s271
      %s273 = sphi 0, %s271
      %s274 = sphi 0, %s273
      %s288 = sphi 0, %s274
      %s292 = sphi 0, %s292
      %s294 = sphi 0, %s292
      %s295 = sphi 0, %s294
      %s309 = sphi 0, %s295
      %s315 = sphi 0, %s317
      %s318 = sphi 0, %s315
      %s319 = sphi 0, %s318
      %s335 = sphi 0, %s319
    $region4: #{tpu_custom_call.1} parent=1 // loop_header_branch
      %36 = sbr.rel (%p34) target = $region8
    $region5: #{tpu_custom_call.1} parent=1 // loop_body
      %s38 = ssub.s32 %s33, 1
      %s39 = ssub.s32 %s33, 2
      %s40 = sadd.s32 %s33, 1
      %s41 = ssub.s32 %s33, %s40
      %p42 = scmp.eq.s32.totalorder %s41, 0
      %s44 = sadd.s32 %s43, 1
      %s45 = scalar_select %p42, %s43, %s44
      %p48 = pneg %p42
      %p49 = scmp.eq.s32.totalorder %s33, 1
      %p50 = por %p48, %p49
      %p51 = scmp.ne.s32.totalorder %s43, %s46
      %p52 = scmp.eq.s32.totalorder %s33, 0
      %p53 = por %p51, %p52
      %p54 = scmp.ne.s32.totalorder %s43, %s46
      %p55 = scmp.eq.s32.totalorder %s38, 1
      %p56 = por %p54, %p55
      %p57 = scmp.ne.s32.totalorder %s46, %s47
      %p58 = scmp.eq.s32.totalorder %s38, 0
      %p59 = por %p57, %p58
      %p60 = scmp.ne.s32.totalorder %s46, %s47
      %p61 = scmp.eq.s32.totalorder %s39, 1
      %p62 = por %p60, %p61
      %p64 = scmp.ne.s32.totalorder %s47, %s63
      %p65 = scmp.eq.s32.totalorder %s39, 0
      %p66 = por %p64, %p65
      %s67 = ssub.s32 %s33, %s40
      %p68 = scmp.eq.s32.totalorder %s67, 0
      %s70 = sadd.s32 %s69, 1
      %s71 = scalar_select %p68, %s69, %s70
      %p74 = pneg %p68
      %p75 = scmp.eq.s32.totalorder %s33, 1
      %p76 = por %p74, %p75
      %p77 = scmp.ne.s32.totalorder %s69, %s72
      %p78 = scmp.eq.s32.totalorder %s33, 0
      %p79 = por %p77, %p78
      %p80 = scmp.ne.s32.totalorder %s69, %s72
      %p81 = scmp.eq.s32.totalorder %s38, 1
      %p82 = por %p80, %p81
      %p83 = scmp.ne.s32.totalorder %s72, %s73
      %p84 = scmp.eq.s32.totalorder %s38, 0
      %p85 = por %p83, %p84
      %p86 = scmp.ne.s32.totalorder %s72, %s73
      %p87 = scmp.eq.s32.totalorder %s39, 1
      %p88 = por %p86, %p87
      %p90 = scmp.ne.s32.totalorder %s73, %s89
      %p91 = scmp.eq.s32.totalorder %s39, 0
      %p92 = por %p90, %p91
      %s93 = ssub.s32 %s33, %s40
      %p94 = scmp.eq.s32.totalorder %s93, 0
      %s96 = sadd.s32 %s95, 1
      %s97 = scalar_select %p94, %s95, %s96
      %p100 = pneg %p94
      %p101 = scmp.eq.s32.totalorder %s33, 1
      %p102 = por %p100, %p101
      %p103 = scmp.ne.s32.totalorder %s95, %s98
      %p104 = scmp.eq.s32.totalorder %s33, 0
      %p105 = por %p103, %p104
      %p106 = scmp.ne.s32.totalorder %s95, %s98
      %p107 = scmp.eq.s32.totalorder %s38, 1
      %p108 = por %p106, %p107
      %p109 = scmp.ne.s32.totalorder %s98, %s99
      %p110 = scmp.eq.s32.totalorder %s38, 0
      %p111 = por %p109, %p110
      %p112 = scmp.ne.s32.totalorder %s98, %s99
      %p113 = scmp.eq.s32.totalorder %s39, 1
      %p114 = por %p112, %p113
      %p116 = scmp.ne.s32.totalorder %s99, %s115
      %p117 = scmp.eq.s32.totalorder %s39, 0
      %p118 = por %p116, %p117
      %s119 = ssub.s32 %s33, %s40
      %p120 = scmp.eq.s32.totalorder %s119, 0
      %s122 = sadd.s32 %s121, 1
      %s123 = scalar_select %p120, %s121, %s122
      %p126 = pneg %p120
      %p127 = scmp.eq.s32.totalorder %s33, 1
      %p128 = por %p126, %p127
      %p129 = scmp.ne.s32.totalorder %s121, %s124
      %p130 = scmp.eq.s32.totalorder %s33, 0
      %p131 = por %p129, %p130
      %p132 = scmp.ne.s32.totalorder %s121, %s124
      %p133 = scmp.eq.s32.totalorder %s38, 1
      %p134 = por %p132, %p133
      %p135 = scmp.ne.s32.totalorder %s124, %s125
      %p136 = scmp.eq.s32.totalorder %s38, 0
      %p137 = por %p135, %p136
      %p138 = scmp.ne.s32.totalorder %s124, %s125
      %p139 = scmp.eq.s32.totalorder %s39, 1
      %p140 = por %p138, %p139
      %p142 = scmp.ne.s32.totalorder %s125, %s141
      %p143 = scmp.eq.s32.totalorder %s39, 0
      %p144 = por %p142, %p143
      %s146 = sadd.s32 %s145, 1
      %p149 = scmp.eq.s32.totalorder %s33, 1
      %p150 = scmp.ne.s32.totalorder %s145, %s147
      %p151 = scmp.eq.s32.totalorder %s33, 0
      %p152 = por %p150, %p151
      %p153 = scmp.ne.s32.totalorder %s145, %s147
      %p154 = scmp.eq.s32.totalorder %s38, 1
      %p155 = por %p153, %p154
      %p156 = scmp.ne.s32.totalorder %s147, %s148
      %p157 = scmp.eq.s32.totalorder %s38, 0
      %p158 = por %p156, %p157
      %p159 = scmp.ne.s32.totalorder %s147, %s148
      %p160 = scmp.eq.s32.totalorder %s39, 1
      %p161 = por %p159, %p160
      %p163 = scmp.ne.s32.totalorder %s148, %s162
      %p164 = scmp.eq.s32.totalorder %s39, 0
      %p165 = por %p163, %p164
      %s167 = sadd.s32 %s166, 1
      %p170 = scmp.eq.s32.totalorder %s33, 1
      %p171 = scmp.ne.s32.totalorder %s166, %s168
      %p172 = scmp.eq.s32.totalorder %s33, 0
      %p173 = por %p171, %p172
      %p174 = scmp.ne.s32.totalorder %s166, %s168
      %p175 = scmp.eq.s32.totalorder %s38, 1
      %p176 = por %p174, %p175
      %p177 = scmp.ne.s32.totalorder %s168, %s169
      %p178 = scmp.eq.s32.totalorder %s38, 0
      %p179 = por %p177, %p178
      %p180 = scmp.ne.s32.totalorder %s168, %s169
      %p181 = scmp.eq.s32.totalorder %s39, 1
      %p182 = por %p180, %p181
      %p184 = scmp.ne.s32.totalorder %s169, %s183
      %p185 = scmp.eq.s32.totalorder %s39, 0
      %p186 = por %p184, %p185
      %s188 = sadd.s32 %s187, 1
      %p191 = scmp.eq.s32.totalorder %s33, 1
      %p192 = scmp.ne.s32.totalorder %s187, %s189
      %p193 = scmp.eq.s32.totalorder %s33, 0
      %p194 = por %p192, %p193
      %p195 = scmp.ne.s32.totalorder %s187, %s189
      %p196 = scmp.eq.s32.totalorder %s38, 1
      %p197 = por %p195, %p196
      %p198 = scmp.ne.s32.totalorder %s189, %s190
      %p199 = scmp.eq.s32.totalorder %s38, 0
      %p200 = por %p198, %p199
      %p201 = scmp.ne.s32.totalorder %s189, %s190
      %p202 = scmp.eq.s32.totalorder %s39, 1
      %p203 = por %p201, %p202
      %p205 = scmp.ne.s32.totalorder %s190, %s204
      %p206 = scmp.eq.s32.totalorder %s39, 0
      %p207 = por %p205, %p206
      %s209 = sadd.s32 %s208, 1
      %p212 = scmp.eq.s32.totalorder %s33, 1
      %p213 = scmp.ne.s32.totalorder %s208, %s210
      %p214 = scmp.eq.s32.totalorder %s33, 0
      %p215 = por %p213, %p214
      %p216 = scmp.ne.s32.totalorder %s208, %s210
      %p217 = scmp.eq.s32.totalorder %s38, 1
      %p218 = por %p216, %p217
      %p219 = scmp.ne.s32.totalorder %s210, %s211
      %p220 = scmp.eq.s32.totalorder %s38, 0
      %p221 = por %p219, %p220
      %p222 = scmp.ne.s32.totalorder %s210, %s211
      %p223 = scmp.eq.s32.totalorder %s39, 1
      %p224 = por %p222, %p223
      %p226 = scmp.ne.s32.totalorder %s211, %s225
      %p227 = scmp.eq.s32.totalorder %s39, 0
      %p228 = por %p226, %p227
      %s230 = sadd.s32 %s229, 1
      %p233 = scmp.eq.s32.totalorder %s33, 1
      %p234 = scmp.ne.s32.totalorder %s229, %s231
      %p235 = scmp.eq.s32.totalorder %s33, 0
      %p236 = por %p234, %p235
      %p237 = scmp.ne.s32.totalorder %s229, %s231
      %p238 = scmp.eq.s32.totalorder %s38, 1
      %p239 = por %p237, %p238
      %p240 = scmp.ne.s32.totalorder %s231, %s232
      %p241 = scmp.eq.s32.totalorder %s38, 0
      %p242 = por %p240, %p241
      %p243 = scmp.ne.s32.totalorder %s231, %s232
      %p244 = scmp.eq.s32.totalorder %s39, 1
      %p245 = por %p243, %p244
      %p247 = scmp.ne.s32.totalorder %s232, %s246
      %p248 = scmp.eq.s32.totalorder %s39, 0
      %p249 = por %p247, %p248
      %s251 = sadd.s32 %s250, 1
      %p254 = scmp.eq.s32.totalorder %s33, 1
      %p255 = scmp.ne.s32.totalorder %s250, %s252
      %p256 = scmp.eq.s32.totalorder %s33, 0
      %p257 = por %p255, %p256
      %p258 = scmp.ne.s32.totalorder %s250, %s252
      %p259 = scmp.eq.s32.totalorder %s38, 1
      %p260 = por %p258, %p259
      %p261 = scmp.ne.s32.totalorder %s252, %s253
      %p262 = scmp.eq.s32.totalorder %s38, 0
      %p263 = por %p261, %p262
      %p264 = scmp.ne.s32.totalorder %s252, %s253
      %p265 = scmp.eq.s32.totalorder %s39, 1
      %p266 = por %p264, %p265
      %p268 = scmp.ne.s32.totalorder %s253, %s267
      %p269 = scmp.eq.s32.totalorder %s39, 0
      %p270 = por %p268, %p269
      %s272 = sadd.s32 %s271, 1
      %p275 = scmp.eq.s32.totalorder %s33, 1
      %p276 = scmp.ne.s32.totalorder %s271, %s273
      %p277 = scmp.eq.s32.totalorder %s33, 0
      %p278 = por %p276, %p277
      %p279 = scmp.ne.s32.totalorder %s271, %s273
      %p280 = scmp.eq.s32.totalorder %s38, 1
      %p281 = por %p279, %p280
      %p282 = scmp.ne.s32.totalorder %s273, %s274
      %p283 = scmp.eq.s32.totalorder %s38, 0
      %p284 = por %p282, %p283
      %p285 = scmp.ne.s32.totalorder %s273, %s274
      %p286 = scmp.eq.s32.totalorder %s39, 1
      %p287 = por %p285, %p286
      %p289 = scmp.ne.s32.totalorder %s274, %s288
      %p290 = scmp.eq.s32.totalorder %s39, 0
      %p291 = por %p289, %p290
      %s293 = sadd.s32 %s292, 1
      %p296 = scmp.eq.s32.totalorder %s33, 1
      %p297 = scmp.ne.s32.totalorder %s292, %s294
      %p298 = scmp.eq.s32.totalorder %s33, 0
      %p299 = por %p297, %p298
      %p300 = scmp.ne.s32.totalorder %s292, %s294
      %p301 = scmp.eq.s32.totalorder %s38, 1
      %p302 = por %p300, %p301
      %p303 = scmp.ne.s32.totalorder %s294, %s295
      %p304 = scmp.eq.s32.totalorder %s38, 0
      %p305 = por %p303, %p304
      %p306 = scmp.ne.s32.totalorder %s294, %s295
      %p307 = scmp.eq.s32.totalorder %s39, 1
      %p308 = por %p306, %p307
      %p310 = scmp.ne.s32.totalorder %s295, %s309
      %p311 = scmp.eq.s32.totalorder %s39, 0
      %p312 = por %p310, %p311
      %s313 = ssub.s32 %s33, %s40
      %p314 = scmp.eq.s32.totalorder %s313, 0
      %s316 = sadd.s32 %s315, 1
      %s317 = scalar_select %p314, %s315, %s316
      %p320 = pneg %p314
      %p321 = scmp.eq.s32.totalorder %s33, 1
      %p322 = por %p320, %p321
      %p323 = scmp.ne.s32.totalorder %s315, %s318
      %p324 = scmp.eq.s32.totalorder %s33, 0
      %p325 = por %p323, %p324
      %p326 = scmp.ne.s32.totalorder %s315, %s318
      %p327 = scmp.eq.s32.totalorder %s38, 1
      %p328 = por %p326, %p327
      %p329 = scmp.ne.s32.totalorder %s318, %s319
      %p330 = scmp.eq.s32.totalorder %s38, 0
      %p331 = por %p329, %p330
      %p332 = scmp.ne.s32.totalorder %s318, %s319
      %p333 = scmp.eq.s32.totalorder %s39, 1
      %p334 = por %p332, %p333
      %p336 = scmp.ne.s32.totalorder %s319, %s335
      %p337 = scmp.eq.s32.totalorder %s39, 0
      %p338 = por %p336, %p337
      %p339 = scmp.le.s32.totalorder 1, %s33
      %p340 = scmp.lt.s32.totalorder %s33, 3
      %p341 = pnand %p339, %p340
      %p342 = pneg %p341
      // Predicated region
      $region9: #{tpu_custom_call.1} parent=5 // pred_check
        _
      $region10: #{tpu_custom_call.1} parent=5 // pred_check_branch
        %344 = sbr.rel (%p341) target = $region12
      $region11: #{tpu_custom_call.1} parent=5 // pred_region
        %s345 = ssub.s32 %s33, 1
        // Predicated region
        $region13: #{tpu_custom_call.1} parent=11 // pred_check
          %p346 = pneg %p158
        $region14: #{tpu_custom_call.1} parent=11 // pred_check_branch
          %348 = sbr.rel (%p346) target = $region16
        $region15: #{tpu_custom_call.1} parent=11 // pred_region
          %s350 = ssub.s32 4096, 4096
          %351 = vsyncadd [#allocation9], %s350
          %s352 = sshll.u32 [#allocation10], 4
          %s353 = int_to_ptr.vmem [resolvable:$true] %s352
          %358 = dma.hbm_to_vmem [thread:$0]  %s4, 4096, %s353, [#allocation9], 128, 128, 8
        $region16: #{tpu_custom_call.1} parent=11 // pred_fallthru
          _
        // Predicated region
        $region17: #{tpu_custom_call.1} parent=11 // pred_check
          %p359 = pneg %p179
        $region18: #{tpu_custom_call.1} parent=11 // pred_check_branch
          %361 = sbr.rel (%p359) target = $region20
        $region19: #{tpu_custom_call.1} parent=11 // pred_region
          %s363 = ssub.s32 4096, 4096
          %364 = vsyncadd [#allocation12], %s363
          %s365 = sshll.u32 [#allocation11], 4
          %s366 = int_to_ptr.vmem [resolvable:$true] %s365
          %371 = dma.hbm_to_vmem [thread:$0]  %s5, 4096, %s366, [#allocation12], 128, 128, 8
        $region20: #{tpu_custom_call.1} parent=11 // pred_fallthru
          _
        // Predicated region
        $region21: #{tpu_custom_call.1} parent=11 // pred_check
          %p372 = pneg %p200
        $region22: #{tpu_custom_call.1} parent=11 // pred_check_branch
          %374 = sbr.rel (%p372) target = $region24
        $region23: #{tpu_custom_call.1} parent=11 // pred_region
          %s376 = ssub.s32 4096, 4096
          %377 = vsyncadd [#allocation12], %s376
          %s378 = sshll.u32 [#allocation13], 4
          %s379 = int_to_ptr.vmem [resolvable:$true] %s378
          %384 = dma.hbm_to_vmem [thread:$0]  %s6, 4096, %s379, [#allocation12], 128, 128, 8
        $region24: #{tpu_custom_call.1} parent=11 // pred_fallthru
          _
        // Predicated region
        $region25: #{tpu_custom_call.1} parent=11 // pred_check
          %p385 = pneg %p221
        $region26: #{tpu_custom_call.1} parent=11 // pred_check_branch
          %387 = sbr.rel (%p385) target = $region28
        $region27: #{tpu_custom_call.1} parent=11 // pred_region
          %s389 = ssub.s32 8192, 8192
          %390 = vsyncadd [#allocation15], %s389
          %s391 = sshll.u32 [#allocation14], 4
          %s392 = int_to_ptr.vmem [resolvable:$true] %s391
          %397 = dma.hbm_to_vmem [thread:$0]  %s7, 8192, %s392, [#allocation15], 128, 128, 8
        $region28: #{tpu_custom_call.1} parent=11 // pred_fallthru
          _
        // Predicated region
        $region29: #{tpu_custom_call.1} parent=11 // pred_check
          %p398 = pneg %p242
        $region30: #{tpu_custom_call.1} parent=11 // pred_check_branch
          %400 = sbr.rel (%p398) target = $region32
        $region31: #{tpu_custom_call.1} parent=11 // pred_region
          %s402 = ssub.s32 16384, 16384
          %403 = vsyncadd [#allocation15], %s402
          %s404 = sshll.u32 [#allocation16], 4
          %s405 = int_to_ptr.vmem [resolvable:$true] %s404
          %410 = dma.hbm_to_vmem [thread:$0]  %s8, 16384, %s405, [#allocation15], 512, 512, 32
        $region32: #{tpu_custom_call.1} parent=11 // pred_fallthru
          _
        // Predicated region
        $region33: #{tpu_custom_call.1} parent=11 // pred_check
          %p411 = pneg %p263
        $region34: #{tpu_custom_call.1} parent=11 // pred_check_branch
          %413 = sbr.rel (%p411) target = $region36
        $region35: #{tpu_custom_call.1} parent=11 // pred_region
          %s415 = ssub.s32 16384, 16384
          %416 = vsyncadd [#allocation18], %s415
          %s417 = sshll.u32 [#allocation17], 4
          %s418 = int_to_ptr.vmem [resolvable:$true] %s417
          %423 = dma.hbm_to_vmem [thread:$0]  %s9, 16384, %s418, [#allocation18], 128, 128, 8
        $region36: #{tpu_custom_call.1} parent=11 // pred_fallthru
          _
        // Predicated region
        $region37: #{tpu_custom_call.1} parent=11 // pred_check
          %p424 = pneg %p284
        $region38: #{tpu_custom_call.1} parent=11 // pred_check_branch
          %426 = sbr.rel (%p424) target = $region40
        $region39: #{tpu_custom_call.1} parent=11 // pred_region
          _
        $region40: #{tpu_custom_call.1} parent=11 // pred_fallthru
          _
        // Predicated region
        $region41: #{tpu_custom_call.1} parent=11 // pred_check
          %p427 = pneg %p305
        $region42: #{tpu_custom_call.1} parent=11 // pred_check_branch
          %429 = sbr.rel (%p427) target = $region44
        $region43: #{tpu_custom_call.1} parent=11 // pred_region
          _
        $region44: #{tpu_custom_call.1} parent=11 // pred_fallthru
          _
      $region12: #{tpu_custom_call.1} parent=5 // pred_fallthru
        _
      %p430 = scmp.lt.s32.totalorder %s33, 2
      // Predicated region
      $region45: #{tpu_custom_call.1} parent=5 // pred_check
        %p431 = pneg %p430
      $region46: #{tpu_custom_call.1} parent=5 // pred_check_branch
        %433 = sbr.rel (%p431) target = $region48
      $region47: #{tpu_custom_call.1} parent=5 // pred_region
        // Predicated region
        $region49: #{tpu_custom_call.1} parent=47 // pred_check
          %p434 = pneg %p53
        $region50: #{tpu_custom_call.1} parent=47 // pred_check_branch
          %436 = sbr.rel (%p434) target = $region52
        $region51: #{tpu_custom_call.1} parent=47 // pred_region
          %s437 = sand.u32 %s43, 1
          %s438 = scalar_lea.sflag [#allocation3], %s437
          %s439 = sand.u32 %s43, 1
          %s440 = smul.addr %s439, 32
          %s441 = scalar_lea.vmem [#allocation2], %s440
          %s442 = smul.u32 2, %s33
          %s444 = ssub.s32 512, 512
          %445 = vsyncadd %s438, %s444
          %s446 = smul.addr %s442, 2
          %s447 = smul.addr %s446, 128
          %s448 = scalar_lea.hbm %s0, %s447
          %s449 = sshll.u32 %s441, 4
          %s450 = int_to_ptr.vmem [resolvable:$true] %s449
          %455 = dma.hbm_to_vmem [thread:$0]  %s448, 512, %s450, %s438, 256, 256, 16
        $region52: #{tpu_custom_call.1} parent=47 // pred_fallthru
          _
        // Predicated region
        $region53: #{tpu_custom_call.1} parent=47 // pred_check
          %p456 = pneg %p79
        $region54: #{tpu_custom_call.1} parent=47 // pred_check_branch
          %458 = sbr.rel (%p456) target = $region56
        $region55: #{tpu_custom_call.1} parent=47 // pred_region
          %s459 = sand.u32 %s33, 1
          %s460 = scalar_lea.sflag [#allocation6], %s459
          %s461 = sand.u32 %s69, 1
          %s462 = smul.addr %s461, 64
          %s463 = scalar_lea.vmem [#allocation5], %s462
          %s464 = smul.u32 2, %s33
          %s466 = ssub.s32 1024, 1024
          %467 = vsyncadd %s460, %s466
          %s468 = smul.addr %s464, 4
          %s469 = smul.addr %s468, 128
          %s470 = scalar_lea.hbm %s1, %s469
          %s471 = sshll.u32 %s463, 4
          %s472 = int_to_ptr.vmem [resolvable:$true] %s471
          %477 = dma.hbm_to_vmem [thread:$0]  %s470, 1024, %s472, %s460, 256, 256, 16
        $region56: #{tpu_custom_call.1} parent=47 // pred_fallthru
          _
        // Predicated region
        $region57: #{tpu_custom_call.1} parent=47 // pred_check
          %p478 = pneg %p105
        $region58: #{tpu_custom_call.1} parent=47 // pred_check_branch
          %480 = sbr.rel (%p478) target = $region60
        $region59: #{tpu_custom_call.1} parent=47 // pred_region
          %s481 = sand.u32 %s33, 1
          %s482 = scalar_lea.sflag [#allocation6], %s481
          %s483 = sand.u32 %s95, 1
          %s484 = smul.addr %s483, 32
          %s485 = scalar_lea.vmem [#allocation7], %s484
          %s486 = smul.u32 2, %s33
          %s488 = ssub.s32 512, 512
          %489 = vsyncadd %s482, %s488
          %s490 = smul.addr %s486, 2
          %s491 = smul.addr %s490, 128
          %s492 = scalar_lea.hbm %s2, %s491
          %s493 = sshll.u32 %s485, 4
          %s494 = int_to_ptr.vmem [resolvable:$true] %s493
          %499 = dma.hbm_to_vmem [thread:$0]  %s492, 512, %s494, %s482, 256, 256, 16
        $region60: #{tpu_custom_call.1} parent=47 // pred_fallthru
          _
        // Predicated region
        $region61: #{tpu_custom_call.1} parent=47 // pred_check
          %p500 = pneg %p131
        $region62: #{tpu_custom_call.1} parent=47 // pred_check_branch
          %502 = sbr.rel (%p500) target = $region64
        $region63: #{tpu_custom_call.1} parent=47 // pred_region
          %s503 = sand.u32 %s33, 1
          %s504 = scalar_lea.sflag [#allocation9], %s503
          %s505 = sand.u32 %s121, 1
          %s506 = smul.addr %s505, 64
          %s507 = scalar_lea.vmem [#allocation8], %s506
          %s508 = smul.u32 2, %s33
          %s510 = ssub.s32 1024, 1024
          %511 = vsyncadd %s504, %s510
          %s512 = smul.addr %s508, 4
          %s513 = smul.addr %s512, 128
          %s514 = scalar_lea.hbm %s3, %s513
          %s515 = sshll.u32 %s507, 4
          %s516 = int_to_ptr.vmem [resolvable:$true] %s515
          %521 = dma.hbm_to_vmem [thread:$0]  %s514, 1024, %s516, %s504, 256, 256, 16
        $region64: #{tpu_custom_call.1} parent=47 // pred_fallthru
          _
      $region48: #{tpu_custom_call.1} parent=5 // pred_fallthru
        _
      %p522 = scmp.le.s32.totalorder 1, %s33
      %p523 = scmp.lt.s32.totalorder %s33, 3
      %p524 = pnand %p522, %p523
      %p525 = pneg %p524
      // Predicated region
      $region65: #{tpu_custom_call.1} parent=5 // pred_check
        _
      $region66: #{tpu_custom_call.1} parent=5 // pred_check_branch
        %527 = sbr.rel (%p524) target = $region68
      $region67: #{tpu_custom_call.1} parent=5 // pred_region
        %s528 = ssub.s32 %s33, 1
        %s529 = sand.u32 %s46, 1
        %s530 = scalar_lea.sflag [#allocation3], %s529
        %s531 = sand.u32 %s46, 1
        %s532 = smul.addr %s531, 32
        %s533 = scalar_lea.vmem [#allocation2], %s532
        // Predicated region
        $region69: #{tpu_custom_call.1} parent=67 // pred_check
          %p534 = pneg %p59
        $region70: #{tpu_custom_call.1} parent=67 // pred_check_branch
          %536 = sbr.rel (%p534) target = $region72
        $region71: #{tpu_custom_call.1} parent=67 // pred_region
          %537 = dma.done %s530, 512
        $region72: #{tpu_custom_call.1} parent=67 // pred_fallthru
          _
        %s538 = sand.u32 %s38, 1
        %s539 = scalar_lea.sflag [#allocation6], %s538
        %s540 = sand.u32 %s72, 1
        %s541 = smul.addr %s540, 64
        %s542 = scalar_lea.vmem [#allocation5], %s541
        // Predicated region
        $region73: #{tpu_custom_call.1} parent=67 // pred_check
          %p543 = pneg %p85
        $region74: #{tpu_custom_call.1} parent=67 // pred_check_branch
          %545 = sbr.rel (%p543) target = $region76
        $region75: #{tpu_custom_call.1} parent=67 // pred_region
          %546 = dma.done %s539, 1024
        $region76: #{tpu_custom_call.1} parent=67 // pred_fallthru
          _
        %s547 = sand.u32 %s38, 1
        %s548 = scalar_lea.sflag [#allocation6], %s547
        %s549 = sand.u32 %s98, 1
        %s550 = smul.addr %s549, 32
        %s551 = scalar_lea.vmem [#allocation7], %s550
        // Predicated region
        $region77: #{tpu_custom_call.1} parent=67 // pred_check
          %p552 = pneg %p111
        $region78: #{tpu_custom_call.1} parent=67 // pred_check_branch
          %554 = sbr.rel (%p552) target = $region80
        $region79: #{tpu_custom_call.1} parent=67 // pred_region
          %555 = dma.done %s548, 512
        $region80: #{tpu_custom_call.1} parent=67 // pred_fallthru
          _
        %s556 = sand.u32 %s38, 1
        %s557 = scalar_lea.sflag [#allocation9], %s556
        %s558 = sand.u32 %s124, 1
        %s559 = smul.addr %s558, 64
        %s560 = scalar_lea.vmem [#allocation8], %s559
        // Predicated region
        $region81: #{tpu_custom_call.1} parent=67 // pred_check
          %p561 = pneg %p137
        $region82: #{tpu_custom_call.1} parent=67 // pred_check_branch
          %563 = sbr.rel (%p561) target = $region84
        $region83: #{tpu_custom_call.1} parent=67 // pred_region
          %564 = dma.done %s557, 1024
        $region84: #{tpu_custom_call.1} parent=67 // pred_fallthru
          _
        // Predicated region
        $region85: #{tpu_custom_call.1} parent=67 // pred_check
          %p565 = pneg %p158
        $region86: #{tpu_custom_call.1} parent=67 // pred_check_branch
          %567 = sbr.rel (%p565) target = $region88
        $region87: #{tpu_custom_call.1} parent=67 // pred_region
          %568 = dma.done [#allocation9], 4096
        $region88: #{tpu_custom_call.1} parent=67 // pred_fallthru
          _
        // Predicated region
        $region89: #{tpu_custom_call.1} parent=67 // pred_check
          %p569 = pneg %p179
        $region90: #{tpu_custom_call.1} parent=67 // pred_check_branch
          %571 = sbr.rel (%p569) target = $region92
        $region91: #{tpu_custom_call.1} parent=67 // pred_region
          %572 = dma.done [#allocation12], 4096
        $region92: #{tpu_custom_call.1} parent=67 // pred_fallthru
          _
        // Predicated region
        $region93: #{tpu_custom_call.1} parent=67 // pred_check
          %p573 = pneg %p200
        $region94: #{tpu_custom_call.1} parent=67 // pred_check_branch
          %575 = sbr.rel (%p573) target = $region96
        $region95: #{tpu_custom_call.1} parent=67 // pred_region
          %576 = dma.done [#allocation12], 4096
        $region96: #{tpu_custom_call.1} parent=67 // pred_fallthru
          _
        // Predicated region
        $region97: #{tpu_custom_call.1} parent=67 // pred_check
          %p577 = pneg %p221
        $region98: #{tpu_custom_call.1} parent=67 // pred_check_branch
          %579 = sbr.rel (%p577) target = $region100
        $region99: #{tpu_custom_call.1} parent=67 // pred_region
          %580 = dma.done [#allocation15], 8192
        $region100: #{tpu_custom_call.1} parent=67 // pred_fallthru
          _
        // Predicated region
        $region101: #{tpu_custom_call.1} parent=67 // pred_check
          %p581 = pneg %p242
        $region102: #{tpu_custom_call.1} parent=67 // pred_check_branch
          %583 = sbr.rel (%p581) target = $region104
        $region103: #{tpu_custom_call.1} parent=67 // pred_region
          %584 = dma.done [#allocation15], 16384
        $region104: #{tpu_custom_call.1} parent=67 // pred_fallthru
          _
        // Predicated region
        $region105: #{tpu_custom_call.1} parent=67 // pred_check
          %p585 = pneg %p263
        $region106: #{tpu_custom_call.1} parent=67 // pred_check_branch
          %587 = sbr.rel (%p585) target = $region108
        $region107: #{tpu_custom_call.1} parent=67 // pred_region
          %588 = dma.done [#allocation18], 16384
        $region108: #{tpu_custom_call.1} parent=67 // pred_fallthru
          _
        %s589 = sand.u32 %s46, 1
        %s590 = scalar_lea.sflag [#allocation3], %s589
        %s591 = sand.u32 %s46, 1
        %s592 = smul.addr %s591, 32
        %s593 = scalar_lea.vmem [#allocation2], %s592
        %p594 = pneg %p59
        %p595 = pneg %p56
        %s596 = sand.u32 %s38, 1
        %s597 = scalar_lea.sflag [#allocation6], %s596
        %s598 = sand.u32 %s72, 1
        %s599 = smul.addr %s598, 64
        %s600 = scalar_lea.vmem [#allocation5], %s599
        %p601 = pneg %p85
        %p602 = pneg %p82
        %s603 = sand.u32 %s38, 1
        %s604 = scalar_lea.sflag [#allocation6], %s603
        %s605 = sand.u32 %s98, 1
        %s606 = smul.addr %s605, 32
        %s607 = scalar_lea.vmem [#allocation7], %s606
        %p608 = pneg %p111
        %p609 = pneg %p108
        %s610 = sand.u32 %s38, 1
        %s611 = scalar_lea.sflag [#allocation9], %s610
        %s612 = sand.u32 %s124, 1
        %s613 = smul.addr %s612, 64
        %s614 = scalar_lea.vmem [#allocation8], %s613
        %p615 = pneg %p137
        %p616 = pneg %p134
        %p617 = pneg %p158
        %p618 = pneg %p155
        %p619 = pneg %p179
        %p620 = pneg %p176
        %p621 = pneg %p200
        %p622 = pneg %p197
        %p623 = pneg %p221
        %p624 = pneg %p218
        %p625 = pneg %p242
        %p626 = pneg %p239
        %p627 = pneg %p263
        %p628 = pneg %p260
        %p629 = pneg %p284
        %p630 = pneg %p281
        %p631 = pneg %p305
        %p632 = pneg %p302
        %p633 = pneg %p331
        %p634 = pneg %p328
        %s635 = sand.u32 %s318, 1
        %s636 = scalar_lea.sflag [#allocation4], %s635
        %s637 = sand.u32 %s318, 1
        %s638 = smul.addr %s637, 32
        %s639 = scalar_lea.vmem [#allocation19], %s638
        %s640 = smul.u32 2, %s38
        %s641 = smul.u32 2, %s38
        %s642 = smul.u32 2, %s38
        %s643 = smul.u32 2, %s38
        %s644 = smul.u32 2, %s38
        %v646 = vld [vmem:[%s10] sm:$0xff]
        %v647 = vld [vmem:[%s10 + $0x8] sm:$0xff]
        %v648 = vld [vmem:[%s10 + $0x10] sm:$0x1]
        %v649 = vld [vmem:[%s10 + $0x18] sm:$0x1]
        %v650 = vld [vmem:[%s533] sm:$0xff]
        %v651 = vld [vmem:[%s533 + $0x8] sm:$0xff]
        %v652 = vld [vmem:[%s533 + $0x10] sm:$0xff]
        %v653 = vld [vmem:[%s533 + $0x18] sm:$0xff]
        %v654 = vld [vmem:[%s551] sm:$0xff]
        %v655 = vld [vmem:[%s551 + $0x8] sm:$0xff]
        %v656 = vld [vmem:[%s551 + $0x10] sm:$0xff]
        %v657 = vld [vmem:[%s551 + $0x18] sm:$0xff]
        %v658 = vld [vmem:[%s542] sm:$0xff]
        %v659 = vld [vmem:[%s542 + $0x8] sm:$0xff]
        %v660 = vld [vmem:[%s542 + $0x10] sm:$0xff]
        %v661 = vld [vmem:[%s542 + $0x18] sm:$0xff]
        %v662 = vld [vmem:[%s542 + $0x20] sm:$0xff]
        %v663 = vld [vmem:[%s542 + $0x28] sm:$0xff]
        %v664 = vld [vmem:[%s542 + $0x30] sm:$0xff]
        %v665 = vld [vmem:[%s542 + $0x38] sm:$0xff]
        %v666 = vld [vmem:[%s560] sm:$0xff]
        %v667 = vld [vmem:[%s560 + $0x8] sm:$0xff]
        %v668 = vld [vmem:[%s560 + $0x10] sm:$0xff]
        %v669 = vld [vmem:[%s560 + $0x18] sm:$0xff]
        %v670 = vld [vmem:[%s560 + $0x20] sm:$0xff]
        %v671 = vld [vmem:[%s560 + $0x28] sm:$0xff]
        %v672 = vld [vmem:[%s560 + $0x30] sm:$0xff]
        %v673 = vld [vmem:[%s560 + $0x38] sm:$0xff]
        %v674 = vadd.f32 %v650, %v654
        %v675 = vadd.f32 %v651, %v655
        %v676 = vadd.f32 %v652, %v656
        %v677 = vadd.f32 %v653, %v657
        %v678 = vpack.c.bf16 %v676, %v674
        %v679 = vpack.c.bf16 %v677, %v675
        %v680 = vadd.f32 %v658, %v666
        %v681 = vadd.f32 %v659, %v667
        %v682 = vadd.f32 %v660, %v668
        %v683 = vadd.f32 %v661, %v669
        %v684 = vadd.f32 %v662, %v670
        %v685 = vadd.f32 %v663, %v671
        %v686 = vadd.f32 %v664, %v672
        %v687 = vadd.f32 %v665, %v673
        %v688 = vpack.c.bf16 %v682, %v680
        %v689 = vpack.c.bf16 %v683, %v681
        %v690 = vpack.c.bf16 %v686, %v684
        %v691 = vpack.c.bf16 %v687, %v685
        %v692 = vpack.c.bf16 %v660, %v658
        %v693 = vpack.c.bf16 %v661, %v659
        %v694 = vpack.c.bf16 %v664, %v662
        %v695 = vpack.c.bf16 %v665, %v663
        %v696 = vld [vmem:[#allocation10] sm:$0xff]
        %v697 = vld [vmem:[#allocation10 + $0x8] sm:$0xff]
        %v698 = vld [vmem:[#allocation10 + $0x10] sm:$0xff]
        %v699 = vld [vmem:[#allocation10 + $0x18] sm:$0xff]
        %v700 = vld [vmem:[#allocation10 + $0x20] sm:$0xff]
        %v701 = vld [vmem:[#allocation10 + $0x28] sm:$0xff]
        %v702 = vld [vmem:[#allocation10 + $0x30] sm:$0xff]
        %v703 = vld [vmem:[#allocation10 + $0x38] sm:$0xff]
        %v704 = vld [vmem:[#allocation10 + $0x40] sm:$0xff]
        %v705 = vld [vmem:[#allocation10 + $0x48] sm:$0xff]
        %v706 = vld [vmem:[#allocation10 + $0x50] sm:$0xff]
        %v707 = vld [vmem:[#allocation10 + $0x58] sm:$0xff]
        %v708 = vld [vmem:[#allocation10 + $0x60] sm:$0xff]
        %v709 = vld [vmem:[#allocation10 + $0x68] sm:$0xff]
        %v710 = vld [vmem:[#allocation10 + $0x70] sm:$0xff]
        %v711 = vld [vmem:[#allocation10 + $0x78] sm:$0xff]
        %v712 = vld [vmem:[#allocation10 + $0x80] sm:$0xff]
        %v713 = vld [vmem:[#allocation10 + $0x88] sm:$0xff]
        %v714 = vld [vmem:[#allocation10 + $0x90] sm:$0xff]
        %v715 = vld [vmem:[#allocation10 + $0x98] sm:$0xff]
        %v716 = vld [vmem:[#allocation10 + $0xa0] sm:$0xff]
        %v717 = vld [vmem:[#allocation10 + $0xa8] sm:$0xff]
        %v718 = vld [vmem:[#allocation10 + $0xb0] sm:$0xff]
        %v719 = vld [vmem:[#allocation10 + $0xb8] sm:$0xff]
        %v720 = vld [vmem:[#allocation10 + $0xc0] sm:$0xff]
        %v721 = vld [vmem:[#allocation10 + $0xc8] sm:$0xff]
        %v722 = vld [vmem:[#allocation10 + $0xd0] sm:$0xff]
        %v723 = vld [vmem:[#allocation10 + $0xd8] sm:$0xff]
        %v724 = vld [vmem:[#allocation10 + $0xe0] sm:$0xff]
        %v725 = vld [vmem:[#allocation10 + $0xe8] sm:$0xff]
        %v726 = vld [vmem:[#allocation10 + $0xf0] sm:$0xff]
        %v727 = vld [vmem:[#allocation10 + $0xf8] sm:$0xff]
        %v728 = vlaneseq
        %v729 = vshrl.u32 %v728, 7
        %v730 = vsub.s32 0, %v729
        %v731 = vrot.slane %v646, %v730
        %v732 = vlaneseq
        %v733 = vshrl.u32 %v732, 7
        %v734 = vsub.s32 0, %v733
        %v735 = vrot.slane %v647, %v734
        %v768 = vunpack.c.l.b16 %v696
        %v769 = vunpack.c.h.b16 %v696
        %v770 = vunpack.c.l.b16 %v697
        %v771 = vunpack.c.h.b16 %v697
        %v772 = vunpack.c.l.b16 %v698
        %v773 = vunpack.c.h.b16 %v698
        %v774 = vunpack.c.l.b16 %v699
        %v775 = vunpack.c.h.b16 %v699
        %v776 = vunpack.c.l.b16 %v700
        %v777 = vunpack.c.h.b16 %v700
        %v778 = vunpack.c.l.b16 %v701
        %v779 = vunpack.c.h.b16 %v701
        %v780 = vunpack.c.l.b16 %v702
        %v781 = vunpack.c.h.b16 %v702
        %v782 = vunpack.c.l.b16 %v703
        %v783 = vunpack.c.h.b16 %v703
        %v784 = vunpack.c.l.b16 %v704
        %v785 = vunpack.c.h.b16 %v704
        %v786 = vunpack.c.l.b16 %v705
        %v787 = vunpack.c.h.b16 %v705
        %v788 = vunpack.c.l.b16 %v706
        %v789 = vunpack.c.h.b16 %v706
        %v790 = vunpack.c.l.b16 %v707
        %v791 = vunpack.c.h.b16 %v707
        %v792 = vunpack.c.l.b16 %v708
        %v793 = vunpack.c.h.b16 %v708
        %v794 = vunpack.c.l.b16 %v709
        %v795 = vunpack.c.h.b16 %v709
        %v796 = vunpack.c.l.b16 %v710
        %v797 = vunpack.c.h.b16 %v710
        %v798 = vunpack.c.l.b16 %v711
        %v799 = vunpack.c.h.b16 %v711
        %v800 = vunpack.c.l.b16 %v712
        %v801 = vunpack.c.h.b16 %v712
        %v802 = vunpack.c.l.b16 %v713
        %v803 = vunpack.c.h.b16 %v713
        %v804 = vunpack.c.l.b16 %v714
        %v805 = vunpack.c.h.b16 %v714
        %v806 = vunpack.c.l.b16 %v715
        %v807 = vunpack.c.h.b16 %v715
        %v808 = vunpack.c.l.b16 %v716
        %v809 = vunpack.c.h.b16 %v716
        %v810 = vunpack.c.l.b16 %v717
        %v811 = vunpack.c.h.b16 %v717
        %v812 = vunpack.c.l.b16 %v718
        %v813 = vunpack.c.h.b16 %v718
        %v814 = vunpack.c.l.b16 %v719
        %v815 = vunpack.c.h.b16 %v719
        %v816 = vunpack.c.l.b16 %v720
        %v817 = vunpack.c.h.b16 %v720
        %v818 = vunpack.c.l.b16 %v721
        %v819 = vunpack.c.h.b16 %v721
        %v820 = vunpack.c.l.b16 %v722
        %v821 = vunpack.c.h.b16 %v722
        %v822 = vunpack.c.l.b16 %v723
        %v823 = vunpack.c.h.b16 %v723
        %v824 = vunpack.c.l.b16 %v724
        %v825 = vunpack.c.h.b16 %v724
        %v826 = vunpack.c.l.b16 %v725
        %v827 = vunpack.c.h.b16 %v725
        %v828 = vunpack.c.l.b16 %v726
        %v829 = vunpack.c.h.b16 %v726
        %v830 = vunpack.c.l.b16 %v727
        %v831 = vunpack.c.h.b16 %v727
        %v832 = vpack.c.b16 %v770, %v768
        %v833 = vpack.c.b16 %v771, %v769
        %v834 = vpack.c.b16 %v774, %v772
        %v835 = vpack.c.b16 %v775, %v773
        %v836 = vpack.c.b16 %v778, %v776
        %v837 = vpack.c.b16 %v779, %v777
        %v838 = vpack.c.b16 %v782, %v780
        %v839 = vpack.c.b16 %v783, %v781
        %v840 = vpack.c.b16 %v786, %v784
        %v841 = vpack.c.b16 %v787, %v785
        %v842 = vpack.c.b16 %v790, %v788
        %v843 = vpack.c.b16 %v791, %v789
        %v844 = vpack.c.b16 %v794, %v792
        %v845 = vpack.c.b16 %v795, %v793
        %v846 = vpack.c.b16 %v798, %v796
        %v847 = vpack.c.b16 %v799, %v797
        %v848 = vpack.c.b16 %v802, %v800
        %v849 = vpack.c.b16 %v803, %v801
        %v850 = vpack.c.b16 %v806, %v804
        %v851 = vpack.c.b16 %v807, %v805
        %v852 = vpack.c.b16 %v810, %v808
        %v853 = vpack.c.b16 %v811, %v809
        %v854 = vpack.c.b16 %v814, %v812
        %v855 = vpack.c.b16 %v815, %v813
        %v856 = vpack.c.b16 %v818, %v816
        %v857 = vpack.c.b16 %v819, %v817
        %v858 = vpack.c.b16 %v822, %v820
        %v859 = vpack.c.b16 %v823, %v821
        %v860 = vpack.c.b16 %v826, %v824
        %v861 = vpack.c.b16 %v827, %v825
        %v862 = vpack.c.b16 %v830, %v828
        %v863 = vpack.c.b16 %v831, %v829
        %896 = vmatprep.subr.bf16.mxu0 %v833
        %897 = vmatpush1.bf16.msra.mxu0 %v832
        %898 = vmatprep.subr.bf16.mxu0 %v835
        %899 = vmatpush1.bf16.msra.mxu0 %v834
        %900 = vmatprep.subr.bf16.mxu0 %v837
        %901 = vmatpush1.bf16.msra.mxu0 %v836
        %902 = vmatprep.subr.bf16.mxu0 %v839
        %903 = vmatpush1.bf16.msra.mxu0 %v838
        %904 = vmatprep.subr.bf16.mxu0 %v841
        %905 = vmatpush1.bf16.msra.mxu0 %v840
        %906 = vmatprep.subr.bf16.mxu0 %v843
        %907 = vmatpush1.bf16.msra.mxu0 %v842
        %908 = vmatprep.subr.bf16.mxu0 %v845
        %909 = vmatpush1.bf16.msra.mxu0 %v844
        %910 = vmatprep.subr.bf16.mxu0 %v847
        %911 = vmatpush1.bf16.msra.mxu0 %v846
        %912 = vmatprep.subr.bf16.mxu0 %v849
        %913 = vmatpush1.bf16.msra.mxu0 %v848
        %914 = vmatprep.subr.bf16.mxu0 %v851
        %915 = vmatpush1.bf16.msra.mxu0 %v850
        %916 = vmatprep.subr.bf16.mxu0 %v853
        %917 = vmatpush1.bf16.msra.mxu0 %v852
        %918 = vmatprep.subr.bf16.mxu0 %v855
        %919 = vmatpush1.bf16.msra.mxu0 %v854
        %920 = vmatprep.subr.bf16.mxu0 %v857
        %921 = vmatpush1.bf16.msra.mxu0 %v856
        %922 = vmatprep.subr.bf16.mxu0 %v859
        %923 = vmatpush1.bf16.msra.mxu0 %v858
        %924 = vmatprep.subr.bf16.mxu0 %v861
        %925 = vmatpush1.bf16.msra.mxu0 %v860
        %926 = vmatprep.subr.bf16.mxu0 %v863
        %927 = vmatpush1.bf16.msra.mxu0 %v862
        %928 = vmatprep.mubr.bf16.mxu0 %v679
        %929 = vmatmul.mubr.bf16.gmra.mrb[0].mxu0 %v678
        %v930 = vpop.f32.mrb[0].mxu0
        %v931 = vadd.f32 %v731, %v930
        %v932 = vpop.f32.mrb[0].mxu0
        %v933 = vadd.f32 %v735, %v932
        %v934 = vpop.f32.mrb[0].mxu0
        %v935 = vadd.f32 %v731, %v934
        %v936 = vpop.f32.mrb[0].mxu0
        %v937 = vadd.f32 %v735, %v936
        %938 = vdwg.mxu0
        %v939 = vld [vmem:[#allocation11] sm:$0xff]
        %v940 = vld [vmem:[#allocation11 + $0x8] sm:$0xff]
        %v941 = vld [vmem:[#allocation11 + $0x10] sm:$0xff]
        %v942 = vld [vmem:[#allocation11 + $0x18] sm:$0xff]
        %v943 = vld [vmem:[#allocation11 + $0x20] sm:$0xff]
        %v944 = vld [vmem:[#allocation11 + $0x28] sm:$0xff]
        %v945 = vld [vmem:[#allocation11 + $0x30] sm:$0xff]
        %v946 = vld [vmem:[#allocation11 + $0x38] sm:$0xff]
        %v947 = vld [vmem:[#allocation11 + $0x40] sm:$0xff]
        %v948 = vld [vmem:[#allocation11 + $0x48] sm:$0xff]
        %v949 = vld [vmem:[#allocation11 + $0x50] sm:$0xff]
        %v950 = vld [vmem:[#allocation11 + $0x58] sm:$0xff]
        %v951 = vld [vmem:[#allocation11 + $0x60] sm:$0xff]
        %v952 = vld [vmem:[#allocation11 + $0x68] sm:$0xff]
        %v953 = vld [vmem:[#allocation11 + $0x70] sm:$0xff]
        %v954 = vld [vmem:[#allocation11 + $0x78] sm:$0xff]
        %v955 = vld [vmem:[#allocation11 + $0x80] sm:$0xff]
        %v956 = vld [vmem:[#allocation11 + $0x88] sm:$0xff]
        %v957 = vld [vmem:[#allocation11 + $0x90] sm:$0xff]
        %v958 = vld [vmem:[#allocation11 + $0x98] sm:$0xff]
        %v959 = vld [vmem:[#allocation11 + $0xa0] sm:$0xff]
        %v960 = vld [vmem:[#allocation11 + $0xa8] sm:$0xff]
        %v961 = vld [vmem:[#allocation11 + $0xb0] sm:$0xff]
        %v962 = vld [vmem:[#allocation11 + $0xb8] sm:$0xff]
        %v963 = vld [vmem:[#allocation11 + $0xc0] sm:$0xff]
        %v964 = vld [vmem:[#allocation11 + $0xc8] sm:$0xff]
        %v965 = vld [vmem:[#allocation11 + $0xd0] sm:$0xff]
        %v966 = vld [vmem:[#allocation11 + $0xd8] sm:$0xff]
        %v967 = vld [vmem:[#allocation11 + $0xe0] sm:$0xff]
        %v968 = vld [vmem:[#allocation11 + $0xe8] sm:$0xff]
        %v969 = vld [vmem:[#allocation11 + $0xf0] sm:$0xff]
        %v970 = vld [vmem:[#allocation11 + $0xf8] sm:$0xff]
        %v971 = vlaneseq
        %v972 = vshrl.u32 %v971, 7
        %v973 = vsub.s32 1, %v972
        %v974 = vrot.slane %v646, %v973
        %v975 = vlaneseq
        %v976 = vshrl.u32 %v975, 7
        %v977 = vsub.s32 1, %v976
        %v978 = vrot.slane %v647, %v977
        %v1011 = vunpack.c.l.b16 %v939
        %v1012 = vunpack.c.h.b16 %v939
        %v1013 = vunpack.c.l.b16 %v940
        %v1014 = vunpack.c.h.b16 %v940
        %v1015 = vunpack.c.l.b16 %v941
        %v1016 = vunpack.c.h.b16 %v941
        %v1017 = vunpack.c.l.b16 %v942
        %v1018 = vunpack.c.h.b16 %v942
        %v1019 = vunpack.c.l.b16 %v943
        %v1020 = vunpack.c.h.b16 %v943
        %v1021 = vunpack.c.l.b16 %v944
        %v1022 = vunpack.c.h.b16 %v944
        %v1023 = vunpack.c.l.b16 %v945
        %v1024 = vunpack.c.h.b16 %v945
        %v1025 = vunpack.c.l.b16 %v946
        %v1026 = vunpack.c.h.b16 %v946
        %v1027 = vunpack.c.l.b16 %v947
        %v1028 = vunpack.c.h.b16 %v947
        %v1029 = vunpack.c.l.b16 %v948
        %v1030 = vunpack.c.h.b16 %v948
        %v1031 = vunpack.c.l.b16 %v949
        %v1032 = vunpack.c.h.b16 %v949
        %v1033 = vunpack.c.l.b16 %v950
        %v1034 = vunpack.c.h.b16 %v950
        %v1035 = vunpack.c.l.b16 %v951
        %v1036 = vunpack.c.h.b16 %v951
        %v1037 = vunpack.c.l.b16 %v952
        %v1038 = vunpack.c.h.b16 %v952
        %v1039 = vunpack.c.l.b16 %v953
        %v1040 = vunpack.c.h.b16 %v953
        %v1041 = vunpack.c.l.b16 %v954
        %v1042 = vunpack.c.h.b16 %v954
        %v1043 = vunpack.c.l.b16 %v955
        %v1044 = vunpack.c.h.b16 %v955
        %v1045 = vunpack.c.l.b16 %v956
        %v1046 = vunpack.c.h.b16 %v956
        %v1047 = vunpack.c.l.b16 %v957
        %v1048 = vunpack.c.h.b16 %v957
        %v1049 = vunpack.c.l.b16 %v958
        %v1050 = vunpack.c.h.b16 %v958
        %v1051 = vunpack.c.l.b16 %v959
        %v1052 = vunpack.c.h.b16 %v959
        %v1053 = vunpack.c.l.b16 %v960
        %v1054 = vunpack.c.h.b16 %v960
        %v1055 = vunpack.c.l.b16 %v961
        %v1056 = vunpack.c.h.b16 %v961
        %v1057 = vunpack.c.l.b16 %v962
        %v1058 = vunpack.c.h.b16 %v962
        %v1059 = vunpack.c.l.b16 %v963
        %v1060 = vunpack.c.h.b16 %v963
        %v1061 = vunpack.c.l.b16 %v964
        %v1062 = vunpack.c.h.b16 %v964
        %v1063 = vunpack.c.l.b16 %v965
        %v1064 = vunpack.c.h.b16 %v965
        %v1065 = vunpack.c.l.b16 %v966
        %v1066 = vunpack.c.h.b16 %v966
        %v1067 = vunpack.c.l.b16 %v967
        %v1068 = vunpack.c.h.b16 %v967
        %v1069 = vunpack.c.l.b16 %v968
        %v1070 = vunpack.c.h.b16 %v968
        %v1071 = vunpack.c.l.b16 %v969
        %v1072 = vunpack.c.h.b16 %v969
        %v1073 = vunpack.c.l.b16 %v970
        %v1074 = vunpack.c.h.b16 %v970
        %v1075 = vpack.c.b16 %v1013, %v1011
        %v1076 = vpack.c.b16 %v1014, %v1012
        %v1077 = vpack.c.b16 %v1017, %v1015
        %v1078 = vpack.c.b16 %v1018, %v1016
        %v1079 = vpack.c.b16 %v1021, %v1019
        %v1080 = vpack.c.b16 %v1022, %v1020
        %v1081 = vpack.c.b16 %v1025, %v1023
        %v1082 = vpack.c.b16 %v1026, %v1024
        %v1083 = vpack.c.b16 %v1029, %v1027
        %v1084 = vpack.c.b16 %v1030, %v1028
        %v1085 = vpack.c.b16 %v1033, %v1031
        %v1086 = vpack.c.b16 %v1034, %v1032
        %v1087 = vpack.c.b16 %v1037, %v1035
        %v1088 = vpack.c.b16 %v1038, %v1036
        %v1089 = vpack.c.b16 %v1041, %v1039
        %v1090 = vpack.c.b16 %v1042, %v1040
        %v1091 = vpack.c.b16 %v1045, %v1043
        %v1092 = vpack.c.b16 %v1046, %v1044
        %v1093 = vpack.c.b16 %v1049, %v1047
        %v1094 = vpack.c.b16 %v1050, %v1048
        %v1095 = vpack.c.b16 %v1053, %v1051
        %v1096 = vpack.c.b16 %v1054, %v1052
        %v1097 = vpack.c.b16 %v1057, %v1055
        %v1098 = vpack.c.b16 %v1058, %v1056
        %v1099 = vpack.c.b16 %v1061, %v1059
        %v1100 = vpack.c.b16 %v1062, %v1060
        %v1101 = vpack.c.b16 %v1065, %v1063
        %v1102 = vpack.c.b16 %v1066, %v1064
        %v1103 = vpack.c.b16 %v1069, %v1067
        %v1104 = vpack.c.b16 %v1070, %v1068
        %v1105 = vpack.c.b16 %v1073, %v1071
        %v1106 = vpack.c.b16 %v1074, %v1072
        %1139 = vmatprep.subr.bf16.mxu0 %v1076
        %1140 = vmatpush1.bf16.msra.mxu0 %v1075
        %1141 = vmatprep.subr.bf16.mxu0 %v1078
        %1142 = vmatpush1.bf16.msra.mxu0 %v1077
        %1143 = vmatprep.subr.bf16.mxu0 %v1080
        %1144 = vmatpush1.bf16.msra.mxu0 %v1079
        %1145 = vmatprep.subr.bf16.mxu0 %v1082
        %1146 = vmatpush1.bf16.msra.mxu0 %v1081
        %1147 = vmatprep.subr.bf16.mxu0 %v1084
        %1148 = vmatpush1.bf16.msra.mxu0 %v1083
        %1149 = vmatprep.subr.bf16.mxu0 %v1086
        %1150 = vmatpush1.bf16.msra.mxu0 %v1085
        %1151 = vmatprep.subr.bf16.mxu0 %v1088
        %1152 = vmatpush1.bf16.msra.mxu0 %v1087
        %1153 = vmatprep.subr.bf16.mxu0 %v1090
        %1154 = vmatpush1.bf16.msra.mxu0 %v1089
        %1155 = vmatprep.subr.bf16.mxu0 %v1092
        %1156 = vmatpush1.bf16.msra.mxu0 %v1091
        %1157 = vmatprep.subr.bf16.mxu0 %v1094
        %1158 = vmatpush1.bf16.msra.mxu0 %v1093
        %1159 = vmatprep.subr.bf16.mxu0 %v1096
        %1160 = vmatpush1.bf16.msra.mxu0 %v1095
        %1161 = vmatprep.subr.bf16.mxu0 %v1098
        %1162 = vmatpush1.bf16.msra.mxu0 %v1097
        %1163 = vmatprep.subr.bf16.mxu0 %v1100
        %1164 = vmatpush1.bf16.msra.mxu0 %v1099
        %1165 = vmatprep.subr.bf16.mxu0 %v1102
        %1166 = vmatpush1.bf16.msra.mxu0 %v1101
        %1167 = vmatprep.subr.bf16.mxu0 %v1104
        %1168 = vmatpush1.bf16.msra.mxu0 %v1103
        %1169 = vmatprep.subr.bf16.mxu0 %v1106
        %1170 = vmatpush1.bf16.msra.mxu0 %v1105
        %1171 = vmatprep.mubr.bf16.mxu0 %v689
        %1172 = vmatmul.mubr.bf16.gmra.mrb[0].mxu0 %v688
        %v1173 = vpop.f32.mrb[0].mxu0
        %v1174 = vadd.f32 %v974, %v1173
        %v1175 = vpop.f32.mrb[0].mxu0
        %v1176 = vadd.f32 %v978, %v1175
        %v1177 = vpop.f32.mrb[0].mxu0
        %v1178 = vadd.f32 %v974, %v1177
        %v1179 = vpop.f32.mrb[0].mxu0
        %v1180 = vadd.f32 %v978, %v1179
        %1181 = vmatprep.mubr.bf16.mxu0 %v691
        %1182 = vmatmul.mubr.bf16.gmra.mrb[0].mxu0 %v690
        %v1183 = vpop.f32.mrb[0].mxu0
        %v1184 = vadd.f32 %v974, %v1183
        %v1185 = vpop.f32.mrb[0].mxu0
        %v1186 = vadd.f32 %v978, %v1185
        %v1187 = vpop.f32.mrb[0].mxu0
        %v1188 = vadd.f32 %v974, %v1187
        %v1189 = vpop.f32.mrb[0].mxu0
        %v1190 = vadd.f32 %v978, %v1189
        %1191 = vdwg.mxu0
        %v1192 = vld [vmem:[#allocation13] sm:$0xff]
        %v1193 = vld [vmem:[#allocation13 + $0x8] sm:$0xff]
        %v1194 = vld [vmem:[#allocation13 + $0x10] sm:$0xff]
        %v1195 = vld [vmem:[#allocation13 + $0x18] sm:$0xff]
        %v1196 = vld [vmem:[#allocation13 + $0x20] sm:$0xff]
        %v1197 = vld [vmem:[#allocation13 + $0x28] sm:$0xff]
        %v1198 = vld [vmem:[#allocation13 + $0x30] sm:$0xff]
        %v1199 = vld [vmem:[#allocation13 + $0x38] sm:$0xff]
        %v1200 = vld [vmem:[#allocation13 + $0x40] sm:$0xff]
        %v1201 = vld [vmem:[#allocation13 + $0x48] sm:$0xff]
        %v1202 = vld [vmem:[#allocation13 + $0x50] sm:$0xff]
        %v1203 = vld [vmem:[#allocation13 + $0x58] sm:$0xff]
        %v1204 = vld [vmem:[#allocation13 + $0x60] sm:$0xff]
        %v1205 = vld [vmem:[#allocation13 + $0x68] sm:$0xff]
        %v1206 = vld [vmem:[#allocation13 + $0x70] sm:$0xff]
        %v1207 = vld [vmem:[#allocation13 + $0x78] sm:$0xff]
        %v1208 = vld [vmem:[#allocation13 + $0x80] sm:$0xff]
        %v1209 = vld [vmem:[#allocation13 + $0x88] sm:$0xff]
        %v1210 = vld [vmem:[#allocation13 + $0x90] sm:$0xff]
        %v1211 = vld [vmem:[#allocation13 + $0x98] sm:$0xff]
        %v1212 = vld [vmem:[#allocation13 + $0xa0] sm:$0xff]
        %v1213 = vld [vmem:[#allocation13 + $0xa8] sm:$0xff]
        %v1214 = vld [vmem:[#allocation13 + $0xb0] sm:$0xff]
        %v1215 = vld [vmem:[#allocation13 + $0xb8] sm:$0xff]
        %v1216 = vld [vmem:[#allocation13 + $0xc0] sm:$0xff]
        %v1217 = vld [vmem:[#allocation13 + $0xc8] sm:$0xff]
        %v1218 = vld [vmem:[#allocation13 + $0xd0] sm:$0xff]
        %v1219 = vld [vmem:[#allocation13 + $0xd8] sm:$0xff]
        %v1220 = vld [vmem:[#allocation13 + $0xe0] sm:$0xff]
        %v1221 = vld [vmem:[#allocation13 + $0xe8] sm:$0xff]
        %v1222 = vld [vmem:[#allocation13 + $0xf0] sm:$0xff]
        %v1223 = vld [vmem:[#allocation13 + $0xf8] sm:$0xff]
        %v1224 = vlaneseq
        %v1225 = vshrl.u32 %v1224, 7
        %v1226 = vsub.s32 2, %v1225
        %v1227 = vrot.slane %v646, %v1226
        %v1228 = vlaneseq
        %v1229 = vshrl.u32 %v1228, 7
        %v1230 = vsub.s32 2, %v1229
        %v1231 = vrot.slane %v647, %v1230
        %v1264 = vunpack.c.l.b16 %v1192
        %v1265 = vunpack.c.h.b16 %v1192
        %v1266 = vunpack.c.l.b16 %v1193
        %v1267 = vunpack.c.h.b16 %v1193
        %v1268 = vunpack.c.l.b16 %v1194
        %v1269 = vunpack.c.h.b16 %v1194
        %v1270 = vunpack.c.l.b16 %v1195
        %v1271 = vunpack.c.h.b16 %v1195
        %v1272 = vunpack.c.l.b16 %v1196
        %v1273 = vunpack.c.h.b16 %v1196
        %v1274 = vunpack.c.l.b16 %v1197
        %v1275 = vunpack.c.h.b16 %v1197
        %v1276 = vunpack.c.l.b16 %v1198
        %v1277 = vunpack.c.h.b16 %v1198
        %v1278 = vunpack.c.l.b16 %v1199
        %v1279 = vunpack.c.h.b16 %v1199
        %v1280 = vunpack.c.l.b16 %v1200
        %v1281 = vunpack.c.h.b16 %v1200
        %v1282 = vunpack.c.l.b16 %v1201
        %v1283 = vunpack.c.h.b16 %v1201
        %v1284 = vunpack.c.l.b16 %v1202
        %v1285 = vunpack.c.h.b16 %v1202
        %v1286 = vunpack.c.l.b16 %v1203
        %v1287 = vunpack.c.h.b16 %v1203
        %v1288 = vunpack.c.l.b16 %v1204
        %v1289 = vunpack.c.h.b16 %v1204
        %v1290 = vunpack.c.l.b16 %v1205
        %v1291 = vunpack.c.h.b16 %v1205
        %v1292 = vunpack.c.l.b16 %v1206
        %v1293 = vunpack.c.h.b16 %v1206
        %v1294 = vunpack.c.l.b16 %v1207
        %v1295 = vunpack.c.h.b16 %v1207
        %v1296 = vunpack.c.l.b16 %v1208
        %v1297 = vunpack.c.h.b16 %v1208
        %v1298 = vunpack.c.l.b16 %v1209
        %v1299 = vunpack.c.h.b16 %v1209
        %v1300 = vunpack.c.l.b16 %v1210
        %v1301 = vunpack.c.h.b16 %v1210
        %v1302 = vunpack.c.l.b16 %v1211
        %v1303 = vunpack.c.h.b16 %v1211
        %v1304 = vunpack.c.l.b16 %v1212
        %v1305 = vunpack.c.h.b16 %v1212
        %v1306 = vunpack.c.l.b16 %v1213
        %v1307 = vunpack.c.h.b16 %v1213
        %v1308 = vunpack.c.l.b16 %v1214
        %v1309 = vunpack.c.h.b16 %v1214
        %v1310 = vunpack.c.l.b16 %v1215
        %v1311 = vunpack.c.h.b16 %v1215
        %v1312 = vunpack.c.l.b16 %v1216
        %v1313 = vunpack.c.h.b16 %v1216
        %v1314 = vunpack.c.l.b16 %v1217
        %v1315 = vunpack.c.h.b16 %v1217
        %v1316 = vunpack.c.l.b16 %v1218
        %v1317 = vunpack.c.h.b16 %v1218
        %v1318 = vunpack.c.l.b16 %v1219
        %v1319 = vunpack.c.h.b16 %v1219
        %v1320 = vunpack.c.l.b16 %v1220
        %v1321 = vunpack.c.h.b16 %v1220
        %v1322 = vunpack.c.l.b16 %v1221
        %v1323 = vunpack.c.h.b16 %v1221
        %v1324 = vunpack.c.l.b16 %v1222
        %v1325 = vunpack.c.h.b16 %v1222
        %v1326 = vunpack.c.l.b16 %v1223
        %v1327 = vunpack.c.h.b16 %v1223
        %v1328 = vpack.c.b16 %v1266, %v1264
        %v1329 = vpack.c.b16 %v1267, %v1265
        %v1330 = vpack.c.b16 %v1270, %v1268
        %v1331 = vpack.c.b16 %v1271, %v1269
        %v1332 = vpack.c.b16 %v1274, %v1272
        %v1333 = vpack.c.b16 %v1275, %v1273
        %v1334 = vpack.c.b16 %v1278, %v1276
        %v1335 = vpack.c.b16 %v1279, %v1277
        %v1336 = vpack.c.b16 %v1282, %v1280
        %v1337 = vpack.c.b16 %v1283, %v1281
        %v1338 = vpack.c.b16 %v1286, %v1284
        %v1339 = vpack.c.b16 %v1287, %v1285
        %v1340 = vpack.c.b16 %v1290, %v1288
        %v1341 = vpack.c.b16 %v1291, %v1289
        %v1342 = vpack.c.b16 %v1294, %v1292
        %v1343 = vpack.c.b16 %v1295, %v1293
        %v1344 = vpack.c.b16 %v1298, %v1296
        %v1345 = vpack.c.b16 %v1299, %v1297
        %v1346 = vpack.c.b16 %v1302, %v1300
        %v1347 = vpack.c.b16 %v1303, %v1301
        %v1348 = vpack.c.b16 %v1306, %v1304
        %v1349 = vpack.c.b16 %v1307, %v1305
        %v1350 = vpack.c.b16 %v1310, %v1308
        %v1351 = vpack.c.b16 %v1311, %v1309
        %v1352 = vpack.c.b16 %v1314, %v1312
        %v1353 = vpack.c.b16 %v1315, %v1313
        %v1354 = vpack.c.b16 %v1318, %v1316
        %v1355 = vpack.c.b16 %v1319, %v1317
        %v1356 = vpack.c.b16 %v1322, %v1320
        %v1357 = vpack.c.b16 %v1323, %v1321
        %v1358 = vpack.c.b16 %v1326, %v1324
        %v1359 = vpack.c.b16 %v1327, %v1325
        %1392 = vmatprep.subr.bf16.mxu0 %v1329
        %1393 = vmatpush1.bf16.msra.mxu0 %v1328
        %1394 = vmatprep.subr.bf16.mxu0 %v1331
        %1395 = vmatpush1.bf16.msra.mxu0 %v1330
        %1396 = vmatprep.subr.bf16.mxu0 %v1333
        %1397 = vmatpush1.bf16.msra.mxu0 %v1332
        %1398 = vmatprep.subr.bf16.mxu0 %v1335
        %1399 = vmatpush1.bf16.msra.mxu0 %v1334
        %1400 = vmatprep.subr.bf16.mxu0 %v1337
        %1401 = vmatpush1.bf16.msra.mxu0 %v1336
        %1402 = vmatprep.subr.bf16.mxu0 %v1339
        %1403 = vmatpush1.bf16.msra.mxu0 %v1338
        %1404 = vmatprep.subr.bf16.mxu0 %v1341
        %1405 = vmatpush1.bf16.msra.mxu0 %v1340
        %1406 = vmatprep.subr.bf16.mxu0 %v1343
        %1407 = vmatpush1.bf16.msra.mxu0 %v1342
        %1408 = vmatprep.subr.bf16.mxu0 %v1345
        %1409 = vmatpush1.bf16.msra.mxu0 %v1344
        %1410 = vmatprep.subr.bf16.mxu0 %v1347
        %1411 = vmatpush1.bf16.msra.mxu0 %v1346
        %1412 = vmatprep.subr.bf16.mxu0 %v1349
        %1413 = vmatpush1.bf16.msra.mxu0 %v1348
        %1414 = vmatprep.subr.bf16.mxu0 %v1351
        %1415 = vmatpush1.bf16.msra.mxu0 %v1350
        %1416 = vmatprep.subr.bf16.mxu0 %v1353
        %1417 = vmatpush1.bf16.msra.mxu0 %v1352
        %1418 = vmatprep.subr.bf16.mxu0 %v1355
        %1419 = vmatpush1.bf16.msra.mxu0 %v1354
        %1420 = vmatprep.subr.bf16.mxu0 %v1357
        %1421 = vmatpush1.bf16.msra.mxu0 %v1356
        %1422 = vmatprep.subr.bf16.mxu0 %v1359
        %1423 = vmatpush1.bf16.msra.mxu0 %v1358
        %1424 = vmatprep.mubr.bf16.mxu0 %v693
        %1425 = vmatmul.mubr.bf16.gmra.mrb[0].mxu0 %v692
        %v1426 = vpop.f32.mrb[0].mxu0
        %v1427 = vadd.f32 %v1227, %v1426
        %v1428 = vpop.f32.mrb[0].mxu0
        %v1429 = vadd.f32 %v1231, %v1428
        %v1430 = vpop.f32.mrb[0].mxu0
        %v1431 = vadd.f32 %v1227, %v1430
        %v1432 = vpop.f32.mrb[0].mxu0
        %v1433 = vadd.f32 %v1231, %v1432
        %1434 = vmatprep.mubr.bf16.mxu0 %v695
        %1435 = vmatmul.mubr.bf16.gmra.mrb[0].mxu0 %v694
        %v1436 = vpop.f32.mrb[0].mxu0
        %v1437 = vadd.f32 %v1227, %v1436
        %v1438 = vpop.f32.mrb[0].mxu0
        %v1439 = vadd.f32 %v1231, %v1438
        %v1440 = vpop.f32.mrb[0].mxu0
        %v1441 = vadd.f32 %v1227, %v1440
        %v1442 = vpop.f32.mrb[0].mxu0
        %v1443 = vadd.f32 %v1231, %v1442
        %1444 = vdwg.mxu0
        %v1445 = vmul.f32 %v931, 0.17677669
        %v1446 = vmul.f32 %v933, 0.17677669
        %v1447 = vmul.f32 %v935, 0.17677669
        %v1448 = vmul.f32 %v937, 0.17677669
        %v1449 = vpack.c.bf16 %v1447, %v1445
        %v1450 = vpack.c.bf16 %v1448, %v1446
        %v1451 = vpack.c.bf16 %v1178, %v1174
        %v1452 = vpack.c.bf16 %v1180, %v1176
        %v1453 = vpack.c.bf16 %v1188, %v1184
        %v1454 = vpack.c.bf16 %v1190, %v1186
        %v1455 = vpack.c.bf16 %v1431, %v1427
        %v1456 = vpack.c.bf16 %v1433, %v1429
        %v1457 = vpack.c.bf16 %v1441, %v1437
        %v1458 = vpack.c.bf16 %v1443, %v1439
        %1460 = vrot.lane.b32.xlu0 %v1449, 96
        %v1461 = vpop.permute.xlu0 %1460
        %1462 = vrot.lane.b32.xlu0 %v1449, 64
        %v1463 = vpop.permute.xlu0 %1462
        %1464 = vrot.lane.b32.xlu0 %v1449, 32
        %v1465 = vpop.permute.xlu0 %1464
        %1467 = vrot.lane.b32.xlu0 %v1450, 96
        %v1468 = vpop.permute.xlu0 %1467
        %1469 = vrot.lane.b32.xlu0 %v1450, 64
        %v1470 = vpop.permute.xlu0 %1469
        %1471 = vrot.lane.b32.xlu0 %v1450, 32
        %v1472 = vpop.permute.xlu0 %1471
        %v1473 = vrot.slane %v1449, 4
        %1474 = vrot.lane.b32.xlu0 %v1473, 96
        %v1475 = vpop.permute.xlu0 %1474
        %1476 = vrot.lane.b32.xlu0 %v1473, 64
        %v1477 = vpop.permute.xlu0 %1476
        %1478 = vrot.lane.b32.xlu0 %v1473, 32
        %v1479 = vpop.permute.xlu0 %1478
        %v1480 = vrot.slane %v1450, 4
        %1481 = vrot.lane.b32.xlu0 %v1480, 96
        %v1482 = vpop.permute.xlu0 %1481
        %1483 = vrot.lane.b32.xlu0 %v1480, 64
        %v1484 = vpop.permute.xlu0 %1483
        %1485 = vrot.lane.b32.xlu0 %v1480, 32
        %v1486 = vpop.permute.xlu0 %1485
        %1488 = vrot.lane.b32.xlu0 %v1451, 96
        %v1489 = vpop.permute.xlu0 %1488
        %1490 = vrot.lane.b32.xlu0 %v1451, 64
        %v1491 = vpop.permute.xlu0 %1490
        %1492 = vrot.lane.b32.xlu0 %v1451, 32
        %v1493 = vpop.permute.xlu0 %1492
        %1495 = vrot.lane.b32.xlu0 %v1452, 96
        %v1496 = vpop.permute.xlu0 %1495
        %1497 = vrot.lane.b32.xlu0 %v1452, 64
        %v1498 = vpop.permute.xlu0 %1497
        %1499 = vrot.lane.b32.xlu0 %v1452, 32
        %v1500 = vpop.permute.xlu0 %1499
        %1502 = vrot.lane.b32.xlu0 %v1453, 96
        %v1503 = vpop.permute.xlu0 %1502
        %1504 = vrot.lane.b32.xlu0 %v1453, 64
        %v1505 = vpop.permute.xlu0 %1504
        %1506 = vrot.lane.b32.xlu0 %v1453, 32
        %v1507 = vpop.permute.xlu0 %1506
        %1509 = vrot.lane.b32.xlu0 %v1454, 96
        %v1510 = vpop.permute.xlu0 %1509
        %1511 = vrot.lane.b32.xlu0 %v1454, 64
        %v1512 = vpop.permute.xlu0 %1511
        %1513 = vrot.lane.b32.xlu0 %v1454, 32
        %v1514 = vpop.permute.xlu0 %1513
        %1516 = vrot.lane.b32.xlu0 %v1455, 96
        %v1517 = vpop.permute.xlu0 %1516
        %1519 = vrot.lane.b32.xlu0 %v1455, 64
        %v1520 = vpop.permute.xlu0 %1519
        %1522 = vrot.lane.b32.xlu0 %v1455, 32
        %v1523 = vpop.permute.xlu0 %1522
        %1526 = vrot.lane.b32.xlu0 %v1456, 96
        %v1527 = vpop.permute.xlu0 %1526
        %1529 = vrot.lane.b32.xlu0 %v1456, 64
        %v1530 = vpop.permute.xlu0 %1529
        %1532 = vrot.lane.b32.xlu0 %v1456, 32
        %v1533 = vpop.permute.xlu0 %1532
        %1536 = vrot.lane.b32.xlu0 %v1457, 96
        %v1537 = vpop.permute.xlu0 %1536
        %1539 = vrot.lane.b32.xlu0 %v1457, 64
        %v1540 = vpop.permute.xlu0 %1539
        %1542 = vrot.lane.b32.xlu0 %v1457, 32
        %v1543 = vpop.permute.xlu0 %1542
        %1546 = vrot.lane.b32.xlu0 %v1458, 96
        %v1547 = vpop.permute.xlu0 %1546
        %1549 = vrot.lane.b32.xlu0 %v1458, 64
        %v1550 = vpop.permute.xlu0 %1549
        %1552 = vrot.lane.b32.xlu0 %v1458, 32
        %v1553 = vpop.permute.xlu0 %1552
        %vm1555 = vcmask 261120
        %v1557 = vsel %vm1555, %v1449, 0
        %v1560 = vsel %vm1555, %v1451, 0
        %1562 = vmatprep.subr.bf16.mxu0 0
        %1563 = vmatpush1.bf16.xpose.msra.mxu0 %v1560
        %1564 = vmatprep.subr.bf16.mxu0 0
        %1565 = vmatpush1.bf16.xpose.msra.mxu0 0
        %1566 = vmatprep.subr.bf16.mxu0 0
        %1567 = vmatpush1.bf16.xpose.msra.mxu0 0
        %1568 = vmatprep.subr.bf16.mxu0 0
        %1569 = vmatpush1.bf16.xpose.msra.mxu0 0
        %1570 = vmatprep.subr.bf16.mxu0 0
        %1571 = vmatpush1.bf16.xpose.msra.mxu0 0
        %1572 = vmatprep.subr.bf16.mxu0 0
        %1573 = vmatpush1.bf16.xpose.msra.mxu0 0
        %1574 = vmatprep.subr.bf16.mxu0 0
        %1575 = vmatpush1.bf16.xpose.msra.mxu0 0
        %1576 = vmatprep.subr.bf16.mxu0 0
        %1577 = vmatpush1.bf16.xpose.msra.mxu0 0
        %1578 = vmatprep.subr.bf16.mxu0 0
        %1579 = vmatpush1.bf16.xpose.msra.mxu0 0
        %1580 = vmatprep.subr.bf16.mxu0 0
        %1581 = vmatpush1.bf16.xpose.msra.mxu0 0
        %1582 = vmatprep.subr.bf16.mxu0 0
        %1583 = vmatpush1.bf16.xpose.msra.mxu0 0
        %1584 = vmatprep.subr.bf16.mxu0 0
        %1585 = vmatpush1.bf16.xpose.msra.mxu0 0
        %1586 = vmatprep.subr.bf16.mxu0 0
        %1587 = vmatpush1.bf16.xpose.msra.mxu0 0
        %1588 = vmatprep.subr.bf16.mxu0 0
        %1589 = vmatpush1.bf16.xpose.msra.mxu0 0
        %1590 = vmatprep.subr.bf16.mxu0 0
        %1591 = vmatpush1.bf16.xpose.msra.mxu0 0
        %1592 = vmatprep.subr.bf16.mxu0 0
        %1593 = vmatpush1.bf16.xpose.msra.mxu0 0
        %1594 = vmatprep.mubr.bf16.mxu0 0
        %1595 = vmatmul.mubr.bf16.gmra.mrb[0].mxu0 %v1557
        %v1596 = vpop.f32.mrb[0].mxu0
        %v1597 = vadd.f32 0.0, %v1596
        %v1598 = vpop.f32.mrb[0].mxu0
        %v1599 = vpop.f32.mrb[0].mxu0
        %v1600 = vpop.f32.mrb[0].mxu0
        %1601 = vdwg.mxu0
        %v1603 = vsel %vm1555, %v1461, 0
        %v1606 = vsel %vm1555, %v1489, 0
        %1608 = vmatprep.subr.bf16.mxu0 0
        %1609 = vmatpush1.bf16.xpose.msra.mxu0 %v1606
        %1610 = vmatprep.subr.bf16.mxu0 0
        %1611 = vmatpush1.bf16.xpose.msra.mxu0 0
        %1612 = vmatprep.subr.bf16.mxu0 0
        %1613 = vmatpush1.bf16.xpose.msra.mxu0 0
        %1614 = vmatprep.subr.bf16.mxu0 0
        %1615 = vmatpush1.bf16.xpose.msra.mxu0 0
        %1616 = vmatprep.subr.bf16.mxu0 0
        %1617 = vmatpush1.bf16.xpose.msra.mxu0 0
        %1618 = vmatprep.subr.bf16.mxu0 0
        %1619 = vmatpush1.bf16.xpose.msra.mxu0 0
        %1620 = vmatprep.subr.bf16.mxu0 0
        %1621 = vmatpush1.bf16.xpose.msra.mxu0 0
        %1622 = vmatprep.subr.bf16.mxu0 0
        %1623 = vmatpush1.bf16.xpose.msra.mxu0 0
        %1624 = vmatprep.subr.bf16.mxu0 0
        %1625 = vmatpush1.bf16.xpose.msra.mxu0 0
        %1626 = vmatprep.subr.bf16.mxu0 0
        %1627 = vmatpush1.bf16.xpose.msra.mxu0 0
        %1628 = vmatprep.subr.bf16.mxu0 0
        %1629 = vmatpush1.bf16.xpose.msra.mxu0 0
        %1630 = vmatprep.subr.bf16.mxu0 0
        %1631 = vmatpush1.bf16.xpose.msra.mxu0 0
        %1632 = vmatprep.subr.bf16.mxu0 0
        %1633 = vmatpush1.bf16.xpose.msra.mxu0 0
        %1634 = vmatprep.subr.bf16.mxu0 0
        %1635 = vmatpush1.bf16.xpose.msra.mxu0 0
        %1636 = vmatprep.subr.bf16.mxu0 0
        %1637 = vmatpush1.bf16.xpose.msra.mxu0 0
        %1638 = vmatprep.subr.bf16.mxu0 0
        %1639 = vmatpush1.bf16.xpose.msra.mxu0 0
        %1640 = vmatprep.mubr.bf16.mxu0 0
        %1641 = vmatmul.mubr.bf16.gmra.mrb[0].mxu0 %v1603
        %v1642 = vpop.f32.mrb[0].mxu0
        %v1643 = vadd.f32 0.0, %v1642
        %v1644 = vpop.f32.mrb[0].mxu0
        %v1645 = vpop.f32.mrb[0].mxu0
        %v1646 = vpop.f32.mrb[0].mxu0
        %1647 = vdwg.mxu0
        %v1649 = vsel %vm1555, %v1463, 0
        %v1652 = vsel %vm1555, %v1491, 0
        %1654 = vmatprep.subr.bf16.mxu0 0
        %1655 = vmatpush1.bf16.xpose.msra.mxu0 %v1652
        %1656 = vmatprep.subr.bf16.mxu0 0
        %1657 = vmatpush1.bf16.xpose.msra.mxu0 0
        %1658 = vmatprep.subr.bf16.mxu0 0
        %1659 = vmatpush1.bf16.xpose.msra.mxu0 0
        %1660 = vmatprep.subr.bf16.mxu0 0
        %1661 = vmatpush1.bf16.xpose.msra.mxu0 0
        %1662 = vmatprep.subr.bf16.mxu0 0
        %1663 = vmatpush1.bf16.xpose.msra.mxu0 0
        %1664 = vmatprep.subr.bf16.mxu0 0
        %1665 = vmatpush1.bf16.xpose.msra.mxu0 0
        %1666 = vmatprep.subr.bf16.mxu0 0
        %1667 = vmatpush1.bf16.xpose.msra.mxu0 0
        %1668 = vmatprep.subr.bf16.mxu0 0
        %1669 = vmatpush1.bf16.xpose.msra.mxu0 0
        %1670 = vmatprep.subr.bf16.mxu0 0
        %1671 = vmatpush1.bf16.xpose.msra.mxu0 0
        %1672 = vmatprep.subr.bf16.mxu0 0
        %1673 = vmatpush1.bf16.xpose.msra.mxu0 0
        %1674 = vmatprep.subr.bf16.mxu0 0
        %1675 = vmatpush1.bf16.xpose.msra.mxu0 0
        %1676 = vmatprep.subr.bf16.mxu0 0
        %1677 = vmatpush1.bf16.xpose.msra.mxu0 0
        %1678 = vmatprep.subr.bf16.mxu0 0
        %1679 = vmatpush1.bf16.xpose.msra.mxu0 0
        %1680 = vmatprep.subr.bf16.mxu0 0
        %1681 = vmatpush1.bf16.xpose.msra.mxu0 0
        %1682 = vmatprep.subr.bf16.mxu0 0
        %1683 = vmatpush1.bf16.xpose.msra.mxu0 0
        %1684 = vmatprep.subr.bf16.mxu0 0
        %1685 = vmatpush1.bf16.xpose.msra.mxu0 0
        %1686 = vmatprep.mubr.bf16.mxu0 0
        %1687 = vmatmul.mubr.bf16.gmra.mrb[0].mxu0 %v1649
        %v1688 = vpop.f32.mrb[0].mxu0
        %v1689 = vadd.f32 0.0, %v1688
        %v1690 = vpop.f32.mrb[0].mxu0
        %v1691 = vpop.f32.mrb[0].mxu0
        %v1692 = vpop.f32.mrb[0].mxu0
        %1693 = vdwg.mxu0
        %v1695 = vsel %vm1555, %v1465, 0
        %v1698 = vsel %vm1555, %v1493, 0
        %1700 = vmatprep.subr.bf16.mxu0 0
        %1701 = vmatpush1.bf16.xpose.msra.mxu0 %v1698
        %1702 = vmatprep.subr.bf16.mxu0 0
        %1703 = vmatpush1.bf16.xpose.msra.mxu0 0
        %1704 = vmatprep.subr.bf16.mxu0 0
        %1705 = vmatpush1.bf16.xpose.msra.mxu0 0
        %1706 = vmatprep.subr.bf16.mxu0 0
        %1707 = vmatpush1.bf16.xpose.msra.mxu0 0
        %1708 = vmatprep.subr.bf16.mxu0 0
        %1709 = vmatpush1.bf16.xpose.msra.mxu0 0
        %1710 = vmatprep.subr.bf16.mxu0 0
        %1711 = vmatpush1.bf16.xpose.msra.mxu0 0
        %1712 = vmatprep.subr.bf16.mxu0 0
        %1713 = vmatpush1.bf16.xpose.msra.mxu0 0
        %1714 = vmatprep.subr.bf16.mxu0 0
        %1715 = vmatpush1.bf16.xpose.msra.mxu0 0
        %1716 = vmatprep.subr.bf16.mxu0 0
        %1717 = vmatpush1.bf16.xpose.msra.mxu0 0
        %1718 = vmatprep.subr.bf16.mxu0 0
        %1719 = vmatpush1.bf16.xpose.msra.mxu0 0
        %1720 = vmatprep.subr.bf16.mxu0 0
        %1721 = vmatpush1.bf16.xpose.msra.mxu0 0
        %1722 = vmatprep.subr.bf16.mxu0 0
        %1723 = vmatpush1.bf16.xpose.msra.mxu0 0
        %1724 = vmatprep.subr.bf16.mxu0 0
        %1725 = vmatpush1.bf16.xpose.msra.mxu0 0
        %1726 = vmatprep.subr.bf16.mxu0 0
        %1727 = vmatpush1.bf16.xpose.msra.mxu0 0
        %1728 = vmatprep.subr.bf16.mxu0 0
        %1729 = vmatpush1.bf16.xpose.msra.mxu0 0
        %1730 = vmatprep.subr.bf16.mxu0 0
        %1731 = vmatpush1.bf16.xpose.msra.mxu0 0
        %1732 = vmatprep.mubr.bf16.mxu0 0
        %1733 = vmatmul.mubr.bf16.gmra.mrb[0].mxu0 %v1695
        %v1734 = vpop.f32.mrb[0].mxu0
        %v1735 = vadd.f32 0.0, %v1734
        %v1736 = vpop.f32.mrb[0].mxu0
        %v1737 = vpop.f32.mrb[0].mxu0
        %v1738 = vpop.f32.mrb[0].mxu0
        %1739 = vdwg.mxu0
        %v1741 = vsel %vm1555, %v1450, 0
        %v1744 = vsel %vm1555, %v1452, 0
        %1746 = vmatprep.subr.bf16.mxu0 0
        %1747 = vmatpush1.bf16.xpose.msra.mxu0 %v1744
        %1748 = vmatprep.subr.bf16.mxu0 0
        %1749 = vmatpush1.bf16.xpose.msra.mxu0 0
        %1750 = vmatprep.subr.bf16.mxu0 0
        %1751 = vmatpush1.bf16.xpose.msra.mxu0 0
        %1752 = vmatprep.subr.bf16.mxu0 0
        %1753 = vmatpush1.bf16.xpose.msra.mxu0 0
        %1754 = vmatprep.subr.bf16.mxu0 0
        %1755 = vmatpush1.bf16.xpose.msra.mxu0 0
        %1756 = vmatprep.subr.bf16.mxu0 0
        %1757 = vmatpush1.bf16.xpose.msra.mxu0 0
        %1758 = vmatprep.subr.bf16.mxu0 0
        %1759 = vmatpush1.bf16.xpose.msra.mxu0 0
        %1760 = vmatprep.subr.bf16.mxu0 0
        %1761 = vmatpush1.bf16.xpose.msra.mxu0 0
        %1762 = vmatprep.subr.bf16.mxu0 0
        %1763 = vmatpush1.bf16.xpose.msra.mxu0 0
        %1764 = vmatprep.subr.bf16.mxu0 0
        %1765 = vmatpush1.bf16.xpose.msra.mxu0 0
        %1766 = vmatprep.subr.bf16.mxu0 0
        %1767 = vmatpush1.bf16.xpose.msra.mxu0 0
        %1768 = vmatprep.subr.bf16.mxu0 0
        %1769 = vmatpush1.bf16.xpose.msra.mxu0 0
        %1770 = vmatprep.subr.bf16.mxu0 0
        %1771 = vmatpush1.bf16.xpose.msra.mxu0 0
        %1772 = vmatprep.subr.bf16.mxu0 0
        %1773 = vmatpush1.bf16.xpose.msra.mxu0 0
        %1774 = vmatprep.subr.bf16.mxu0 0
        %1775 = vmatpush1.bf16.xpose.msra.mxu0 0
        %1776 = vmatprep.subr.bf16.mxu0 0
        %1777 = vmatpush1.bf16.xpose.msra.mxu0 0
        %1778 = vmatprep.mubr.bf16.mxu0 0
        %1779 = vmatmul.mubr.bf16.gmra.mrb[0].mxu0 %v1741
        %v1780 = vpop.f32.mrb[0].mxu0
        %v1781 = vadd.f32 0.0, %v1780
        %v1782 = vpop.f32.mrb[0].mxu0
        %v1783 = vpop.f32.mrb[0].mxu0
        %v1784 = vpop.f32.mrb[0].mxu0
        %1785 = vdwg.mxu0
        %v1787 = vsel %vm1555, %v1468, 0
        %v1790 = vsel %vm1555, %v1496, 0
        %1792 = vmatprep.subr.bf16.mxu0 0
        %1793 = vmatpush1.bf16.xpose.msra.mxu0 %v1790
        %1794 = vmatprep.subr.bf16.mxu0 0
        %1795 = vmatpush1.bf16.xpose.msra.mxu0 0
        %1796 = vmatprep.subr.bf16.mxu0 0
        %1797 = vmatpush1.bf16.xpose.msra.mxu0 0
        %1798 = vmatprep.subr.bf16.mxu0 0
        %1799 = vmatpush1.bf16.xpose.msra.mxu0 0
        %1800 = vmatprep.subr.bf16.mxu0 0
        %1801 = vmatpush1.bf16.xpose.msra.mxu0 0
        %1802 = vmatprep.subr.bf16.mxu0 0
        %1803 = vmatpush1.bf16.xpose.msra.mxu0 0
        %1804 = vmatprep.subr.bf16.mxu0 0
        %1805 = vmatpush1.bf16.xpose.msra.mxu0 0
        %1806 = vmatprep.subr.bf16.mxu0 0
        %1807 = vmatpush1.bf16.xpose.msra.mxu0 0
        %1808 = vmatprep.subr.bf16.mxu0 0
        %1809 = vmatpush1.bf16.xpose.msra.mxu0 0
        %1810 = vmatprep.subr.bf16.mxu0 0
        %1811 = vmatpush1.bf16.xpose.msra.mxu0 0
        %1812 = vmatprep.subr.bf16.mxu0 0
        %1813 = vmatpush1.bf16.xpose.msra.mxu0 0
        %1814 = vmatprep.subr.bf16.mxu0 0
        %1815 = vmatpush1.bf16.xpose.msra.mxu0 0
        %1816 = vmatprep.subr.bf16.mxu0 0
        %1817 = vmatpush1.bf16.xpose.msra.mxu0 0
        %1818 = vmatprep.subr.bf16.mxu0 0
        %1819 = vmatpush1.bf16.xpose.msra.mxu0 0
        %1820 = vmatprep.subr.bf16.mxu0 0
        %1821 = vmatpush1.bf16.xpose.msra.mxu0 0
        %1822 = vmatprep.subr.bf16.mxu0 0
        %1823 = vmatpush1.bf16.xpose.msra.mxu0 0
        %1824 = vmatprep.mubr.bf16.mxu0 0
        %1825 = vmatmul.mubr.bf16.gmra.mrb[0].mxu0 %v1787
        %v1826 = vpop.f32.mrb[0].mxu0
        %v1827 = vadd.f32 0.0, %v1826
        %v1828 = vpop.f32.mrb[0].mxu0
        %v1829 = vpop.f32.mrb[0].mxu0
        %v1830 = vpop.f32.mrb[0].mxu0
        %1831 = vdwg.mxu0
        %v1833 = vsel %vm1555, %v1470, 0
        %v1836 = vsel %vm1555, %v1498, 0
        %1838 = vmatprep.subr.bf16.mxu0 0
        %1839 = vmatpush1.bf16.xpose.msra.mxu0 %v1836
        %1840 = vmatprep.subr.bf16.mxu0 0
        %1841 = vmatpush1.bf16.xpose.msra.mxu0 0
        %1842 = vmatprep.subr.bf16.mxu0 0
        %1843 = vmatpush1.bf16.xpose.msra.mxu0 0
        %1844 = vmatprep.subr.bf16.mxu0 0
        %1845 = vmatpush1.bf16.xpose.msra.mxu0 0
        %1846 = vmatprep.subr.bf16.mxu0 0
        %1847 = vmatpush1.bf16.xpose.msra.mxu0 0
        %1848 = vmatprep.subr.bf16.mxu0 0
        %1849 = vmatpush1.bf16.xpose.msra.mxu0 0
        %1850 = vmatprep.subr.bf16.mxu0 0
        %1851 = vmatpush1.bf16.xpose.msra.mxu0 0
        %1852 = vmatprep.subr.bf16.mxu0 0
        %1853 = vmatpush1.bf16.xpose.msra.mxu0 0
        %1854 = vmatprep.subr.bf16.mxu0 0
        %1855 = vmatpush1.bf16.xpose.msra.mxu0 0
        %1856 = vmatprep.subr.bf16.mxu0 0
        %1857 = vmatpush1.bf16.xpose.msra.mxu0 0
        %1858 = vmatprep.subr.bf16.mxu0 0
        %1859 = vmatpush1.bf16.xpose.msra.mxu0 0
        %1860 = vmatprep.subr.bf16.mxu0 0
        %1861 = vmatpush1.bf16.xpose.msra.mxu0 0
        %1862 = vmatprep.subr.bf16.mxu0 0
        %1863 = vmatpush1.bf16.xpose.msra.mxu0 0
        %1864 = vmatprep.subr.bf16.mxu0 0
        %1865 = vmatpush1.bf16.xpose.msra.mxu0 0
        %1866 = vmatprep.subr.bf16.mxu0 0
        %1867 = vmatpush1.bf16.xpose.msra.mxu0 0
        %1868 = vmatprep.subr.bf16.mxu0 0
        %1869 = vmatpush1.bf16.xpose.msra.mxu0 0
        %1870 = vmatprep.mubr.bf16.mxu0 0
        %1871 = vmatmul.mubr.bf16.gmra.mrb[0].mxu0 %v1833
        %v1872 = vpop.f32.mrb[0].mxu0
        %v1873 = vadd.f32 0.0, %v1872
        %v1874 = vpop.f32.mrb[0].mxu0
        %v1875 = vpop.f32.mrb[0].mxu0
        %v1876 = vpop.f32.mrb[0].mxu0
        %1877 = vdwg.mxu0
        %v1879 = vsel %vm1555, %v1472, 0
        %v1882 = vsel %vm1555, %v1500, 0
        %1884 = vmatprep.subr.bf16.mxu0 0
        %1885 = vmatpush1.bf16.xpose.msra.mxu0 %v1882
        %1886 = vmatprep.subr.bf16.mxu0 0
        %1887 = vmatpush1.bf16.xpose.msra.mxu0 0
        %1888 = vmatprep.subr.bf16.mxu0 0
        %1889 = vmatpush1.bf16.xpose.msra.mxu0 0
        %1890 = vmatprep.subr.bf16.mxu0 0
        %1891 = vmatpush1.bf16.xpose.msra.mxu0 0
        %1892 = vmatprep.subr.bf16.mxu0 0
        %1893 = vmatpush1.bf16.xpose.msra.mxu0 0
        %1894 = vmatprep.subr.bf16.mxu0 0
        %1895 = vmatpush1.bf16.xpose.msra.mxu0 0
        %1896 = vmatprep.subr.bf16.mxu0 0
        %1897 = vmatpush1.bf16.xpose.msra.mxu0 0
        %1898 = vmatprep.subr.bf16.mxu0 0
        %1899 = vmatpush1.bf16.xpose.msra.mxu0 0
        %1900 = vmatprep.subr.bf16.mxu0 0
        %1901 = vmatpush1.bf16.xpose.msra.mxu0 0
        %1902 = vmatprep.subr.bf16.mxu0 0
        %1903 = vmatpush1.bf16.xpose.msra.mxu0 0
        %1904 = vmatprep.subr.bf16.mxu0 0
        %1905 = vmatpush1.bf16.xpose.msra.mxu0 0
        %1906 = vmatprep.subr.bf16.mxu0 0
        %1907 = vmatpush1.bf16.xpose.msra.mxu0 0
        %1908 = vmatprep.subr.bf16.mxu0 0
        %1909 = vmatpush1.bf16.xpose.msra.mxu0 0
        %1910 = vmatprep.subr.bf16.mxu0 0
        %1911 = vmatpush1.bf16.xpose.msra.mxu0 0
        %1912 = vmatprep.subr.bf16.mxu0 0
        %1913 = vmatpush1.bf16.xpose.msra.mxu0 0
        %1914 = vmatprep.subr.bf16.mxu0 0
        %1915 = vmatpush1.bf16.xpose.msra.mxu0 0
        %1916 = vmatprep.mubr.bf16.mxu0 0
        %1917 = vmatmul.mubr.bf16.gmra.mrb[0].mxu0 %v1879
        %v1918 = vpop.f32.mrb[0].mxu0
        %v1919 = vadd.f32 0.0, %v1918
        %v1920 = vpop.f32.mrb[0].mxu0
        %v1921 = vpop.f32.mrb[0].mxu0
        %v1922 = vpop.f32.mrb[0].mxu0
        %1923 = vdwg.mxu0
        %v1925 = vsel %vm1555, %v1473, 0
        %v1928 = vsel %vm1555, %v1453, 0
        %1930 = vmatprep.subr.bf16.mxu0 0
        %1931 = vmatpush1.bf16.xpose.msra.mxu0 %v1928
        %1932 = vmatprep.subr.bf16.mxu0 0
        %1933 = vmatpush1.bf16.xpose.msra.mxu0 0
        %1934 = vmatprep.subr.bf16.mxu0 0
        %1935 = vmatpush1.bf16.xpose.msra.mxu0 0
        %1936 = vmatprep.subr.bf16.mxu0 0
        %1937 = vmatpush1.bf16.xpose.msra.mxu0 0
        %1938 = vmatprep.subr.bf16.mxu0 0
        %1939 = vmatpush1.bf16.xpose.msra.mxu0 0
        %1940 = vmatprep.subr.bf16.mxu0 0
        %1941 = vmatpush1.bf16.xpose.msra.mxu0 0
        %1942 = vmatprep.subr.bf16.mxu0 0
        %1943 = vmatpush1.bf16.xpose.msra.mxu0 0
        %1944 = vmatprep.subr.bf16.mxu0 0
        %1945 = vmatpush1.bf16.xpose.msra.mxu0 0
        %1946 = vmatprep.subr.bf16.mxu0 0
        %1947 = vmatpush1.bf16.xpose.msra.mxu0 0
        %1948 = vmatprep.subr.bf16.mxu0 0
        %1949 = vmatpush1.bf16.xpose.msra.mxu0 0
        %1950 = vmatprep.subr.bf16.mxu0 0
        %1951 = vmatpush1.bf16.xpose.msra.mxu0 0
        %1952 = vmatprep.subr.bf16.mxu0 0
        %1953 = vmatpush1.bf16.xpose.msra.mxu0 0
        %1954 = vmatprep.subr.bf16.mxu0 0
        %1955 = vmatpush1.bf16.xpose.msra.mxu0 0
        %1956 = vmatprep.subr.bf16.mxu0 0
        %1957 = vmatpush1.bf16.xpose.msra.mxu0 0
        %1958 = vmatprep.subr.bf16.mxu0 0
        %1959 = vmatpush1.bf16.xpose.msra.mxu0 0
        %1960 = vmatprep.subr.bf16.mxu0 0
        %1961 = vmatpush1.bf16.xpose.msra.mxu0 0
        %1962 = vmatprep.mubr.bf16.mxu0 0
        %1963 = vmatmul.mubr.bf16.gmra.mrb[0].mxu0 %v1925
        %v1964 = vpop.f32.mrb[0].mxu0
        %v1965 = vadd.f32 0.0, %v1964
        %v1966 = vpop.f32.mrb[0].mxu0
        %v1967 = vpop.f32.mrb[0].mxu0
        %v1968 = vpop.f32.mrb[0].mxu0
        %1969 = vdwg.mxu0
        %v1971 = vsel %vm1555, %v1475, 0
        %v1974 = vsel %vm1555, %v1503, 0
        %1976 = vmatprep.subr.bf16.mxu0 0
        %1977 = vmatpush1.bf16.xpose.msra.mxu0 %v1974
        %1978 = vmatprep.subr.bf16.mxu0 0
        %1979 = vmatpush1.bf16.xpose.msra.mxu0 0
        %1980 = vmatprep.subr.bf16.mxu0 0
        %1981 = vmatpush1.bf16.xpose.msra.mxu0 0
        %1982 = vmatprep.subr.bf16.mxu0 0
        %1983 = vmatpush1.bf16.xpose.msra.mxu0 0
        %1984 = vmatprep.subr.bf16.mxu0 0
        %1985 = vmatpush1.bf16.xpose.msra.mxu0 0
        %1986 = vmatprep.subr.bf16.mxu0 0
        %1987 = vmatpush1.bf16.xpose.msra.mxu0 0
        %1988 = vmatprep.subr.bf16.mxu0 0
        %1989 = vmatpush1.bf16.xpose.msra.mxu0 0
        %1990 = vmatprep.subr.bf16.mxu0 0
        %1991 = vmatpush1.bf16.xpose.msra.mxu0 0
        %1992 = vmatprep.subr.bf16.mxu0 0
        %1993 = vmatpush1.bf16.xpose.msra.mxu0 0
        %1994 = vmatprep.subr.bf16.mxu0 0
        %1995 = vmatpush1.bf16.xpose.msra.mxu0 0
        %1996 = vmatprep.subr.bf16.mxu0 0
        %1997 = vmatpush1.bf16.xpose.msra.mxu0 0
        %1998 = vmatprep.subr.bf16.mxu0 0
        %1999 = vmatpush1.bf16.xpose.msra.mxu0 0
        %2000 = vmatprep.subr.bf16.mxu0 0
        %2001 = vmatpush1.bf16.xpose.msra.mxu0 0
        %2002 = vmatprep.subr.bf16.mxu0 0
        %2003 = vmatpush1.bf16.xpose.msra.mxu0 0
        %2004 = vmatprep.subr.bf16.mxu0 0
        %2005 = vmatpush1.bf16.xpose.msra.mxu0 0
        %2006 = vmatprep.subr.bf16.mxu0 0
        %2007 = vmatpush1.bf16.xpose.msra.mxu0 0
        %2008 = vmatprep.mubr.bf16.mxu0 0
        %2009 = vmatmul.mubr.bf16.gmra.mrb[0].mxu0 %v1971
        %v2010 = vpop.f32.mrb[0].mxu0
        %v2011 = vadd.f32 0.0, %v2010
        %v2012 = vpop.f32.mrb[0].mxu0
        %v2013 = vpop.f32.mrb[0].mxu0
        %v2014 = vpop.f32.mrb[0].mxu0
        %2015 = vdwg.mxu0
        %v2017 = vsel %vm1555, %v1477, 0
        %v2020 = vsel %vm1555, %v1505, 0
        %2022 = vmatprep.subr.bf16.mxu0 0
        %2023 = vmatpush1.bf16.xpose.msra.mxu0 %v2020
        %2024 = vmatprep.subr.bf16.mxu0 0
        %2025 = vmatpush1.bf16.xpose.msra.mxu0 0
        %2026 = vmatprep.subr.bf16.mxu0 0
        %2027 = vmatpush1.bf16.xpose.msra.mxu0 0
        %2028 = vmatprep.subr.bf16.mxu0 0
        %2029 = vmatpush1.bf16.xpose.msra.mxu0 0
        %2030 = vmatprep.subr.bf16.mxu0 0
        %2031 = vmatpush1.bf16.xpose.msra.mxu0 0
        %2032 = vmatprep.subr.bf16.mxu0 0
        %2033 = vmatpush1.bf16.xpose.msra.mxu0 0
        %2034 = vmatprep.subr.bf16.mxu0 0
        %2035 = vmatpush1.bf16.xpose.msra.mxu0 0
        %2036 = vmatprep.subr.bf16.mxu0 0
        %2037 = vmatpush1.bf16.xpose.msra.mxu0 0
        %2038 = vmatprep.subr.bf16.mxu0 0
        %2039 = vmatpush1.bf16.xpose.msra.mxu0 0
        %2040 = vmatprep.subr.bf16.mxu0 0
        %2041 = vmatpush1.bf16.xpose.msra.mxu0 0
        %2042 = vmatprep.subr.bf16.mxu0 0
        %2043 = vmatpush1.bf16.xpose.msra.mxu0 0
        %2044 = vmatprep.subr.bf16.mxu0 0
        %2045 = vmatpush1.bf16.xpose.msra.mxu0 0
        %2046 = vmatprep.subr.bf16.mxu0 0
        %2047 = vmatpush1.bf16.xpose.msra.mxu0 0
        %2048 = vmatprep.subr.bf16.mxu0 0
        %2049 = vmatpush1.bf16.xpose.msra.mxu0 0
        %2050 = vmatprep.subr.bf16.mxu0 0
        %2051 = vmatpush1.bf16.xpose.msra.mxu0 0
        %2052 = vmatprep.subr.bf16.mxu0 0
        %2053 = vmatpush1.bf16.xpose.msra.mxu0 0
        %2054 = vmatprep.mubr.bf16.mxu0 0
        %2055 = vmatmul.mubr.bf16.gmra.mrb[0].mxu0 %v2017
        %v2056 = vpop.f32.mrb[0].mxu0
        %v2057 = vadd.f32 0.0, %v2056
        %v2058 = vpop.f32.mrb[0].mxu0
        %v2059 = vpop.f32.mrb[0].mxu0
        %v2060 = vpop.f32.mrb[0].mxu0
        %2061 = vdwg.mxu0
        %v2063 = vsel %vm1555, %v1479, 0
        %v2066 = vsel %vm1555, %v1507, 0
        %2068 = vmatprep.subr.bf16.mxu0 0
        %2069 = vmatpush1.bf16.xpose.msra.mxu0 %v2066
        %2070 = vmatprep.subr.bf16.mxu0 0
        %2071 = vmatpush1.bf16.xpose.msra.mxu0 0
        %2072 = vmatprep.subr.bf16.mxu0 0
        %2073 = vmatpush1.bf16.xpose.msra.mxu0 0
        %2074 = vmatprep.subr.bf16.mxu0 0
        %2075 = vmatpush1.bf16.xpose.msra.mxu0 0
        %2076 = vmatprep.subr.bf16.mxu0 0
        %2077 = vmatpush1.bf16.xpose.msra.mxu0 0
        %2078 = vmatprep.subr.bf16.mxu0 0
        %2079 = vmatpush1.bf16.xpose.msra.mxu0 0
        %2080 = vmatprep.subr.bf16.mxu0 0
        %2081 = vmatpush1.bf16.xpose.msra.mxu0 0
        %2082 = vmatprep.subr.bf16.mxu0 0
        %2083 = vmatpush1.bf16.xpose.msra.mxu0 0
        %2084 = vmatprep.subr.bf16.mxu0 0
        %2085 = vmatpush1.bf16.xpose.msra.mxu0 0
        %2086 = vmatprep.subr.bf16.mxu0 0
        %2087 = vmatpush1.bf16.xpose.msra.mxu0 0
        %2088 = vmatprep.subr.bf16.mxu0 0
        %2089 = vmatpush1.bf16.xpose.msra.mxu0 0
        %2090 = vmatprep.subr.bf16.mxu0 0
        %2091 = vmatpush1.bf16.xpose.msra.mxu0 0
        %2092 = vmatprep.subr.bf16.mxu0 0
        %2093 = vmatpush1.bf16.xpose.msra.mxu0 0
        %2094 = vmatprep.subr.bf16.mxu0 0
        %2095 = vmatpush1.bf16.xpose.msra.mxu0 0
        %2096 = vmatprep.subr.bf16.mxu0 0
        %2097 = vmatpush1.bf16.xpose.msra.mxu0 0
        %2098 = vmatprep.subr.bf16.mxu0 0
        %2099 = vmatpush1.bf16.xpose.msra.mxu0 0
        %2100 = vmatprep.mubr.bf16.mxu0 0
        %2101 = vmatmul.mubr.bf16.gmra.mrb[0].mxu0 %v2063
        %v2102 = vpop.f32.mrb[0].mxu0
        %v2103 = vadd.f32 0.0, %v2102
        %v2104 = vpop.f32.mrb[0].mxu0
        %v2105 = vpop.f32.mrb[0].mxu0
        %v2106 = vpop.f32.mrb[0].mxu0
        %2107 = vdwg.mxu0
        %v2109 = vsel %vm1555, %v1480, 0
        %v2112 = vsel %vm1555, %v1454, 0
        %2114 = vmatprep.subr.bf16.mxu0 0
        %2115 = vmatpush1.bf16.xpose.msra.mxu0 %v2112
        %2116 = vmatprep.subr.bf16.mxu0 0
        %2117 = vmatpush1.bf16.xpose.msra.mxu0 0
        %2118 = vmatprep.subr.bf16.mxu0 0
        %2119 = vmatpush1.bf16.xpose.msra.mxu0 0
        %2120 = vmatprep.subr.bf16.mxu0 0
        %2121 = vmatpush1.bf16.xpose.msra.mxu0 0
        %2122 = vmatprep.subr.bf16.mxu0 0
        %2123 = vmatpush1.bf16.xpose.msra.mxu0 0
        %2124 = vmatprep.subr.bf16.mxu0 0
        %2125 = vmatpush1.bf16.xpose.msra.mxu0 0
        %2126 = vmatprep.subr.bf16.mxu0 0
        %2127 = vmatpush1.bf16.xpose.msra.mxu0 0
        %2128 = vmatprep.subr.bf16.mxu0 0
        %2129 = vmatpush1.bf16.xpose.msra.mxu0 0
        %2130 = vmatprep.subr.bf16.mxu0 0
        %2131 = vmatpush1.bf16.xpose.msra.mxu0 0
        %2132 = vmatprep.subr.bf16.mxu0 0
        %2133 = vmatpush1.bf16.xpose.msra.mxu0 0
        %2134 = vmatprep.subr.bf16.mxu0 0
        %2135 = vmatpush1.bf16.xpose.msra.mxu0 0
        %2136 = vmatprep.subr.bf16.mxu0 0
        %2137 = vmatpush1.bf16.xpose.msra.mxu0 0
        %2138 = vmatprep.subr.bf16.mxu0 0
        %2139 = vmatpush1.bf16.xpose.msra.mxu0 0
        %2140 = vmatprep.subr.bf16.mxu0 0
        %2141 = vmatpush1.bf16.xpose.msra.mxu0 0
        %2142 = vmatprep.subr.bf16.mxu0 0
        %2143 = vmatpush1.bf16.xpose.msra.mxu0 0
        %2144 = vmatprep.subr.bf16.mxu0 0
        %2145 = vmatpush1.bf16.xpose.msra.mxu0 0
        %2146 = vmatprep.mubr.bf16.mxu0 0
        %2147 = vmatmul.mubr.bf16.gmra.mrb[0].mxu0 %v2109
        %v2148 = vpop.f32.mrb[0].mxu0
        %v2149 = vadd.f32 0.0, %v2148
        %v2150 = vpop.f32.mrb[0].mxu0
        %v2151 = vpop.f32.mrb[0].mxu0
        %v2152 = vpop.f32.mrb[0].mxu0
        %2153 = vdwg.mxu0
        %v2155 = vsel %vm1555, %v1482, 0
        %v2158 = vsel %vm1555, %v1510, 0
        %2160 = vmatprep.subr.bf16.mxu0 0
        %2161 = vmatpush1.bf16.xpose.msra.mxu0 %v2158
        %2162 = vmatprep.subr.bf16.mxu0 0
        %2163 = vmatpush1.bf16.xpose.msra.mxu0 0
        %2164 = vmatprep.subr.bf16.mxu0 0
        %2165 = vmatpush1.bf16.xpose.msra.mxu0 0
        %2166 = vmatprep.subr.bf16.mxu0 0
        %2167 = vmatpush1.bf16.xpose.msra.mxu0 0
        %2168 = vmatprep.subr.bf16.mxu0 0
        %2169 = vmatpush1.bf16.xpose.msra.mxu0 0
        %2170 = vmatprep.subr.bf16.mxu0 0
        %2171 = vmatpush1.bf16.xpose.msra.mxu0 0
        %2172 = vmatprep.subr.bf16.mxu0 0
        %2173 = vmatpush1.bf16.xpose.msra.mxu0 0
        %2174 = vmatprep.subr.bf16.mxu0 0
        %2175 = vmatpush1.bf16.xpose.msra.mxu0 0
        %2176 = vmatprep.subr.bf16.mxu0 0
        %2177 = vmatpush1.bf16.xpose.msra.mxu0 0
        %2178 = vmatprep.subr.bf16.mxu0 0
        %2179 = vmatpush1.bf16.xpose.msra.mxu0 0
        %2180 = vmatprep.subr.bf16.mxu0 0
        %2181 = vmatpush1.bf16.xpose.msra.mxu0 0
        %2182 = vmatprep.subr.bf16.mxu0 0
        %2183 = vmatpush1.bf16.xpose.msra.mxu0 0
        %2184 = vmatprep.subr.bf16.mxu0 0
        %2185 = vmatpush1.bf16.xpose.msra.mxu0 0
        %2186 = vmatprep.subr.bf16.mxu0 0
        %2187 = vmatpush1.bf16.xpose.msra.mxu0 0
        %2188 = vmatprep.subr.bf16.mxu0 0
        %2189 = vmatpush1.bf16.xpose.msra.mxu0 0
        %2190 = vmatprep.subr.bf16.mxu0 0
        %2191 = vmatpush1.bf16.xpose.msra.mxu0 0
        %2192 = vmatprep.mubr.bf16.mxu0 0
        %2193 = vmatmul.mubr.bf16.gmra.mrb[0].mxu0 %v2155
        %v2194 = vpop.f32.mrb[0].mxu0
        %v2195 = vadd.f32 0.0, %v2194
        %v2196 = vpop.f32.mrb[0].mxu0
        %v2197 = vpop.f32.mrb[0].mxu0
        %v2198 = vpop.f32.mrb[0].mxu0
        %2199 = vdwg.mxu0
        %v2201 = vsel %vm1555, %v1484, 0
        %v2204 = vsel %vm1555, %v1512, 0
        %2206 = vmatprep.subr.bf16.mxu0 0
        %2207 = vmatpush1.bf16.xpose.msra.mxu0 %v2204
        %2208 = vmatprep.subr.bf16.mxu0 0
        %2209 = vmatpush1.bf16.xpose.msra.mxu0 0
        %2210 = vmatprep.subr.bf16.mxu0 0
        %2211 = vmatpush1.bf16.xpose.msra.mxu0 0
        %2212 = vmatprep.subr.bf16.mxu0 0
        %2213 = vmatpush1.bf16.xpose.msra.mxu0 0
        %2214 = vmatprep.subr.bf16.mxu0 0
        %2215 = vmatpush1.bf16.xpose.msra.mxu0 0
        %2216 = vmatprep.subr.bf16.mxu0 0
        %2217 = vmatpush1.bf16.xpose.msra.mxu0 0
        %2218 = vmatprep.subr.bf16.mxu0 0
        %2219 = vmatpush1.bf16.xpose.msra.mxu0 0
        %2220 = vmatprep.subr.bf16.mxu0 0
        %2221 = vmatpush1.bf16.xpose.msra.mxu0 0
        %2222 = vmatprep.subr.bf16.mxu0 0
        %2223 = vmatpush1.bf16.xpose.msra.mxu0 0
        %2224 = vmatprep.subr.bf16.mxu0 0
        %2225 = vmatpush1.bf16.xpose.msra.mxu0 0
        %2226 = vmatprep.subr.bf16.mxu0 0
        %2227 = vmatpush1.bf16.xpose.msra.mxu0 0
        %2228 = vmatprep.subr.bf16.mxu0 0
        %2229 = vmatpush1.bf16.xpose.msra.mxu0 0
        %2230 = vmatprep.subr.bf16.mxu0 0
        %2231 = vmatpush1.bf16.xpose.msra.mxu0 0
        %2232 = vmatprep.subr.bf16.mxu0 0
        %2233 = vmatpush1.bf16.xpose.msra.mxu0 0
        %2234 = vmatprep.subr.bf16.mxu0 0
        %2235 = vmatpush1.bf16.xpose.msra.mxu0 0
        %2236 = vmatprep.subr.bf16.mxu0 0
        %2237 = vmatpush1.bf16.xpose.msra.mxu0 0
        %2238 = vmatprep.mubr.bf16.mxu0 0
        %2239 = vmatmul.mubr.bf16.gmra.mrb[0].mxu0 %v2201
        %v2240 = vpop.f32.mrb[0].mxu0
        %v2241 = vadd.f32 0.0, %v2240
        %v2242 = vpop.f32.mrb[0].mxu0
        %v2243 = vpop.f32.mrb[0].mxu0
        %v2244 = vpop.f32.mrb[0].mxu0
        %2245 = vdwg.mxu0
        %v2247 = vsel %vm1555, %v1486, 0
        %v2250 = vsel %vm1555, %v1514, 0
        %2252 = vmatprep.subr.bf16.mxu0 0
        %2253 = vmatpush1.bf16.xpose.msra.mxu0 %v2250
        %2254 = vmatprep.subr.bf16.mxu0 0
        %2255 = vmatpush1.bf16.xpose.msra.mxu0 0
        %2256 = vmatprep.subr.bf16.mxu0 0
        %2257 = vmatpush1.bf16.xpose.msra.mxu0 0
        %2258 = vmatprep.subr.bf16.mxu0 0
        %2259 = vmatpush1.bf16.xpose.msra.mxu0 0
        %2260 = vmatprep.subr.bf16.mxu0 0
        %2261 = vmatpush1.bf16.xpose.msra.mxu0 0
        %2262 = vmatprep.subr.bf16.mxu0 0
        %2263 = vmatpush1.bf16.xpose.msra.mxu0 0
        %2264 = vmatprep.subr.bf16.mxu0 0
        %2265 = vmatpush1.bf16.xpose.msra.mxu0 0
        %2266 = vmatprep.subr.bf16.mxu0 0
        %2267 = vmatpush1.bf16.xpose.msra.mxu0 0
        %2268 = vmatprep.subr.bf16.mxu0 0
        %2269 = vmatpush1.bf16.xpose.msra.mxu0 0
        %2270 = vmatprep.subr.bf16.mxu0 0
        %2271 = vmatpush1.bf16.xpose.msra.mxu0 0
        %2272 = vmatprep.subr.bf16.mxu0 0
        %2273 = vmatpush1.bf16.xpose.msra.mxu0 0
        %2274 = vmatprep.subr.bf16.mxu0 0
        %2275 = vmatpush1.bf16.xpose.msra.mxu0 0
        %2276 = vmatprep.subr.bf16.mxu0 0
        %2277 = vmatpush1.bf16.xpose.msra.mxu0 0
        %2278 = vmatprep.subr.bf16.mxu0 0
        %2279 = vmatpush1.bf16.xpose.msra.mxu0 0
        %2280 = vmatprep.subr.bf16.mxu0 0
        %2281 = vmatpush1.bf16.xpose.msra.mxu0 0
        %2282 = vmatprep.subr.bf16.mxu0 0
        %2283 = vmatpush1.bf16.xpose.msra.mxu0 0
        %2284 = vmatprep.mubr.bf16.mxu0 0
        %2285 = vmatmul.mubr.bf16.gmra.mrb[0].mxu0 %v2247
        %v2286 = vpop.f32.mrb[0].mxu0
        %v2287 = vadd.f32 0.0, %v2286
        %v2288 = vpop.f32.mrb[0].mxu0
        %v2289 = vpop.f32.mrb[0].mxu0
        %v2290 = vpop.f32.mrb[0].mxu0
        %2291 = vdwg.mxu0
        %vm2292 = vcmask 130048
        %v2293 = vsel %vm2292, %v1597, -inf
        %2294 = vmax.xlane.f32.xlu0 %v2293
        %v2295 = vpop.xlane.xlu0 %2294
        %v2296 = vsel %vm2292, %v1643, -inf
        %2297 = vmax.xlane.f32.xlu0 %v2296
        %v2298 = vpop.xlane.xlu0 %2297
        %v2299 = vsel %vm2292, %v1689, -inf
        %2300 = vmax.xlane.f32.xlu0 %v2299
        %v2301 = vpop.xlane.xlu0 %2300
        %v2302 = vsel %vm2292, %v1735, -inf
        %2303 = vmax.xlane.f32.xlu0 %v2302
        %v2304 = vpop.xlane.xlu0 %2303
        %v2305 = vsel %vm2292, %v1781, -inf
        %2306 = vmax.xlane.f32.xlu0 %v2305
        %v2307 = vpop.xlane.xlu0 %2306
        %v2308 = vsel %vm2292, %v1827, -inf
        %2309 = vmax.xlane.f32.xlu0 %v2308
        %v2310 = vpop.xlane.xlu0 %2309
        %v2311 = vsel %vm2292, %v1873, -inf
        %2312 = vmax.xlane.f32.xlu0 %v2311
        %v2313 = vpop.xlane.xlu0 %2312
        %v2314 = vsel %vm2292, %v1919, -inf
        %2315 = vmax.xlane.f32.xlu0 %v2314
        %v2316 = vpop.xlane.xlu0 %2315
        %v2317 = vsel %vm2292, %v1965, -inf
        %2318 = vmax.xlane.f32.xlu0 %v2317
        %v2319 = vpop.xlane.xlu0 %2318
        %v2320 = vsel %vm2292, %v2011, -inf
        %2321 = vmax.xlane.f32.xlu0 %v2320
        %v2322 = vpop.xlane.xlu0 %2321
        %v2323 = vsel %vm2292, %v2057, -inf
        %2324 = vmax.xlane.f32.xlu0 %v2323
        %v2325 = vpop.xlane.xlu0 %2324
        %v2326 = vsel %vm2292, %v2103, -inf
        %2327 = vmax.xlane.f32.xlu0 %v2326
        %v2328 = vpop.xlane.xlu0 %2327
        %v2329 = vsel %vm2292, %v2149, -inf
        %2330 = vmax.xlane.f32.xlu0 %v2329
        %v2331 = vpop.xlane.xlu0 %2330
        %v2332 = vsel %vm2292, %v2195, -inf
        %2333 = vmax.xlane.f32.xlu0 %v2332
        %v2334 = vpop.xlane.xlu0 %2333
        %v2335 = vsel %vm2292, %v2241, -inf
        %2336 = vmax.xlane.f32.xlu0 %v2335
        %v2337 = vpop.xlane.xlu0 %2336
        %v2338 = vsel %vm2292, %v2287, -inf
        %2339 = vmax.xlane.f32.xlu0 %v2338
        %v2340 = vpop.xlane.xlu0 %2339
        %v2341 = vsub.f32 %v1597, %v2295
        %v2342 = vsub.f32 %v1643, %v2298
        %v2343 = vsub.f32 %v1689, %v2301
        %v2344 = vsub.f32 %v1735, %v2304
        %v2345 = vsub.f32 %v1781, %v2307
        %v2346 = vsub.f32 %v1827, %v2310
        %v2347 = vsub.f32 %v1873, %v2313
        %v2348 = vsub.f32 %v1919, %v2316
        %v2349 = vsub.f32 %v1965, %v2319
        %v2350 = vsub.f32 %v2011, %v2322
        %v2351 = vsub.f32 %v2057, %v2325
        %v2352 = vsub.f32 %v2103, %v2328
        %v2353 = vsub.f32 %v2149, %v2331
        %v2354 = vsub.f32 %v2195, %v2334
        %v2355 = vsub.f32 %v2241, %v2337
        %v2356 = vsub.f32 %v2287, %v2340
        %v2357 = vmul.f32 %v2341, 1.442695
        %v2358 = vpow.pop %v2357
        %v2359 = vmul.f32 %v2342, 1.442695
        %v2360 = vpow.pop %v2359
        %v2361 = vmul.f32 %v2343, 1.442695
        %v2362 = vpow.pop %v2361
        %v2363 = vmul.f32 %v2344, 1.442695
        %v2364 = vpow.pop %v2363
        %v2365 = vmul.f32 %v2345, 1.442695
        %v2366 = vpow.pop %v2365
        %v2367 = vmul.f32 %v2346, 1.442695
        %v2368 = vpow.pop %v2367
        %v2369 = vmul.f32 %v2347, 1.442695
        %v2370 = vpow.pop %v2369
        %v2371 = vmul.f32 %v2348, 1.442695
        %v2372 = vpow.pop %v2371
        %v2373 = vmul.f32 %v2349, 1.442695
        %v2374 = vpow.pop %v2373
        %v2375 = vmul.f32 %v2350, 1.442695
        %v2376 = vpow.pop %v2375
        %v2377 = vmul.f32 %v2351, 1.442695
        %v2378 = vpow.pop %v2377
        %v2379 = vmul.f32 %v2352, 1.442695
        %v2380 = vpow.pop %v2379
        %v2381 = vmul.f32 %v2353, 1.442695
        %v2382 = vpow.pop %v2381
        %v2383 = vmul.f32 %v2354, 1.442695
        %v2384 = vpow.pop %v2383
        %v2385 = vmul.f32 %v2355, 1.442695
        %v2386 = vpow.pop %v2385
        %v2387 = vmul.f32 %v2356, 1.442695
        %v2388 = vpow.pop %v2387
        %v2389 = vsel %vm2292, %v2358, 0.0
        %2390 = vadd.xlane.f32.xlu0 %v2389
        %v2391 = vpop.xlane.xlu0 %2390
        %v2392 = vsel %vm2292, %v2360, 0.0
        %2393 = vadd.xlane.f32.xlu0 %v2392
        %v2394 = vpop.xlane.xlu0 %2393
        %v2395 = vsel %vm2292, %v2362, 0.0
        %2396 = vadd.xlane.f32.xlu0 %v2395
        %v2397 = vpop.xlane.xlu0 %2396
        %v2398 = vsel %vm2292, %v2364, 0.0
        %2399 = vadd.xlane.f32.xlu0 %v2398
        %v2400 = vpop.xlane.xlu0 %2399
        %v2401 = vsel %vm2292, %v2366, 0.0
        %2402 = vadd.xlane.f32.xlu0 %v2401
        %v2403 = vpop.xlane.xlu0 %2402
        %v2404 = vsel %vm2292, %v2368, 0.0
        %2405 = vadd.xlane.f32.xlu0 %v2404
        %v2406 = vpop.xlane.xlu0 %2405
        %v2407 = vsel %vm2292, %v2370, 0.0
        %2408 = vadd.xlane.f32.xlu0 %v2407
        %v2409 = vpop.xlane.xlu0 %2408
        %v2410 = vsel %vm2292, %v2372, 0.0
        %2411 = vadd.xlane.f32.xlu0 %v2410
        %v2412 = vpop.xlane.xlu0 %2411
        %v2413 = vsel %vm2292, %v2374, 0.0
        %2414 = vadd.xlane.f32.xlu0 %v2413
        %v2415 = vpop.xlane.xlu0 %2414
        %v2416 = vsel %vm2292, %v2376, 0.0
        %2417 = vadd.xlane.f32.xlu0 %v2416
        %v2418 = vpop.xlane.xlu0 %2417
        %v2419 = vsel %vm2292, %v2378, 0.0
        %2420 = vadd.xlane.f32.xlu0 %v2419
        %v2421 = vpop.xlane.xlu0 %2420
        %v2422 = vsel %vm2292, %v2380, 0.0
        %2423 = vadd.xlane.f32.xlu0 %v2422
        %v2424 = vpop.xlane.xlu0 %2423
        %v2425 = vsel %vm2292, %v2382, 0.0
        %2426 = vadd.xlane.f32.xlu0 %v2425
        %v2427 = vpop.xlane.xlu0 %2426
        %v2428 = vsel %vm2292, %v2384, 0.0
        %2429 = vadd.xlane.f32.xlu0 %v2428
        %v2430 = vpop.xlane.xlu0 %2429
        %v2431 = vsel %vm2292, %v2386, 0.0
        %2432 = vadd.xlane.f32.xlu0 %v2431
        %v2433 = vpop.xlane.xlu0 %2432
        %v2434 = vsel %vm2292, %v2388, 0.0
        %2435 = vadd.xlane.f32.xlu0 %v2434
        %v2436 = vpop.xlane.xlu0 %2435
        %v2437 = vrcp.pop %v2391
        %v2438 = vrcp.pop %v2394
        %v2439 = vrcp.pop %v2397
        %v2440 = vrcp.pop %v2400
        %v2441 = vrcp.pop %v2403
        %v2442 = vrcp.pop %v2406
        %v2443 = vrcp.pop %v2409
        %v2444 = vrcp.pop %v2412
        %v2445 = vrcp.pop %v2415
        %v2446 = vrcp.pop %v2418
        %v2447 = vrcp.pop %v2421
        %v2448 = vrcp.pop %v2424
        %v2449 = vrcp.pop %v2427
        %v2450 = vrcp.pop %v2430
        %v2451 = vrcp.pop %v2433
        %v2452 = vrcp.pop %v2436
        %v2453 = vmul.f32 %v2358, %v2437
        %v2454 = vmul.f32 %v2360, %v2438
        %v2455 = vmul.f32 %v2362, %v2439
        %v2456 = vmul.f32 %v2364, %v2440
        %v2457 = vmul.f32 %v2366, %v2441
        %v2458 = vmul.f32 %v2368, %v2442
        %v2459 = vmul.f32 %v2370, %v2443
        %v2460 = vmul.f32 %v2372, %v2444
        %v2461 = vmul.f32 %v2374, %v2445
        %v2462 = vmul.f32 %v2376, %v2446
        %v2463 = vmul.f32 %v2378, %v2447
        %v2464 = vmul.f32 %v2380, %v2448
        %v2465 = vmul.f32 %v2382, %v2449
        %v2466 = vmul.f32 %v2384, %v2450
        %v2467 = vmul.f32 %v2386, %v2451
        %v2468 = vmul.f32 %v2388, %v2452
        %v2469 = vpack.c.bf16 %v2453, %v2453
        %v2470 = vpack.c.bf16 %v2454, %v2454
        %v2471 = vpack.c.bf16 %v2455, %v2455
        %v2472 = vpack.c.bf16 %v2456, %v2456
        %v2473 = vpack.c.bf16 %v2457, %v2457
        %v2474 = vpack.c.bf16 %v2458, %v2458
        %v2475 = vpack.c.bf16 %v2459, %v2459
        %v2476 = vpack.c.bf16 %v2460, %v2460
        %v2477 = vpack.c.bf16 %v2461, %v2461
        %v2478 = vpack.c.bf16 %v2462, %v2462
        %v2479 = vpack.c.bf16 %v2463, %v2463
        %v2480 = vpack.c.bf16 %v2464, %v2464
        %v2481 = vpack.c.bf16 %v2465, %v2465
        %v2482 = vpack.c.bf16 %v2466, %v2466
        %v2483 = vpack.c.bf16 %v2467, %v2467
        %v2484 = vpack.c.bf16 %v2468, %v2468
        %v2486 = vsel %vm2292, %v2469, 0
        %2488 = vmatprep.subr.bf16.mxu0 0
        %2489 = vmatpush1.bf16.msra.mxu0 %v1455
        %2490 = vmatprep.subr.bf16.mxu0 0
        %2491 = vmatpush1.bf16.msra.mxu0 0
        %2492 = vmatprep.subr.bf16.mxu0 0
        %2493 = vmatpush1.bf16.msra.mxu0 0
        %2494 = vmatprep.subr.bf16.mxu0 0
        %2495 = vmatpush1.bf16.msra.mxu0 0
        %2496 = vmatprep.subr.bf16.mxu0 0
        %2497 = vmatpush1.bf16.msra.mxu0 0
        %2498 = vmatprep.subr.bf16.mxu0 0
        %2499 = vmatpush1.bf16.msra.mxu0 0
        %2500 = vmatprep.subr.bf16.mxu0 0
        %2501 = vmatpush1.bf16.msra.mxu0 0
        %2502 = vmatprep.subr.bf16.mxu0 0
        %2503 = vmatpush1.bf16.msra.mxu0 0
        %2504 = vmatprep.subr.bf16.mxu0 0
        %2505 = vmatpush1.bf16.msra.mxu0 0
        %2506 = vmatprep.subr.bf16.mxu0 0
        %2507 = vmatpush1.bf16.msra.mxu0 0
        %2508 = vmatprep.subr.bf16.mxu0 0
        %2509 = vmatpush1.bf16.msra.mxu0 0
        %2510 = vmatprep.subr.bf16.mxu0 0
        %2511 = vmatpush1.bf16.msra.mxu0 0
        %2512 = vmatprep.subr.bf16.mxu0 0
        %2513 = vmatpush1.bf16.msra.mxu0 0
        %2514 = vmatprep.subr.bf16.mxu0 0
        %2515 = vmatpush1.bf16.msra.mxu0 0
        %2516 = vmatprep.subr.bf16.mxu0 0
        %2517 = vmatpush1.bf16.msra.mxu0 0
        %2518 = vmatprep.subr.bf16.mxu0 0
        %2519 = vmatpush1.bf16.msra.mxu0 0
        %2520 = vmatprep.mubr.bf16.mxu0 0
        %2521 = vmatmul.mubr.bf16.gmra.mrb[0].mxu0 %v2486
        %v2522 = vpop.f32.mrb[0].mxu0
        %v2523 = vadd.f32 0.0, %v2522
        %v2524 = vpop.f32.mrb[0].mxu0
        %v2525 = vpop.f32.mrb[0].mxu0
        %v2526 = vpop.f32.mrb[0].mxu0
        %2527 = vdwg.mxu0
        %v2529 = vsel %vm2292, %v2470, 0
        %2531 = vmatprep.subr.bf16.mxu0 0
        %2532 = vmatpush1.bf16.msra.mxu0 %v1517
        %2533 = vmatprep.subr.bf16.mxu0 0
        %2534 = vmatpush1.bf16.msra.mxu0 0
        %2535 = vmatprep.subr.bf16.mxu0 0
        %2536 = vmatpush1.bf16.msra.mxu0 0
        %2537 = vmatprep.subr.bf16.mxu0 0
        %2538 = vmatpush1.bf16.msra.mxu0 0
        %2539 = vmatprep.subr.bf16.mxu0 0
        %2540 = vmatpush1.bf16.msra.mxu0 0
        %2541 = vmatprep.subr.bf16.mxu0 0
        %2542 = vmatpush1.bf16.msra.mxu0 0
        %2543 = vmatprep.subr.bf16.mxu0 0
        %2544 = vmatpush1.bf16.msra.mxu0 0
        %2545 = vmatprep.subr.bf16.mxu0 0
        %2546 = vmatpush1.bf16.msra.mxu0 0
        %2547 = vmatprep.subr.bf16.mxu0 0
        %2548 = vmatpush1.bf16.msra.mxu0 0
        %2549 = vmatprep.subr.bf16.mxu0 0
        %2550 = vmatpush1.bf16.msra.mxu0 0
        %2551 = vmatprep.subr.bf16.mxu0 0
        %2552 = vmatpush1.bf16.msra.mxu0 0
        %2553 = vmatprep.subr.bf16.mxu0 0
        %2554 = vmatpush1.bf16.msra.mxu0 0
        %2555 = vmatprep.subr.bf16.mxu0 0
        %2556 = vmatpush1.bf16.msra.mxu0 0
        %2557 = vmatprep.subr.bf16.mxu0 0
        %2558 = vmatpush1.bf16.msra.mxu0 0
        %2559 = vmatprep.subr.bf16.mxu0 0
        %2560 = vmatpush1.bf16.msra.mxu0 0
        %2561 = vmatprep.subr.bf16.mxu0 0
        %2562 = vmatpush1.bf16.msra.mxu0 0
        %2563 = vmatprep.mubr.bf16.mxu0 0
        %2564 = vmatmul.mubr.bf16.gmra.mrb[0].mxu0 %v2529
        %v2565 = vpop.f32.mrb[0].mxu0
        %v2566 = vadd.f32 0.0, %v2565
        %v2567 = vpop.f32.mrb[0].mxu0
        %v2568 = vpop.f32.mrb[0].mxu0
        %v2569 = vpop.f32.mrb[0].mxu0
        %2570 = vdwg.mxu0
        %v2572 = vsel %vm2292, %v2471, 0
        %2574 = vmatprep.subr.bf16.mxu0 0
        %2575 = vmatpush1.bf16.msra.mxu0 %v1520
        %2576 = vmatprep.subr.bf16.mxu0 0
        %2577 = vmatpush1.bf16.msra.mxu0 0
        %2578 = vmatprep.subr.bf16.mxu0 0
        %2579 = vmatpush1.bf16.msra.mxu0 0
        %2580 = vmatprep.subr.bf16.mxu0 0
        %2581 = vmatpush1.bf16.msra.mxu0 0
        %2582 = vmatprep.subr.bf16.mxu0 0
        %2583 = vmatpush1.bf16.msra.mxu0 0
        %2584 = vmatprep.subr.bf16.mxu0 0
        %2585 = vmatpush1.bf16.msra.mxu0 0
        %2586 = vmatprep.subr.bf16.mxu0 0
        %2587 = vmatpush1.bf16.msra.mxu0 0
        %2588 = vmatprep.subr.bf16.mxu0 0
        %2589 = vmatpush1.bf16.msra.mxu0 0
        %2590 = vmatprep.subr.bf16.mxu0 0
        %2591 = vmatpush1.bf16.msra.mxu0 0
        %2592 = vmatprep.subr.bf16.mxu0 0
        %2593 = vmatpush1.bf16.msra.mxu0 0
        %2594 = vmatprep.subr.bf16.mxu0 0
        %2595 = vmatpush1.bf16.msra.mxu0 0
        %2596 = vmatprep.subr.bf16.mxu0 0
        %2597 = vmatpush1.bf16.msra.mxu0 0
        %2598 = vmatprep.subr.bf16.mxu0 0
        %2599 = vmatpush1.bf16.msra.mxu0 0
        %2600 = vmatprep.subr.bf16.mxu0 0
        %2601 = vmatpush1.bf16.msra.mxu0 0
        %2602 = vmatprep.subr.bf16.mxu0 0
        %2603 = vmatpush1.bf16.msra.mxu0 0
        %2604 = vmatprep.subr.bf16.mxu0 0
        %2605 = vmatpush1.bf16.msra.mxu0 0
        %2606 = vmatprep.mubr.bf16.mxu0 0
        %2607 = vmatmul.mubr.bf16.gmra.mrb[0].mxu0 %v2572
        %v2608 = vpop.f32.mrb[0].mxu0
        %v2609 = vadd.f32 0.0, %v2608
        %v2610 = vpop.f32.mrb[0].mxu0
        %v2611 = vpop.f32.mrb[0].mxu0
        %v2612 = vpop.f32.mrb[0].mxu0
        %2613 = vdwg.mxu0
        %v2615 = vsel %vm2292, %v2472, 0
        %2617 = vmatprep.subr.bf16.mxu0 0
        %2618 = vmatpush1.bf16.msra.mxu0 %v1523
        %2619 = vmatprep.subr.bf16.mxu0 0
        %2620 = vmatpush1.bf16.msra.mxu0 0
        %2621 = vmatprep.subr.bf16.mxu0 0
        %2622 = vmatpush1.bf16.msra.mxu0 0
        %2623 = vmatprep.subr.bf16.mxu0 0
        %2624 = vmatpush1.bf16.msra.mxu0 0
        %2625 = vmatprep.subr.bf16.mxu0 0
        %2626 = vmatpush1.bf16.msra.mxu0 0
        %2627 = vmatprep.subr.bf16.mxu0 0
        %2628 = vmatpush1.bf16.msra.mxu0 0
        %2629 = vmatprep.subr.bf16.mxu0 0
        %2630 = vmatpush1.bf16.msra.mxu0 0
        %2631 = vmatprep.subr.bf16.mxu0 0
        %2632 = vmatpush1.bf16.msra.mxu0 0
        %2633 = vmatprep.subr.bf16.mxu0 0
        %2634 = vmatpush1.bf16.msra.mxu0 0
        %2635 = vmatprep.subr.bf16.mxu0 0
        %2636 = vmatpush1.bf16.msra.mxu0 0
        %2637 = vmatprep.subr.bf16.mxu0 0
        %2638 = vmatpush1.bf16.msra.mxu0 0
        %2639 = vmatprep.subr.bf16.mxu0 0
        %2640 = vmatpush1.bf16.msra.mxu0 0
        %2641 = vmatprep.subr.bf16.mxu0 0
        %2642 = vmatpush1.bf16.msra.mxu0 0
        %2643 = vmatprep.subr.bf16.mxu0 0
        %2644 = vmatpush1.bf16.msra.mxu0 0
        %2645 = vmatprep.subr.bf16.mxu0 0
        %2646 = vmatpush1.bf16.msra.mxu0 0
        %2647 = vmatprep.subr.bf16.mxu0 0
        %2648 = vmatpush1.bf16.msra.mxu0 0
        %2649 = vmatprep.mubr.bf16.mxu0 0
        %2650 = vmatmul.mubr.bf16.gmra.mrb[0].mxu0 %v2615
        %v2651 = vpop.f32.mrb[0].mxu0
        %v2652 = vadd.f32 0.0, %v2651
        %v2653 = vpop.f32.mrb[0].mxu0
        %v2654 = vpop.f32.mrb[0].mxu0
        %v2655 = vpop.f32.mrb[0].mxu0
        %2656 = vdwg.mxu0
        %v2658 = vsel %vm2292, %v2473, 0
        %2660 = vmatprep.subr.bf16.mxu0 0
        %2661 = vmatpush1.bf16.msra.mxu0 %v1456
        %2662 = vmatprep.subr.bf16.mxu0 0
        %2663 = vmatpush1.bf16.msra.mxu0 0
        %2664 = vmatprep.subr.bf16.mxu0 0
        %2665 = vmatpush1.bf16.msra.mxu0 0
        %2666 = vmatprep.subr.bf16.mxu0 0
        %2667 = vmatpush1.bf16.msra.mxu0 0
        %2668 = vmatprep.subr.bf16.mxu0 0
        %2669 = vmatpush1.bf16.msra.mxu0 0
        %2670 = vmatprep.subr.bf16.mxu0 0
        %2671 = vmatpush1.bf16.msra.mxu0 0
        %2672 = vmatprep.subr.bf16.mxu0 0
        %2673 = vmatpush1.bf16.msra.mxu0 0
        %2674 = vmatprep.subr.bf16.mxu0 0
        %2675 = vmatpush1.bf16.msra.mxu0 0
        %2676 = vmatprep.subr.bf16.mxu0 0
        %2677 = vmatpush1.bf16.msra.mxu0 0
        %2678 = vmatprep.subr.bf16.mxu0 0
        %2679 = vmatpush1.bf16.msra.mxu0 0
        %2680 = vmatprep.subr.bf16.mxu0 0
        %2681 = vmatpush1.bf16.msra.mxu0 0
        %2682 = vmatprep.subr.bf16.mxu0 0
        %2683 = vmatpush1.bf16.msra.mxu0 0
        %2684 = vmatprep.subr.bf16.mxu0 0
        %2685 = vmatpush1.bf16.msra.mxu0 0
        %2686 = vmatprep.subr.bf16.mxu0 0
        %2687 = vmatpush1.bf16.msra.mxu0 0
        %2688 = vmatprep.subr.bf16.mxu0 0
        %2689 = vmatpush1.bf16.msra.mxu0 0
        %2690 = vmatprep.subr.bf16.mxu0 0
        %2691 = vmatpush1.bf16.msra.mxu0 0
        %2692 = vmatprep.mubr.bf16.mxu0 0
        %2693 = vmatmul.mubr.bf16.gmra.mrb[0].mxu0 %v2658
        %v2694 = vpop.f32.mrb[0].mxu0
        %v2695 = vadd.f32 0.0, %v2694
        %v2696 = vpop.f32.mrb[0].mxu0
        %v2697 = vpop.f32.mrb[0].mxu0
        %v2698 = vpop.f32.mrb[0].mxu0
        %2699 = vdwg.mxu0
        %v2701 = vsel %vm2292, %v2474, 0
        %2703 = vmatprep.subr.bf16.mxu0 0
        %2704 = vmatpush1.bf16.msra.mxu0 %v1527
        %2705 = vmatprep.subr.bf16.mxu0 0
        %2706 = vmatpush1.bf16.msra.mxu0 0
        %2707 = vmatprep.subr.bf16.mxu0 0
        %2708 = vmatpush1.bf16.msra.mxu0 0
        %2709 = vmatprep.subr.bf16.mxu0 0
        %2710 = vmatpush1.bf16.msra.mxu0 0
        %2711 = vmatprep.subr.bf16.mxu0 0
        %2712 = vmatpush1.bf16.msra.mxu0 0
        %2713 = vmatprep.subr.bf16.mxu0 0
        %2714 = vmatpush1.bf16.msra.mxu0 0
        %2715 = vmatprep.subr.bf16.mxu0 0
        %2716 = vmatpush1.bf16.msra.mxu0 0
        %2717 = vmatprep.subr.bf16.mxu0 0
        %2718 = vmatpush1.bf16.msra.mxu0 0
        %2719 = vmatprep.subr.bf16.mxu0 0
        %2720 = vmatpush1.bf16.msra.mxu0 0
        %2721 = vmatprep.subr.bf16.mxu0 0
        %2722 = vmatpush1.bf16.msra.mxu0 0
        %2723 = vmatprep.subr.bf16.mxu0 0
        %2724 = vmatpush1.bf16.msra.mxu0 0
        %2725 = vmatprep.subr.bf16.mxu0 0
        %2726 = vmatpush1.bf16.msra.mxu0 0
        %2727 = vmatprep.subr.bf16.mxu0 0
        %2728 = vmatpush1.bf16.msra.mxu0 0
        %2729 = vmatprep.subr.bf16.mxu0 0
        %2730 = vmatpush1.bf16.msra.mxu0 0
        %2731 = vmatprep.subr.bf16.mxu0 0
        %2732 = vmatpush1.bf16.msra.mxu0 0
        %2733 = vmatprep.subr.bf16.mxu0 0
        %2734 = vmatpush1.bf16.msra.mxu0 0
        %2735 = vmatprep.mubr.bf16.mxu0 0
        %2736 = vmatmul.mubr.bf16.gmra.mrb[0].mxu0 %v2701
        %v2737 = vpop.f32.mrb[0].mxu0
        %v2738 = vadd.f32 0.0, %v2737
        %v2739 = vpop.f32.mrb[0].mxu0
        %v2740 = vpop.f32.mrb[0].mxu0
        %v2741 = vpop.f32.mrb[0].mxu0
        %2742 = vdwg.mxu0
        %v2744 = vsel %vm2292, %v2475, 0
        %2746 = vmatprep.subr.bf16.mxu0 0
        %2747 = vmatpush1.bf16.msra.mxu0 %v1530
        %2748 = vmatprep.subr.bf16.mxu0 0
        %2749 = vmatpush1.bf16.msra.mxu0 0
        %2750 = vmatprep.subr.bf16.mxu0 0
        %2751 = vmatpush1.bf16.msra.mxu0 0
        %2752 = vmatprep.subr.bf16.mxu0 0
        %2753 = vmatpush1.bf16.msra.mxu0 0
        %2754 = vmatprep.subr.bf16.mxu0 0
        %2755 = vmatpush1.bf16.msra.mxu0 0
        %2756 = vmatprep.subr.bf16.mxu0 0
        %2757 = vmatpush1.bf16.msra.mxu0 0
        %2758 = vmatprep.subr.bf16.mxu0 0
        %2759 = vmatpush1.bf16.msra.mxu0 0
        %2760 = vmatprep.subr.bf16.mxu0 0
        %2761 = vmatpush1.bf16.msra.mxu0 0
        %2762 = vmatprep.subr.bf16.mxu0 0
        %2763 = vmatpush1.bf16.msra.mxu0 0
        %2764 = vmatprep.subr.bf16.mxu0 0
        %2765 = vmatpush1.bf16.msra.mxu0 0
        %2766 = vmatprep.subr.bf16.mxu0 0
        %2767 = vmatpush1.bf16.msra.mxu0 0
        %2768 = vmatprep.subr.bf16.mxu0 0
        %2769 = vmatpush1.bf16.msra.mxu0 0
        %2770 = vmatprep.subr.bf16.mxu0 0
        %2771 = vmatpush1.bf16.msra.mxu0 0
        %2772 = vmatprep.subr.bf16.mxu0 0
        %2773 = vmatpush1.bf16.msra.mxu0 0
        %2774 = vmatprep.subr.bf16.mxu0 0
        %2775 = vmatpush1.bf16.msra.mxu0 0
        %2776 = vmatprep.subr.bf16.mxu0 0
        %2777 = vmatpush1.bf16.msra.mxu0 0
        %2778 = vmatprep.mubr.bf16.mxu0 0
        %2779 = vmatmul.mubr.bf16.gmra.mrb[0].mxu0 %v2744
        %v2780 = vpop.f32.mrb[0].mxu0
        %v2781 = vadd.f32 0.0, %v2780
        %v2782 = vpop.f32.mrb[0].mxu0
        %v2783 = vpop.f32.mrb[0].mxu0
        %v2784 = vpop.f32.mrb[0].mxu0
        %2785 = vdwg.mxu0
        %v2787 = vsel %vm2292, %v2476, 0
        %2789 = vmatprep.subr.bf16.mxu0 0
        %2790 = vmatpush1.bf16.msra.mxu0 %v1533
        %2791 = vmatprep.subr.bf16.mxu0 0
        %2792 = vmatpush1.bf16.msra.mxu0 0
        %2793 = vmatprep.subr.bf16.mxu0 0
        %2794 = vmatpush1.bf16.msra.mxu0 0
        %2795 = vmatprep.subr.bf16.mxu0 0
        %2796 = vmatpush1.bf16.msra.mxu0 0
        %2797 = vmatprep.subr.bf16.mxu0 0
        %2798 = vmatpush1.bf16.msra.mxu0 0
        %2799 = vmatprep.subr.bf16.mxu0 0
        %2800 = vmatpush1.bf16.msra.mxu0 0
        %2801 = vmatprep.subr.bf16.mxu0 0
        %2802 = vmatpush1.bf16.msra.mxu0 0
        %2803 = vmatprep.subr.bf16.mxu0 0
        %2804 = vmatpush1.bf16.msra.mxu0 0
        %2805 = vmatprep.subr.bf16.mxu0 0
        %2806 = vmatpush1.bf16.msra.mxu0 0
        %2807 = vmatprep.subr.bf16.mxu0 0
        %2808 = vmatpush1.bf16.msra.mxu0 0
        %2809 = vmatprep.subr.bf16.mxu0 0
        %2810 = vmatpush1.bf16.msra.mxu0 0
        %2811 = vmatprep.subr.bf16.mxu0 0
        %2812 = vmatpush1.bf16.msra.mxu0 0
        %2813 = vmatprep.subr.bf16.mxu0 0
        %2814 = vmatpush1.bf16.msra.mxu0 0
        %2815 = vmatprep.subr.bf16.mxu0 0
        %2816 = vmatpush1.bf16.msra.mxu0 0
        %2817 = vmatprep.subr.bf16.mxu0 0
        %2818 = vmatpush1.bf16.msra.mxu0 0
        %2819 = vmatprep.subr.bf16.mxu0 0
        %2820 = vmatpush1.bf16.msra.mxu0 0
        %2821 = vmatprep.mubr.bf16.mxu0 0
        %2822 = vmatmul.mubr.bf16.gmra.mrb[0].mxu0 %v2787
        %v2823 = vpop.f32.mrb[0].mxu0
        %v2824 = vadd.f32 0.0, %v2823
        %v2825 = vpop.f32.mrb[0].mxu0
        %v2826 = vpop.f32.mrb[0].mxu0
        %v2827 = vpop.f32.mrb[0].mxu0
        %2828 = vdwg.mxu0
        %v2830 = vsel %vm2292, %v2477, 0
        %2832 = vmatprep.subr.bf16.mxu0 0
        %2833 = vmatpush1.bf16.msra.mxu0 %v1457
        %2834 = vmatprep.subr.bf16.mxu0 0
        %2835 = vmatpush1.bf16.msra.mxu0 0
        %2836 = vmatprep.subr.bf16.mxu0 0
        %2837 = vmatpush1.bf16.msra.mxu0 0
        %2838 = vmatprep.subr.bf16.mxu0 0
        %2839 = vmatpush1.bf16.msra.mxu0 0
        %2840 = vmatprep.subr.bf16.mxu0 0
        %2841 = vmatpush1.bf16.msra.mxu0 0
        %2842 = vmatprep.subr.bf16.mxu0 0
        %2843 = vmatpush1.bf16.msra.mxu0 0
        %2844 = vmatprep.subr.bf16.mxu0 0
        %2845 = vmatpush1.bf16.msra.mxu0 0
        %2846 = vmatprep.subr.bf16.mxu0 0
        %2847 = vmatpush1.bf16.msra.mxu0 0
        %2848 = vmatprep.subr.bf16.mxu0 0
        %2849 = vmatpush1.bf16.msra.mxu0 0
        %2850 = vmatprep.subr.bf16.mxu0 0
        %2851 = vmatpush1.bf16.msra.mxu0 0
        %2852 = vmatprep.subr.bf16.mxu0 0
        %2853 = vmatpush1.bf16.msra.mxu0 0
        %2854 = vmatprep.subr.bf16.mxu0 0
        %2855 = vmatpush1.bf16.msra.mxu0 0
        %2856 = vmatprep.subr.bf16.mxu0 0
        %2857 = vmatpush1.bf16.msra.mxu0 0
        %2858 = vmatprep.subr.bf16.mxu0 0
        %2859 = vmatpush1.bf16.msra.mxu0 0
        %2860 = vmatprep.subr.bf16.mxu0 0
        %2861 = vmatpush1.bf16.msra.mxu0 0
        %2862 = vmatprep.subr.bf16.mxu0 0
        %2863 = vmatpush1.bf16.msra.mxu0 0
        %2864 = vmatprep.mubr.bf16.mxu0 0
        %2865 = vmatmul.mubr.bf16.gmra.mrb[0].mxu0 %v2830
        %v2866 = vpop.f32.mrb[0].mxu0
        %v2867 = vadd.f32 0.0, %v2866
        %v2868 = vpop.f32.mrb[0].mxu0
        %v2869 = vpop.f32.mrb[0].mxu0
        %v2870 = vpop.f32.mrb[0].mxu0
        %2871 = vdwg.mxu0
        %v2873 = vsel %vm2292, %v2478, 0
        %2875 = vmatprep.subr.bf16.mxu0 0
        %2876 = vmatpush1.bf16.msra.mxu0 %v1537
        %2877 = vmatprep.subr.bf16.mxu0 0
        %2878 = vmatpush1.bf16.msra.mxu0 0
        %2879 = vmatprep.subr.bf16.mxu0 0
        %2880 = vmatpush1.bf16.msra.mxu0 0
        %2881 = vmatprep.subr.bf16.mxu0 0
        %2882 = vmatpush1.bf16.msra.mxu0 0
        %2883 = vmatprep.subr.bf16.mxu0 0
        %2884 = vmatpush1.bf16.msra.mxu0 0
        %2885 = vmatprep.subr.bf16.mxu0 0
        %2886 = vmatpush1.bf16.msra.mxu0 0
        %2887 = vmatprep.subr.bf16.mxu0 0
        %2888 = vmatpush1.bf16.msra.mxu0 0
        %2889 = vmatprep.subr.bf16.mxu0 0
        %2890 = vmatpush1.bf16.msra.mxu0 0
        %2891 = vmatprep.subr.bf16.mxu0 0
        %2892 = vmatpush1.bf16.msra.mxu0 0
        %2893 = vmatprep.subr.bf16.mxu0 0
        %2894 = vmatpush1.bf16.msra.mxu0 0
        %2895 = vmatprep.subr.bf16.mxu0 0
        %2896 = vmatpush1.bf16.msra.mxu0 0
        %2897 = vmatprep.subr.bf16.mxu0 0
        %2898 = vmatpush1.bf16.msra.mxu0 0
        %2899 = vmatprep.subr.bf16.mxu0 0
        %2900 = vmatpush1.bf16.msra.mxu0 0
        %2901 = vmatprep.subr.bf16.mxu0 0
        %2902 = vmatpush1.bf16.msra.mxu0 0
        %2903 = vmatprep.subr.bf16.mxu0 0
        %2904 = vmatpush1.bf16.msra.mxu0 0
        %2905 = vmatprep.subr.bf16.mxu0 0
        %2906 = vmatpush1.bf16.msra.mxu0 0
        %2907 = vmatprep.mubr.bf16.mxu0 0
        %2908 = vmatmul.mubr.bf16.gmra.mrb[0].mxu0 %v2873
        %v2909 = vpop.f32.mrb[0].mxu0
        %v2910 = vadd.f32 0.0, %v2909
        %v2911 = vpop.f32.mrb[0].mxu0
        %v2912 = vpop.f32.mrb[0].mxu0
        %v2913 = vpop.f32.mrb[0].mxu0
        %2914 = vdwg.mxu0
        %v2916 = vsel %vm2292, %v2479, 0
        %2918 = vmatprep.subr.bf16.mxu0 0
        %2919 = vmatpush1.bf16.msra.mxu0 %v1540
        %2920 = vmatprep.subr.bf16.mxu0 0
        %2921 = vmatpush1.bf16.msra.mxu0 0
        %2922 = vmatprep.subr.bf16.mxu0 0
        %2923 = vmatpush1.bf16.msra.mxu0 0
        %2924 = vmatprep.subr.bf16.mxu0 0
        %2925 = vmatpush1.bf16.msra.mxu0 0
        %2926 = vmatprep.subr.bf16.mxu0 0
        %2927 = vmatpush1.bf16.msra.mxu0 0
        %2928 = vmatprep.subr.bf16.mxu0 0
        %2929 = vmatpush1.bf16.msra.mxu0 0
        %2930 = vmatprep.subr.bf16.mxu0 0
        %2931 = vmatpush1.bf16.msra.mxu0 0
        %2932 = vmatprep.subr.bf16.mxu0 0
        %2933 = vmatpush1.bf16.msra.mxu0 0
        %2934 = vmatprep.subr.bf16.mxu0 0
        %2935 = vmatpush1.bf16.msra.mxu0 0
        %2936 = vmatprep.subr.bf16.mxu0 0
        %2937 = vmatpush1.bf16.msra.mxu0 0
        %2938 = vmatprep.subr.bf16.mxu0 0
        %2939 = vmatpush1.bf16.msra.mxu0 0
        %2940 = vmatprep.subr.bf16.mxu0 0
        %2941 = vmatpush1.bf16.msra.mxu0 0
        %2942 = vmatprep.subr.bf16.mxu0 0
        %2943 = vmatpush1.bf16.msra.mxu0 0
        %2944 = vmatprep.subr.bf16.mxu0 0
        %2945 = vmatpush1.bf16.msra.mxu0 0
        %2946 = vmatprep.subr.bf16.mxu0 0
        %2947 = vmatpush1.bf16.msra.mxu0 0
        %2948 = vmatprep.subr.bf16.mxu0 0
        %2949 = vmatpush1.bf16.msra.mxu0 0
        %2950 = vmatprep.mubr.bf16.mxu0 0
        %2951 = vmatmul.mubr.bf16.gmra.mrb[0].mxu0 %v2916
        %v2952 = vpop.f32.mrb[0].mxu0
        %v2953 = vadd.f32 0.0, %v2952
        %v2954 = vpop.f32.mrb[0].mxu0
        %v2955 = vpop.f32.mrb[0].mxu0
        %v2956 = vpop.f32.mrb[0].mxu0
        %2957 = vdwg.mxu0
        %v2959 = vsel %vm2292, %v2480, 0
        %2961 = vmatprep.subr.bf16.mxu0 0
        %2962 = vmatpush1.bf16.msra.mxu0 %v1543
        %2963 = vmatprep.subr.bf16.mxu0 0
        %2964 = vmatpush1.bf16.msra.mxu0 0
        %2965 = vmatprep.subr.bf16.mxu0 0
        %2966 = vmatpush1.bf16.msra.mxu0 0
        %2967 = vmatprep.subr.bf16.mxu0 0
        %2968 = vmatpush1.bf16.msra.mxu0 0
        %2969 = vmatprep.subr.bf16.mxu0 0
        %2970 = vmatpush1.bf16.msra.mxu0 0
        %2971 = vmatprep.subr.bf16.mxu0 0
        %2972 = vmatpush1.bf16.msra.mxu0 0
        %2973 = vmatprep.subr.bf16.mxu0 0
        %2974 = vmatpush1.bf16.msra.mxu0 0
        %2975 = vmatprep.subr.bf16.mxu0 0
        %2976 = vmatpush1.bf16.msra.mxu0 0
        %2977 = vmatprep.subr.bf16.mxu0 0
        %2978 = vmatpush1.bf16.msra.mxu0 0
        %2979 = vmatprep.subr.bf16.mxu0 0
        %2980 = vmatpush1.bf16.msra.mxu0 0
        %2981 = vmatprep.subr.bf16.mxu0 0
        %2982 = vmatpush1.bf16.msra.mxu0 0
        %2983 = vmatprep.subr.bf16.mxu0 0
        %2984 = vmatpush1.bf16.msra.mxu0 0
        %2985 = vmatprep.subr.bf16.mxu0 0
        %2986 = vmatpush1.bf16.msra.mxu0 0
        %2987 = vmatprep.subr.bf16.mxu0 0
        %2988 = vmatpush1.bf16.msra.mxu0 0
        %2989 = vmatprep.subr.bf16.mxu0 0
        %2990 = vmatpush1.bf16.msra.mxu0 0
        %2991 = vmatprep.subr.bf16.mxu0 0
        %2992 = vmatpush1.bf16.msra.mxu0 0
        %2993 = vmatprep.mubr.bf16.mxu0 0
        %2994 = vmatmul.mubr.bf16.gmra.mrb[0].mxu0 %v2959
        %v2995 = vpop.f32.mrb[0].mxu0
        %v2996 = vadd.f32 0.0, %v2995
        %v2997 = vpop.f32.mrb[0].mxu0
        %v2998 = vpop.f32.mrb[0].mxu0
        %v2999 = vpop.f32.mrb[0].mxu0
        %3000 = vdwg.mxu0
        %v3002 = vsel %vm2292, %v2481, 0
        %3004 = vmatprep.subr.bf16.mxu0 0
        %3005 = vmatpush1.bf16.msra.mxu0 %v1458
        %3006 = vmatprep.subr.bf16.mxu0 0
        %3007 = vmatpush1.bf16.msra.mxu0 0
        %3008 = vmatprep.subr.bf16.mxu0 0
        %3009 = vmatpush1.bf16.msra.mxu0 0
        %3010 = vmatprep.subr.bf16.mxu0 0
        %3011 = vmatpush1.bf16.msra.mxu0 0
        %3012 = vmatprep.subr.bf16.mxu0 0
        %3013 = vmatpush1.bf16.msra.mxu0 0
        %3014 = vmatprep.subr.bf16.mxu0 0
        %3015 = vmatpush1.bf16.msra.mxu0 0
        %3016 = vmatprep.subr.bf16.mxu0 0
        %3017 = vmatpush1.bf16.msra.mxu0 0
        %3018 = vmatprep.subr.bf16.mxu0 0
        %3019 = vmatpush1.bf16.msra.mxu0 0
        %3020 = vmatprep.subr.bf16.mxu0 0
        %3021 = vmatpush1.bf16.msra.mxu0 0
        %3022 = vmatprep.subr.bf16.mxu0 0
        %3023 = vmatpush1.bf16.msra.mxu0 0
        %3024 = vmatprep.subr.bf16.mxu0 0
        %3025 = vmatpush1.bf16.msra.mxu0 0
        %3026 = vmatprep.subr.bf16.mxu0 0
        %3027 = vmatpush1.bf16.msra.mxu0 0
        %3028 = vmatprep.subr.bf16.mxu0 0
        %3029 = vmatpush1.bf16.msra.mxu0 0
        %3030 = vmatprep.subr.bf16.mxu0 0
        %3031 = vmatpush1.bf16.msra.mxu0 0
        %3032 = vmatprep.subr.bf16.mxu0 0
        %3033 = vmatpush1.bf16.msra.mxu0 0
        %3034 = vmatprep.subr.bf16.mxu0 0
        %3035 = vmatpush1.bf16.msra.mxu0 0
        %3036 = vmatprep.mubr.bf16.mxu0 0
        %3037 = vmatmul.mubr.bf16.gmra.mrb[0].mxu0 %v3002
        %v3038 = vpop.f32.mrb[0].mxu0
        %v3039 = vadd.f32 0.0, %v3038
        %v3040 = vpop.f32.mrb[0].mxu0
        %v3041 = vpop.f32.mrb[0].mxu0
        %v3042 = vpop.f32.mrb[0].mxu0
        %3043 = vdwg.mxu0
        %v3045 = vsel %vm2292, %v2482, 0
        %3047 = vmatprep.subr.bf16.mxu0 0
        %3048 = vmatpush1.bf16.msra.mxu0 %v1547
        %3049 = vmatprep.subr.bf16.mxu0 0
        %3050 = vmatpush1.bf16.msra.mxu0 0
        %3051 = vmatprep.subr.bf16.mxu0 0
        %3052 = vmatpush1.bf16.msra.mxu0 0
        %3053 = vmatprep.subr.bf16.mxu0 0
        %3054 = vmatpush1.bf16.msra.mxu0 0
        %3055 = vmatprep.subr.bf16.mxu0 0
        %3056 = vmatpush1.bf16.msra.mxu0 0
        %3057 = vmatprep.subr.bf16.mxu0 0
        %3058 = vmatpush1.bf16.msra.mxu0 0
        %3059 = vmatprep.subr.bf16.mxu0 0
        %3060 = vmatpush1.bf16.msra.mxu0 0
        %3061 = vmatprep.subr.bf16.mxu0 0
        %3062 = vmatpush1.bf16.msra.mxu0 0
        %3063 = vmatprep.subr.bf16.mxu0 0
        %3064 = vmatpush1.bf16.msra.mxu0 0
        %3065 = vmatprep.subr.bf16.mxu0 0
        %3066 = vmatpush1.bf16.msra.mxu0 0
        %3067 = vmatprep.subr.bf16.mxu0 0
        %3068 = vmatpush1.bf16.msra.mxu0 0
        %3069 = vmatprep.subr.bf16.mxu0 0
        %3070 = vmatpush1.bf16.msra.mxu0 0
        %3071 = vmatprep.subr.bf16.mxu0 0
        %3072 = vmatpush1.bf16.msra.mxu0 0
        %3073 = vmatprep.subr.bf16.mxu0 0
        %3074 = vmatpush1.bf16.msra.mxu0 0
        %3075 = vmatprep.subr.bf16.mxu0 0
        %3076 = vmatpush1.bf16.msra.mxu0 0
        %3077 = vmatprep.subr.bf16.mxu0 0
        %3078 = vmatpush1.bf16.msra.mxu0 0
        %3079 = vmatprep.mubr.bf16.mxu0 0
        %3080 = vmatmul.mubr.bf16.gmra.mrb[0].mxu0 %v3045
        %v3081 = vpop.f32.mrb[0].mxu0
        %v3082 = vadd.f32 0.0, %v3081
        %v3083 = vpop.f32.mrb[0].mxu0
        %v3084 = vpop.f32.mrb[0].mxu0
        %v3085 = vpop.f32.mrb[0].mxu0
        %3086 = vdwg.mxu0
        %v3088 = vsel %vm2292, %v2483, 0
        %3090 = vmatprep.subr.bf16.mxu0 0
        %3091 = vmatpush1.bf16.msra.mxu0 %v1550
        %3092 = vmatprep.subr.bf16.mxu0 0
        %3093 = vmatpush1.bf16.msra.mxu0 0
        %3094 = vmatprep.subr.bf16.mxu0 0
        %3095 = vmatpush1.bf16.msra.mxu0 0
        %3096 = vmatprep.subr.bf16.mxu0 0
        %3097 = vmatpush1.bf16.msra.mxu0 0
        %3098 = vmatprep.subr.bf16.mxu0 0
        %3099 = vmatpush1.bf16.msra.mxu0 0
        %3100 = vmatprep.subr.bf16.mxu0 0
        %3101 = vmatpush1.bf16.msra.mxu0 0
        %3102 = vmatprep.subr.bf16.mxu0 0
        %3103 = vmatpush1.bf16.msra.mxu0 0
        %3104 = vmatprep.subr.bf16.mxu0 0
        %3105 = vmatpush1.bf16.msra.mxu0 0
        %3106 = vmatprep.subr.bf16.mxu0 0
        %3107 = vmatpush1.bf16.msra.mxu0 0
        %3108 = vmatprep.subr.bf16.mxu0 0
        %3109 = vmatpush1.bf16.msra.mxu0 0
        %3110 = vmatprep.subr.bf16.mxu0 0
        %3111 = vmatpush1.bf16.msra.mxu0 0
        %3112 = vmatprep.subr.bf16.mxu0 0
        %3113 = vmatpush1.bf16.msra.mxu0 0
        %3114 = vmatprep.subr.bf16.mxu0 0
        %3115 = vmatpush1.bf16.msra.mxu0 0
        %3116 = vmatprep.subr.bf16.mxu0 0
        %3117 = vmatpush1.bf16.msra.mxu0 0
        %3118 = vmatprep.subr.bf16.mxu0 0
        %3119 = vmatpush1.bf16.msra.mxu0 0
        %3120 = vmatprep.subr.bf16.mxu0 0
        %3121 = vmatpush1.bf16.msra.mxu0 0
        %3122 = vmatprep.mubr.bf16.mxu0 0
        %3123 = vmatmul.mubr.bf16.gmra.mrb[0].mxu0 %v3088
        %v3124 = vpop.f32.mrb[0].mxu0
        %v3125 = vadd.f32 0.0, %v3124
        %v3126 = vpop.f32.mrb[0].mxu0
        %v3127 = vpop.f32.mrb[0].mxu0
        %v3128 = vpop.f32.mrb[0].mxu0
        %3129 = vdwg.mxu0
        %v3131 = vsel %vm2292, %v2484, 0
        %3133 = vmatprep.subr.bf16.mxu0 0
        %3134 = vmatpush1.bf16.msra.mxu0 %v1553
        %3135 = vmatprep.subr.bf16.mxu0 0
        %3136 = vmatpush1.bf16.msra.mxu0 0
        %3137 = vmatprep.subr.bf16.mxu0 0
        %3138 = vmatpush1.bf16.msra.mxu0 0
        %3139 = vmatprep.subr.bf16.mxu0 0
        %3140 = vmatpush1.bf16.msra.mxu0 0
        %3141 = vmatprep.subr.bf16.mxu0 0
        %3142 = vmatpush1.bf16.msra.mxu0 0
        %3143 = vmatprep.subr.bf16.mxu0 0
        %3144 = vmatpush1.bf16.msra.mxu0 0
        %3145 = vmatprep.subr.bf16.mxu0 0
        %3146 = vmatpush1.bf16.msra.mxu0 0
        %3147 = vmatprep.subr.bf16.mxu0 0
        %3148 = vmatpush1.bf16.msra.mxu0 0
        %3149 = vmatprep.subr.bf16.mxu0 0
        %3150 = vmatpush1.bf16.msra.mxu0 0
        %3151 = vmatprep.subr.bf16.mxu0 0
        %3152 = vmatpush1.bf16.msra.mxu0 0
        %3153 = vmatprep.subr.bf16.mxu0 0
        %3154 = vmatpush1.bf16.msra.mxu0 0
        %3155 = vmatprep.subr.bf16.mxu0 0
        %3156 = vmatpush1.bf16.msra.mxu0 0
        %3157 = vmatprep.subr.bf16.mxu0 0
        %3158 = vmatpush1.bf16.msra.mxu0 0
        %3159 = vmatprep.subr.bf16.mxu0 0
        %3160 = vmatpush1.bf16.msra.mxu0 0
        %3161 = vmatprep.subr.bf16.mxu0 0
        %3162 = vmatpush1.bf16.msra.mxu0 0
        %3163 = vmatprep.subr.bf16.mxu0 0
        %3164 = vmatpush1.bf16.msra.mxu0 0
        %3165 = vmatprep.mubr.bf16.mxu0 0
        %3166 = vmatmul.mubr.bf16.gmra.mrb[0].mxu0 %v3131
        %v3167 = vpop.f32.mrb[0].mxu0
        %v3168 = vadd.f32 0.0, %v3167
        %v3169 = vpop.f32.mrb[0].mxu0
        %v3170 = vpop.f32.mrb[0].mxu0
        %v3171 = vpop.f32.mrb[0].mxu0
        %3172 = vdwg.mxu0
        %v3173 = vpack.c.bf16 %v2523, %v2523
        %v3174 = vpack.c.bf16 %v2566, %v2566
        %v3175 = vpack.c.bf16 %v2609, %v2609
        %v3176 = vpack.c.bf16 %v2652, %v2652
        %v3177 = vpack.c.bf16 %v2695, %v2695
        %v3178 = vpack.c.bf16 %v2738, %v2738
        %v3179 = vpack.c.bf16 %v2781, %v2781
        %v3180 = vpack.c.bf16 %v2824, %v2824
        %v3181 = vpack.c.bf16 %v2867, %v2867
        %v3182 = vpack.c.bf16 %v2910, %v2910
        %v3183 = vpack.c.bf16 %v2953, %v2953
        %v3184 = vpack.c.bf16 %v2996, %v2996
        %v3185 = vpack.c.bf16 %v3039, %v3039
        %v3186 = vpack.c.bf16 %v3082, %v3082
        %v3187 = vpack.c.bf16 %v3125, %v3125
        %v3188 = vpack.c.bf16 %v3168, %v3168
        %v3189 = vld [vmem:[#allocation14] sm:$0xff]
        %v3190 = vld [vmem:[#allocation14 + $0x8] sm:$0xff]
        %v3191 = vld [vmem:[#allocation14 + $0x10] sm:$0xff]
        %v3192 = vld [vmem:[#allocation14 + $0x18] sm:$0xff]
        %v3193 = vld [vmem:[#allocation14 + $0x20] sm:$0xff]
        %v3194 = vld [vmem:[#allocation14 + $0x28] sm:$0xff]
        %v3195 = vld [vmem:[#allocation14 + $0x30] sm:$0xff]
        %v3196 = vld [vmem:[#allocation14 + $0x38] sm:$0xff]
        %v3197 = vld [vmem:[#allocation14 + $0x40] sm:$0xff]
        %v3198 = vld [vmem:[#allocation14 + $0x48] sm:$0xff]
        %v3199 = vld [vmem:[#allocation14 + $0x50] sm:$0xff]
        %v3200 = vld [vmem:[#allocation14 + $0x58] sm:$0xff]
        %v3201 = vld [vmem:[#allocation14 + $0x60] sm:$0xff]
        %v3202 = vld [vmem:[#allocation14 + $0x68] sm:$0xff]
        %v3203 = vld [vmem:[#allocation14 + $0x70] sm:$0xff]
        %v3204 = vld [vmem:[#allocation14 + $0x78] sm:$0xff]
        %v3205 = vld [vmem:[#allocation14 + $0x80] sm:$0xff]
        %v3206 = vld [vmem:[#allocation14 + $0x88] sm:$0xff]
        %v3207 = vld [vmem:[#allocation14 + $0x90] sm:$0xff]
        %v3208 = vld [vmem:[#allocation14 + $0x98] sm:$0xff]
        %v3209 = vld [vmem:[#allocation14 + $0xa0] sm:$0xff]
        %v3210 = vld [vmem:[#allocation14 + $0xa8] sm:$0xff]
        %v3211 = vld [vmem:[#allocation14 + $0xb0] sm:$0xff]
        %v3212 = vld [vmem:[#allocation14 + $0xb8] sm:$0xff]
        %v3213 = vld [vmem:[#allocation14 + $0xc0] sm:$0xff]
        %v3214 = vld [vmem:[#allocation14 + $0xc8] sm:$0xff]
        %v3215 = vld [vmem:[#allocation14 + $0xd0] sm:$0xff]
        %v3216 = vld [vmem:[#allocation14 + $0xd8] sm:$0xff]
        %v3217 = vld [vmem:[#allocation14 + $0xe0] sm:$0xff]
        %v3218 = vld [vmem:[#allocation14 + $0xe8] sm:$0xff]
        %v3219 = vld [vmem:[#allocation14 + $0xf0] sm:$0xff]
        %v3220 = vld [vmem:[#allocation14 + $0xf8] sm:$0xff]
        %v3221 = vld [vmem:[#allocation14 + $0x100] sm:$0xff]
        %v3222 = vld [vmem:[#allocation14 + $0x108] sm:$0xff]
        %v3223 = vld [vmem:[#allocation14 + $0x110] sm:$0xff]
        %v3224 = vld [vmem:[#allocation14 + $0x118] sm:$0xff]
        %v3225 = vld [vmem:[#allocation14 + $0x120] sm:$0xff]
        %v3226 = vld [vmem:[#allocation14 + $0x128] sm:$0xff]
        %v3227 = vld [vmem:[#allocation14 + $0x130] sm:$0xff]
        %v3228 = vld [vmem:[#allocation14 + $0x138] sm:$0xff]
        %v3229 = vld [vmem:[#allocation14 + $0x140] sm:$0xff]
        %v3230 = vld [vmem:[#allocation14 + $0x148] sm:$0xff]
        %v3231 = vld [vmem:[#allocation14 + $0x150] sm:$0xff]
        %v3232 = vld [vmem:[#allocation14 + $0x158] sm:$0xff]
        %v3233 = vld [vmem:[#allocation14 + $0x160] sm:$0xff]
        %v3234 = vld [vmem:[#allocation14 + $0x168] sm:$0xff]
        %v3235 = vld [vmem:[#allocation14 + $0x170] sm:$0xff]
        %v3236 = vld [vmem:[#allocation14 + $0x178] sm:$0xff]
        %v3237 = vld [vmem:[#allocation14 + $0x180] sm:$0xff]
        %v3238 = vld [vmem:[#allocation14 + $0x188] sm:$0xff]
        %v3239 = vld [vmem:[#allocation14 + $0x190] sm:$0xff]
        %v3240 = vld [vmem:[#allocation14 + $0x198] sm:$0xff]
        %v3241 = vld [vmem:[#allocation14 + $0x1a0] sm:$0xff]
        %v3242 = vld [vmem:[#allocation14 + $0x1a8] sm:$0xff]
        %v3243 = vld [vmem:[#allocation14 + $0x1b0] sm:$0xff]
        %v3244 = vld [vmem:[#allocation14 + $0x1b8] sm:$0xff]
        %v3245 = vld [vmem:[#allocation14 + $0x1c0] sm:$0xff]
        %v3246 = vld [vmem:[#allocation14 + $0x1c8] sm:$0xff]
        %v3247 = vld [vmem:[#allocation14 + $0x1d0] sm:$0xff]
        %v3248 = vld [vmem:[#allocation14 + $0x1d8] sm:$0xff]
        %v3249 = vld [vmem:[#allocation14 + $0x1e0] sm:$0xff]
        %v3250 = vld [vmem:[#allocation14 + $0x1e8] sm:$0xff]
        %v3251 = vld [vmem:[#allocation14 + $0x1f0] sm:$0xff]
        %v3252 = vld [vmem:[#allocation14 + $0x1f8] sm:$0xff]
        %v3257 = vunpack.c.l.b16 %v3189
        %v3258 = vunpack.c.h.b16 %v3189
        %v3259 = vunpack.c.l.b16 %v3190
        %v3260 = vunpack.c.h.b16 %v3190
        %v3261 = vunpack.c.l.b16 %v3191
        %v3262 = vunpack.c.h.b16 %v3191
        %v3263 = vunpack.c.l.b16 %v3192
        %v3264 = vunpack.c.h.b16 %v3192
        %v3265 = vpack.c.b16 %v3259, %v3257
        %v3266 = vpack.c.b16 %v3260, %v3258
        %v3267 = vpack.c.b16 %v3263, %v3261
        %v3268 = vpack.c.b16 %v3264, %v3262
        %v3274 = vsel %vm1555, %v3173, 0
        %3276 = vmatprep.subr.bf16.mxu0 %v3266
        %3277 = vmatpush1.bf16.msra.mxu0 %v3265
        %3278 = vmatprep.subr.bf16.mxu0 %v3268
        %3279 = vmatpush1.bf16.msra.mxu0 %v3267
        %3280 = vmatprep.subr.bf16.mxu0 0
        %3281 = vmatpush1.bf16.msra.mxu0 0
        %3282 = vmatprep.subr.bf16.mxu0 0
        %3283 = vmatpush1.bf16.msra.mxu0 0
        %3284 = vmatprep.subr.bf16.mxu0 0
        %3285 = vmatpush1.bf16.msra.mxu0 0
        %3286 = vmatprep.subr.bf16.mxu0 0
        %3287 = vmatpush1.bf16.msra.mxu0 0
        %3288 = vmatprep.subr.bf16.mxu0 0
        %3289 = vmatpush1.bf16.msra.mxu0 0
        %3290 = vmatprep.subr.bf16.mxu0 0
        %3291 = vmatpush1.bf16.msra.mxu0 0
        %3292 = vmatprep.subr.bf16.mxu0 0
        %3293 = vmatpush1.bf16.msra.mxu0 0
        %3294 = vmatprep.subr.bf16.mxu0 0
        %3295 = vmatpush1.bf16.msra.mxu0 0
        %3296 = vmatprep.subr.bf16.mxu0 0
        %3297 = vmatpush1.bf16.msra.mxu0 0
        %3298 = vmatprep.subr.bf16.mxu0 0
        %3299 = vmatpush1.bf16.msra.mxu0 0
        %3300 = vmatprep.subr.bf16.mxu0 0
        %3301 = vmatpush1.bf16.msra.mxu0 0
        %3302 = vmatprep.subr.bf16.mxu0 0
        %3303 = vmatpush1.bf16.msra.mxu0 0
        %3304 = vmatprep.subr.bf16.mxu0 0
        %3305 = vmatpush1.bf16.msra.mxu0 0
        %3306 = vmatprep.subr.bf16.mxu0 0
        %3307 = vmatpush1.bf16.msra.mxu0 0
        %3308 = vmatprep.mubr.bf16.mxu0 0
        %3309 = vmatmul.mubr.bf16.gmra.mrb[0].mxu0 %v3274
        %v3310 = vpop.f32.mrb[0].mxu0
        %v3311 = vadd.f32 0.0, %v3310
        %v3312 = vpop.f32.mrb[0].mxu0
        %v3313 = vadd.f32 0.0, %v3312
        %v3314 = vpop.f32.mrb[0].mxu0
        %v3315 = vpop.f32.mrb[0].mxu0
        %3316 = vdwg.mxu0
        %v3321 = vunpack.c.l.b16 %v3193
        %v3322 = vunpack.c.h.b16 %v3193
        %v3323 = vunpack.c.l.b16 %v3194
        %v3324 = vunpack.c.h.b16 %v3194
        %v3325 = vunpack.c.l.b16 %v3195
        %v3326 = vunpack.c.h.b16 %v3195
        %v3327 = vunpack.c.l.b16 %v3196
        %v3328 = vunpack.c.h.b16 %v3196
        %v3329 = vpack.c.b16 %v3323, %v3321
        %v3330 = vpack.c.b16 %v3324, %v3322
        %v3331 = vpack.c.b16 %v3327, %v3325
        %v3332 = vpack.c.b16 %v3328, %v3326
        %v3338 = vsel %vm1555, %v3174, 0
        %3340 = vmatprep.subr.bf16.mxu0 %v3330
        %3341 = vmatpush1.bf16.msra.mxu0 %v3329
        %3342 = vmatprep.subr.bf16.mxu0 %v3332
        %3343 = vmatpush1.bf16.msra.mxu0 %v3331
        %3344 = vmatprep.subr.bf16.mxu0 0
        %3345 = vmatpush1.bf16.msra.mxu0 0
        %3346 = vmatprep.subr.bf16.mxu0 0
        %3347 = vmatpush1.bf16.msra.mxu0 0
        %3348 = vmatprep.subr.bf16.mxu0 0
        %3349 = vmatpush1.bf16.msra.mxu0 0
        %3350 = vmatprep.subr.bf16.mxu0 0
        %3351 = vmatpush1.bf16.msra.mxu0 0
        %3352 = vmatprep.subr.bf16.mxu0 0
        %3353 = vmatpush1.bf16.msra.mxu0 0
        %3354 = vmatprep.subr.bf16.mxu0 0
        %3355 = vmatpush1.bf16.msra.mxu0 0
        %3356 = vmatprep.subr.bf16.mxu0 0
        %3357 = vmatpush1.bf16.msra.mxu0 0
        %3358 = vmatprep.subr.bf16.mxu0 0
        %3359 = vmatpush1.bf16.msra.mxu0 0
        %3360 = vmatprep.subr.bf16.mxu0 0
        %3361 = vmatpush1.bf16.msra.mxu0 0
        %3362 = vmatprep.subr.bf16.mxu0 0
        %3363 = vmatpush1.bf16.msra.mxu0 0
        %3364 = vmatprep.subr.bf16.mxu0 0
        %3365 = vmatpush1.bf16.msra.mxu0 0
        %3366 = vmatprep.subr.bf16.mxu0 0
        %3367 = vmatpush1.bf16.msra.mxu0 0
        %3368 = vmatprep.subr.bf16.mxu0 0
        %3369 = vmatpush1.bf16.msra.mxu0 0
        %3370 = vmatprep.subr.bf16.mxu0 0
        %3371 = vmatpush1.bf16.msra.mxu0 0
        %3372 = vmatprep.mubr.bf16.mxu0 0
        %3373 = vmatmul.mubr.bf16.gmra.mrb[0].mxu0 %v3338
        %v3374 = vpop.f32.mrb[0].mxu0
        %v3375 = vadd.f32 0.0, %v3374
        %v3376 = vpop.f32.mrb[0].mxu0
        %v3377 = vadd.f32 0.0, %v3376
        %v3378 = vpop.f32.mrb[0].mxu0
        %v3379 = vpop.f32.mrb[0].mxu0
        %3380 = vdwg.mxu0
        %v3385 = vunpack.c.l.b16 %v3197
        %v3386 = vunpack.c.h.b16 %v3197
        %v3387 = vunpack.c.l.b16 %v3198
        %v3388 = vunpack.c.h.b16 %v3198
        %v3389 = vunpack.c.l.b16 %v3199
        %v3390 = vunpack.c.h.b16 %v3199
        %v3391 = vunpack.c.l.b16 %v3200
        %v3392 = vunpack.c.h.b16 %v3200
        %v3393 = vpack.c.b16 %v3387, %v3385
        %v3394 = vpack.c.b16 %v3388, %v3386
        %v3395 = vpack.c.b16 %v3391, %v3389
        %v3396 = vpack.c.b16 %v3392, %v3390
        %v3402 = vsel %vm1555, %v3175, 0
        %3404 = vmatprep.subr.bf16.mxu0 %v3394
        %3405 = vmatpush1.bf16.msra.mxu0 %v3393
        %3406 = vmatprep.subr.bf16.mxu0 %v3396
        %3407 = vmatpush1.bf16.msra.mxu0 %v3395
        %3408 = vmatprep.subr.bf16.mxu0 0
        %3409 = vmatpush1.bf16.msra.mxu0 0
        %3410 = vmatprep.subr.bf16.mxu0 0
        %3411 = vmatpush1.bf16.msra.mxu0 0
        %3412 = vmatprep.subr.bf16.mxu0 0
        %3413 = vmatpush1.bf16.msra.mxu0 0
        %3414 = vmatprep.subr.bf16.mxu0 0
        %3415 = vmatpush1.bf16.msra.mxu0 0
        %3416 = vmatprep.subr.bf16.mxu0 0
        %3417 = vmatpush1.bf16.msra.mxu0 0
        %3418 = vmatprep.subr.bf16.mxu0 0
        %3419 = vmatpush1.bf16.msra.mxu0 0
        %3420 = vmatprep.subr.bf16.mxu0 0
        %3421 = vmatpush1.bf16.msra.mxu0 0
        %3422 = vmatprep.subr.bf16.mxu0 0
        %3423 = vmatpush1.bf16.msra.mxu0 0
        %3424 = vmatprep.subr.bf16.mxu0 0
        %3425 = vmatpush1.bf16.msra.mxu0 0
        %3426 = vmatprep.subr.bf16.mxu0 0
        %3427 = vmatpush1.bf16.msra.mxu0 0
        %3428 = vmatprep.subr.bf16.mxu0 0
        %3429 = vmatpush1.bf16.msra.mxu0 0
        %3430 = vmatprep.subr.bf16.mxu0 0
        %3431 = vmatpush1.bf16.msra.mxu0 0
        %3432 = vmatprep.subr.bf16.mxu0 0
        %3433 = vmatpush1.bf16.msra.mxu0 0
        %3434 = vmatprep.subr.bf16.mxu0 0
        %3435 = vmatpush1.bf16.msra.mxu0 0
        %3436 = vmatprep.mubr.bf16.mxu0 0
        %3437 = vmatmul.mubr.bf16.gmra.mrb[0].mxu0 %v3402
        %v3438 = vpop.f32.mrb[0].mxu0
        %v3439 = vadd.f32 0.0, %v3438
        %v3440 = vpop.f32.mrb[0].mxu0
        %v3441 = vadd.f32 0.0, %v3440
        %v3442 = vpop.f32.mrb[0].mxu0
        %v3443 = vpop.f32.mrb[0].mxu0
        %3444 = vdwg.mxu0
        %v3449 = vunpack.c.l.b16 %v3201
        %v3450 = vunpack.c.h.b16 %v3201
        %v3451 = vunpack.c.l.b16 %v3202
        %v3452 = vunpack.c.h.b16 %v3202
        %v3453 = vunpack.c.l.b16 %v3203
        %v3454 = vunpack.c.h.b16 %v3203
        %v3455 = vunpack.c.l.b16 %v3204
        %v3456 = vunpack.c.h.b16 %v3204
        %v3457 = vpack.c.b16 %v3451, %v3449
        %v3458 = vpack.c.b16 %v3452, %v3450
        %v3459 = vpack.c.b16 %v3455, %v3453
        %v3460 = vpack.c.b16 %v3456, %v3454
        %v3466 = vsel %vm1555, %v3176, 0
        %3468 = vmatprep.subr.bf16.mxu0 %v3458
        %3469 = vmatpush1.bf16.msra.mxu0 %v3457
        %3470 = vmatprep.subr.bf16.mxu0 %v3460
        %3471 = vmatpush1.bf16.msra.mxu0 %v3459
        %3472 = vmatprep.subr.bf16.mxu0 0
        %3473 = vmatpush1.bf16.msra.mxu0 0
        %3474 = vmatprep.subr.bf16.mxu0 0
        %3475 = vmatpush1.bf16.msra.mxu0 0
        %3476 = vmatprep.subr.bf16.mxu0 0
        %3477 = vmatpush1.bf16.msra.mxu0 0
        %3478 = vmatprep.subr.bf16.mxu0 0
        %3479 = vmatpush1.bf16.msra.mxu0 0
        %3480 = vmatprep.subr.bf16.mxu0 0
        %3481 = vmatpush1.bf16.msra.mxu0 0
        %3482 = vmatprep.subr.bf16.mxu0 0
        %3483 = vmatpush1.bf16.msra.mxu0 0
        %3484 = vmatprep.subr.bf16.mxu0 0
        %3485 = vmatpush1.bf16.msra.mxu0 0
        %3486 = vmatprep.subr.bf16.mxu0 0
        %3487 = vmatpush1.bf16.msra.mxu0 0
        %3488 = vmatprep.subr.bf16.mxu0 0
        %3489 = vmatpush1.bf16.msra.mxu0 0
        %3490 = vmatprep.subr.bf16.mxu0 0
        %3491 = vmatpush1.bf16.msra.mxu0 0
        %3492 = vmatprep.subr.bf16.mxu0 0
        %3493 = vmatpush1.bf16.msra.mxu0 0
        %3494 = vmatprep.subr.bf16.mxu0 0
        %3495 = vmatpush1.bf16.msra.mxu0 0
        %3496 = vmatprep.subr.bf16.mxu0 0
        %3497 = vmatpush1.bf16.msra.mxu0 0
        %3498 = vmatprep.subr.bf16.mxu0 0
        %3499 = vmatpush1.bf16.msra.mxu0 0
        %3500 = vmatprep.mubr.bf16.mxu0 0
        %3501 = vmatmul.mubr.bf16.gmra.mrb[0].mxu0 %v3466
        %v3502 = vpop.f32.mrb[0].mxu0
        %v3503 = vadd.f32 0.0, %v3502
        %v3504 = vpop.f32.mrb[0].mxu0
        %v3505 = vadd.f32 0.0, %v3504
        %v3506 = vpop.f32.mrb[0].mxu0
        %v3507 = vpop.f32.mrb[0].mxu0
        %3508 = vdwg.mxu0
        %v3513 = vunpack.c.l.b16 %v3205
        %v3514 = vunpack.c.h.b16 %v3205
        %v3515 = vunpack.c.l.b16 %v3206
        %v3516 = vunpack.c.h.b16 %v3206
        %v3517 = vunpack.c.l.b16 %v3207
        %v3518 = vunpack.c.h.b16 %v3207
        %v3519 = vunpack.c.l.b16 %v3208
        %v3520 = vunpack.c.h.b16 %v3208
        %v3521 = vpack.c.b16 %v3515, %v3513
        %v3522 = vpack.c.b16 %v3516, %v3514
        %v3523 = vpack.c.b16 %v3519, %v3517
        %v3524 = vpack.c.b16 %v3520, %v3518
        %v3530 = vsel %vm1555, %v3177, 0
        %3532 = vmatprep.subr.bf16.mxu0 %v3522
        %3533 = vmatpush1.bf16.msra.mxu0 %v3521
        %3534 = vmatprep.subr.bf16.mxu0 %v3524
        %3535 = vmatpush1.bf16.msra.mxu0 %v3523
        %3536 = vmatprep.subr.bf16.mxu0 0
        %3537 = vmatpush1.bf16.msra.mxu0 0
        %3538 = vmatprep.subr.bf16.mxu0 0
        %3539 = vmatpush1.bf16.msra.mxu0 0
        %3540 = vmatprep.subr.bf16.mxu0 0
        %3541 = vmatpush1.bf16.msra.mxu0 0
        %3542 = vmatprep.subr.bf16.mxu0 0
        %3543 = vmatpush1.bf16.msra.mxu0 0
        %3544 = vmatprep.subr.bf16.mxu0 0
        %3545 = vmatpush1.bf16.msra.mxu0 0
        %3546 = vmatprep.subr.bf16.mxu0 0
        %3547 = vmatpush1.bf16.msra.mxu0 0
        %3548 = vmatprep.subr.bf16.mxu0 0
        %3549 = vmatpush1.bf16.msra.mxu0 0
        %3550 = vmatprep.subr.bf16.mxu0 0
        %3551 = vmatpush1.bf16.msra.mxu0 0
        %3552 = vmatprep.subr.bf16.mxu0 0
        %3553 = vmatpush1.bf16.msra.mxu0 0
        %3554 = vmatprep.subr.bf16.mxu0 0
        %3555 = vmatpush1.bf16.msra.mxu0 0
        %3556 = vmatprep.subr.bf16.mxu0 0
        %3557 = vmatpush1.bf16.msra.mxu0 0
        %3558 = vmatprep.subr.bf16.mxu0 0
        %3559 = vmatpush1.bf16.msra.mxu0 0
        %3560 = vmatprep.subr.bf16.mxu0 0
        %3561 = vmatpush1.bf16.msra.mxu0 0
        %3562 = vmatprep.subr.bf16.mxu0 0
        %3563 = vmatpush1.bf16.msra.mxu0 0
        %3564 = vmatprep.mubr.bf16.mxu0 0
        %3565 = vmatmul.mubr.bf16.gmra.mrb[0].mxu0 %v3530
        %v3566 = vpop.f32.mrb[0].mxu0
        %v3567 = vadd.f32 0.0, %v3566
        %v3568 = vpop.f32.mrb[0].mxu0
        %v3569 = vadd.f32 0.0, %v3568
        %v3570 = vpop.f32.mrb[0].mxu0
        %v3571 = vpop.f32.mrb[0].mxu0
        %3572 = vdwg.mxu0
        %v3577 = vunpack.c.l.b16 %v3209
        %v3578 = vunpack.c.h.b16 %v3209
        %v3579 = vunpack.c.l.b16 %v3210
        %v3580 = vunpack.c.h.b16 %v3210
        %v3581 = vunpack.c.l.b16 %v3211
        %v3582 = vunpack.c.h.b16 %v3211
        %v3583 = vunpack.c.l.b16 %v3212
        %v3584 = vunpack.c.h.b16 %v3212
        %v3585 = vpack.c.b16 %v3579, %v3577
        %v3586 = vpack.c.b16 %v3580, %v3578
        %v3587 = vpack.c.b16 %v3583, %v3581
        %v3588 = vpack.c.b16 %v3584, %v3582
        %v3594 = vsel %vm1555, %v3178, 0
        %3596 = vmatprep.subr.bf16.mxu0 %v3586
        %3597 = vmatpush1.bf16.msra.mxu0 %v3585
        %3598 = vmatprep.subr.bf16.mxu0 %v3588
        %3599 = vmatpush1.bf16.msra.mxu0 %v3587
        %3600 = vmatprep.subr.bf16.mxu0 0
        %3601 = vmatpush1.bf16.msra.mxu0 0
        %3602 = vmatprep.subr.bf16.mxu0 0
        %3603 = vmatpush1.bf16.msra.mxu0 0
        %3604 = vmatprep.subr.bf16.mxu0 0
        %3605 = vmatpush1.bf16.msra.mxu0 0
        %3606 = vmatprep.subr.bf16.mxu0 0
        %3607 = vmatpush1.bf16.msra.mxu0 0
        %3608 = vmatprep.subr.bf16.mxu0 0
        %3609 = vmatpush1.bf16.msra.mxu0 0
        %3610 = vmatprep.subr.bf16.mxu0 0
        %3611 = vmatpush1.bf16.msra.mxu0 0
        %3612 = vmatprep.subr.bf16.mxu0 0
        %3613 = vmatpush1.bf16.msra.mxu0 0
        %3614 = vmatprep.subr.bf16.mxu0 0
        %3615 = vmatpush1.bf16.msra.mxu0 0
        %3616 = vmatprep.subr.bf16.mxu0 0
        %3617 = vmatpush1.bf16.msra.mxu0 0
        %3618 = vmatprep.subr.bf16.mxu0 0
        %3619 = vmatpush1.bf16.msra.mxu0 0
        %3620 = vmatprep.subr.bf16.mxu0 0
        %3621 = vmatpush1.bf16.msra.mxu0 0
        %3622 = vmatprep.subr.bf16.mxu0 0
        %3623 = vmatpush1.bf16.msra.mxu0 0
        %3624 = vmatprep.subr.bf16.mxu0 0
        %3625 = vmatpush1.bf16.msra.mxu0 0
        %3626 = vmatprep.subr.bf16.mxu0 0
        %3627 = vmatpush1.bf16.msra.mxu0 0
        %3628 = vmatprep.mubr.bf16.mxu0 0
        %3629 = vmatmul.mubr.bf16.gmra.mrb[0].mxu0 %v3594
        %v3630 = vpop.f32.mrb[0].mxu0
        %v3631 = vadd.f32 0.0, %v3630
        %v3632 = vpop.f32.mrb[0].mxu0
        %v3633 = vadd.f32 0.0, %v3632
        %v3634 = vpop.f32.mrb[0].mxu0
        %v3635 = vpop.f32.mrb[0].mxu0
        %3636 = vdwg.mxu0
        %v3641 = vunpack.c.l.b16 %v3213
        %v3642 = vunpack.c.h.b16 %v3213
        %v3643 = vunpack.c.l.b16 %v3214
        %v3644 = vunpack.c.h.b16 %v3214
        %v3645 = vunpack.c.l.b16 %v3215
        %v3646 = vunpack.c.h.b16 %v3215
        %v3647 = vunpack.c.l.b16 %v3216
        %v3648 = vunpack.c.h.b16 %v3216
        %v3649 = vpack.c.b16 %v3643, %v3641
        %v3650 = vpack.c.b16 %v3644, %v3642
        %v3651 = vpack.c.b16 %v3647, %v3645
        %v3652 = vpack.c.b16 %v3648, %v3646
        %v3658 = vsel %vm1555, %v3179, 0
        %3660 = vmatprep.subr.bf16.mxu0 %v3650
        %3661 = vmatpush1.bf16.msra.mxu0 %v3649
        %3662 = vmatprep.subr.bf16.mxu0 %v3652
        %3663 = vmatpush1.bf16.msra.mxu0 %v3651
        %3664 = vmatprep.subr.bf16.mxu0 0
        %3665 = vmatpush1.bf16.msra.mxu0 0
        %3666 = vmatprep.subr.bf16.mxu0 0
        %3667 = vmatpush1.bf16.msra.mxu0 0
        %3668 = vmatprep.subr.bf16.mxu0 0
        %3669 = vmatpush1.bf16.msra.mxu0 0
        %3670 = vmatprep.subr.bf16.mxu0 0
        %3671 = vmatpush1.bf16.msra.mxu0 0
        %3672 = vmatprep.subr.bf16.mxu0 0
        %3673 = vmatpush1.bf16.msra.mxu0 0
        %3674 = vmatprep.subr.bf16.mxu0 0
        %3675 = vmatpush1.bf16.msra.mxu0 0
        %3676 = vmatprep.subr.bf16.mxu0 0
        %3677 = vmatpush1.bf16.msra.mxu0 0
        %3678 = vmatprep.subr.bf16.mxu0 0
        %3679 = vmatpush1.bf16.msra.mxu0 0
        %3680 = vmatprep.subr.bf16.mxu0 0
        %3681 = vmatpush1.bf16.msra.mxu0 0
        %3682 = vmatprep.subr.bf16.mxu0 0
        %3683 = vmatpush1.bf16.msra.mxu0 0
        %3684 = vmatprep.subr.bf16.mxu0 0
        %3685 = vmatpush1.bf16.msra.mxu0 0
        %3686 = vmatprep.subr.bf16.mxu0 0
        %3687 = vmatpush1.bf16.msra.mxu0 0
        %3688 = vmatprep.subr.bf16.mxu0 0
        %3689 = vmatpush1.bf16.msra.mxu0 0
        %3690 = vmatprep.subr.bf16.mxu0 0
        %3691 = vmatpush1.bf16.msra.mxu0 0
        %3692 = vmatprep.mubr.bf16.mxu0 0
        %3693 = vmatmul.mubr.bf16.gmra.mrb[0].mxu0 %v3658
        %v3694 = vpop.f32.mrb[0].mxu0
        %v3695 = vadd.f32 0.0, %v3694
        %v3696 = vpop.f32.mrb[0].mxu0
        %v3697 = vadd.f32 0.0, %v3696
        %v3698 = vpop.f32.mrb[0].mxu0
        %v3699 = vpop.f32.mrb[0].mxu0
        %3700 = vdwg.mxu0
        %v3705 = vunpack.c.l.b16 %v3217
        %v3706 = vunpack.c.h.b16 %v3217
        %v3707 = vunpack.c.l.b16 %v3218
        %v3708 = vunpack.c.h.b16 %v3218
        %v3709 = vunpack.c.l.b16 %v3219
        %v3710 = vunpack.c.h.b16 %v3219
        %v3711 = vunpack.c.l.b16 %v3220
        %v3712 = vunpack.c.h.b16 %v3220
        %v3713 = vpack.c.b16 %v3707, %v3705
        %v3714 = vpack.c.b16 %v3708, %v3706
        %v3715 = vpack.c.b16 %v3711, %v3709
        %v3716 = vpack.c.b16 %v3712, %v3710
        %v3722 = vsel %vm1555, %v3180, 0
        %3724 = vmatprep.subr.bf16.mxu0 %v3714
        %3725 = vmatpush1.bf16.msra.mxu0 %v3713
        %3726 = vmatprep.subr.bf16.mxu0 %v3716
        %3727 = vmatpush1.bf16.msra.mxu0 %v3715
        %3728 = vmatprep.subr.bf16.mxu0 0
        %3729 = vmatpush1.bf16.msra.mxu0 0
        %3730 = vmatprep.subr.bf16.mxu0 0
        %3731 = vmatpush1.bf16.msra.mxu0 0
        %3732 = vmatprep.subr.bf16.mxu0 0
        %3733 = vmatpush1.bf16.msra.mxu0 0
        %3734 = vmatprep.subr.bf16.mxu0 0
        %3735 = vmatpush1.bf16.msra.mxu0 0
        %3736 = vmatprep.subr.bf16.mxu0 0
        %3737 = vmatpush1.bf16.msra.mxu0 0
        %3738 = vmatprep.subr.bf16.mxu0 0
        %3739 = vmatpush1.bf16.msra.mxu0 0
        %3740 = vmatprep.subr.bf16.mxu0 0
        %3741 = vmatpush1.bf16.msra.mxu0 0
        %3742 = vmatprep.subr.bf16.mxu0 0
        %3743 = vmatpush1.bf16.msra.mxu0 0
        %3744 = vmatprep.subr.bf16.mxu0 0
        %3745 = vmatpush1.bf16.msra.mxu0 0
        %3746 = vmatprep.subr.bf16.mxu0 0
        %3747 = vmatpush1.bf16.msra.mxu0 0
        %3748 = vmatprep.subr.bf16.mxu0 0
        %3749 = vmatpush1.bf16.msra.mxu0 0
        %3750 = vmatprep.subr.bf16.mxu0 0
        %3751 = vmatpush1.bf16.msra.mxu0 0
        %3752 = vmatprep.subr.bf16.mxu0 0
        %3753 = vmatpush1.bf16.msra.mxu0 0
        %3754 = vmatprep.subr.bf16.mxu0 0
        %3755 = vmatpush1.bf16.msra.mxu0 0
        %3756 = vmatprep.mubr.bf16.mxu0 0
        %3757 = vmatmul.mubr.bf16.gmra.mrb[0].mxu0 %v3722
        %v3758 = vpop.f32.mrb[0].mxu0
        %v3759 = vadd.f32 0.0, %v3758
        %v3760 = vpop.f32.mrb[0].mxu0
        %v3761 = vadd.f32 0.0, %v3760
        %v3762 = vpop.f32.mrb[0].mxu0
        %v3763 = vpop.f32.mrb[0].mxu0
        %3764 = vdwg.mxu0
        %v3769 = vunpack.c.l.b16 %v3221
        %v3770 = vunpack.c.h.b16 %v3221
        %v3771 = vunpack.c.l.b16 %v3222
        %v3772 = vunpack.c.h.b16 %v3222
        %v3773 = vunpack.c.l.b16 %v3223
        %v3774 = vunpack.c.h.b16 %v3223
        %v3775 = vunpack.c.l.b16 %v3224
        %v3776 = vunpack.c.h.b16 %v3224
        %v3777 = vpack.c.b16 %v3771, %v3769
        %v3778 = vpack.c.b16 %v3772, %v3770
        %v3779 = vpack.c.b16 %v3775, %v3773
        %v3780 = vpack.c.b16 %v3776, %v3774
        %v3786 = vsel %vm1555, %v3181, 0
        %3788 = vmatprep.subr.bf16.mxu0 %v3778
        %3789 = vmatpush1.bf16.msra.mxu0 %v3777
        %3790 = vmatprep.subr.bf16.mxu0 %v3780
        %3791 = vmatpush1.bf16.msra.mxu0 %v3779
        %3792 = vmatprep.subr.bf16.mxu0 0
        %3793 = vmatpush1.bf16.msra.mxu0 0
        %3794 = vmatprep.subr.bf16.mxu0 0
        %3795 = vmatpush1.bf16.msra.mxu0 0
        %3796 = vmatprep.subr.bf16.mxu0 0
        %3797 = vmatpush1.bf16.msra.mxu0 0
        %3798 = vmatprep.subr.bf16.mxu0 0
        %3799 = vmatpush1.bf16.msra.mxu0 0
        %3800 = vmatprep.subr.bf16.mxu0 0
        %3801 = vmatpush1.bf16.msra.mxu0 0
        %3802 = vmatprep.subr.bf16.mxu0 0
        %3803 = vmatpush1.bf16.msra.mxu0 0
        %3804 = vmatprep.subr.bf16.mxu0 0
        %3805 = vmatpush1.bf16.msra.mxu0 0
        %3806 = vmatprep.subr.bf16.mxu0 0
        %3807 = vmatpush1.bf16.msra.mxu0 0
        %3808 = vmatprep.subr.bf16.mxu0 0
        %3809 = vmatpush1.bf16.msra.mxu0 0
        %3810 = vmatprep.subr.bf16.mxu0 0
        %3811 = vmatpush1.bf16.msra.mxu0 0
        %3812 = vmatprep.subr.bf16.mxu0 0
        %3813 = vmatpush1.bf16.msra.mxu0 0
        %3814 = vmatprep.subr.bf16.mxu0 0
        %3815 = vmatpush1.bf16.msra.mxu0 0
        %3816 = vmatprep.subr.bf16.mxu0 0
        %3817 = vmatpush1.bf16.msra.mxu0 0
        %3818 = vmatprep.subr.bf16.mxu0 0
        %3819 = vmatpush1.bf16.msra.mxu0 0
        %3820 = vmatprep.mubr.bf16.mxu0 0
        %3821 = vmatmul.mubr.bf16.gmra.mrb[0].mxu0 %v3786
        %v3822 = vpop.f32.mrb[0].mxu0
        %v3823 = vadd.f32 0.0, %v3822
        %v3824 = vpop.f32.mrb[0].mxu0
        %v3825 = vadd.f32 0.0, %v3824
        %v3826 = vpop.f32.mrb[0].mxu0
        %v3827 = vpop.f32.mrb[0].mxu0
        %3828 = vdwg.mxu0
        %v3833 = vunpack.c.l.b16 %v3225
        %v3834 = vunpack.c.h.b16 %v3225
        %v3835 = vunpack.c.l.b16 %v3226
        %v3836 = vunpack.c.h.b16 %v3226
        %v3837 = vunpack.c.l.b16 %v3227
        %v3838 = vunpack.c.h.b16 %v3227
        %v3839 = vunpack.c.l.b16 %v3228
        %v3840 = vunpack.c.h.b16 %v3228
        %v3841 = vpack.c.b16 %v3835, %v3833
        %v3842 = vpack.c.b16 %v3836, %v3834
        %v3843 = vpack.c.b16 %v3839, %v3837
        %v3844 = vpack.c.b16 %v3840, %v3838
        %v3850 = vsel %vm1555, %v3182, 0
        %3852 = vmatprep.subr.bf16.mxu0 %v3842
        %3853 = vmatpush1.bf16.msra.mxu0 %v3841
        %3854 = vmatprep.subr.bf16.mxu0 %v3844
        %3855 = vmatpush1.bf16.msra.mxu0 %v3843
        %3856 = vmatprep.subr.bf16.mxu0 0
        %3857 = vmatpush1.bf16.msra.mxu0 0
        %3858 = vmatprep.subr.bf16.mxu0 0
        %3859 = vmatpush1.bf16.msra.mxu0 0
        %3860 = vmatprep.subr.bf16.mxu0 0
        %3861 = vmatpush1.bf16.msra.mxu0 0
        %3862 = vmatprep.subr.bf16.mxu0 0
        %3863 = vmatpush1.bf16.msra.mxu0 0
        %3864 = vmatprep.subr.bf16.mxu0 0
        %3865 = vmatpush1.bf16.msra.mxu0 0
        %3866 = vmatprep.subr.bf16.mxu0 0
        %3867 = vmatpush1.bf16.msra.mxu0 0
        %3868 = vmatprep.subr.bf16.mxu0 0
        %3869 = vmatpush1.bf16.msra.mxu0 0
        %3870 = vmatprep.subr.bf16.mxu0 0
        %3871 = vmatpush1.bf16.msra.mxu0 0
        %3872 = vmatprep.subr.bf16.mxu0 0
        %3873 = vmatpush1.bf16.msra.mxu0 0
        %3874 = vmatprep.subr.bf16.mxu0 0
        %3875 = vmatpush1.bf16.msra.mxu0 0
        %3876 = vmatprep.subr.bf16.mxu0 0
        %3877 = vmatpush1.bf16.msra.mxu0 0
        %3878 = vmatprep.subr.bf16.mxu0 0
        %3879 = vmatpush1.bf16.msra.mxu0 0
        %3880 = vmatprep.subr.bf16.mxu0 0
        %3881 = vmatpush1.bf16.msra.mxu0 0
        %3882 = vmatprep.subr.bf16.mxu0 0
        %3883 = vmatpush1.bf16.msra.mxu0 0
        %3884 = vmatprep.mubr.bf16.mxu0 0
        %3885 = vmatmul.mubr.bf16.gmra.mrb[0].mxu0 %v3850
        %v3886 = vpop.f32.mrb[0].mxu0
        %v3887 = vadd.f32 0.0, %v3886
        %v3888 = vpop.f32.mrb[0].mxu0
        %v3889 = vadd.f32 0.0, %v3888
        %v3890 = vpop.f32.mrb[0].mxu0
        %v3891 = vpop.f32.mrb[0].mxu0
        %3892 = vdwg.mxu0
        %v3897 = vunpack.c.l.b16 %v3229
        %v3898 = vunpack.c.h.b16 %v3229
        %v3899 = vunpack.c.l.b16 %v3230
        %v3900 = vunpack.c.h.b16 %v3230
        %v3901 = vunpack.c.l.b16 %v3231
        %v3902 = vunpack.c.h.b16 %v3231
        %v3903 = vunpack.c.l.b16 %v3232
        %v3904 = vunpack.c.h.b16 %v3232
        %v3905 = vpack.c.b16 %v3899, %v3897
        %v3906 = vpack.c.b16 %v3900, %v3898
        %v3907 = vpack.c.b16 %v3903, %v3901
        %v3908 = vpack.c.b16 %v3904, %v3902
        %v3914 = vsel %vm1555, %v3183, 0
        %3916 = vmatprep.subr.bf16.mxu0 %v3906
        %3917 = vmatpush1.bf16.msra.mxu0 %v3905
        %3918 = vmatprep.subr.bf16.mxu0 %v3908
        %3919 = vmatpush1.bf16.msra.mxu0 %v3907
        %3920 = vmatprep.subr.bf16.mxu0 0
        %3921 = vmatpush1.bf16.msra.mxu0 0
        %3922 = vmatprep.subr.bf16.mxu0 0
        %3923 = vmatpush1.bf16.msra.mxu0 0
        %3924 = vmatprep.subr.bf16.mxu0 0
        %3925 = vmatpush1.bf16.msra.mxu0 0
        %3926 = vmatprep.subr.bf16.mxu0 0
        %3927 = vmatpush1.bf16.msra.mxu0 0
        %3928 = vmatprep.subr.bf16.mxu0 0
        %3929 = vmatpush1.bf16.msra.mxu0 0
        %3930 = vmatprep.subr.bf16.mxu0 0
        %3931 = vmatpush1.bf16.msra.mxu0 0
        %3932 = vmatprep.subr.bf16.mxu0 0
        %3933 = vmatpush1.bf16.msra.mxu0 0
        %3934 = vmatprep.subr.bf16.mxu0 0
        %3935 = vmatpush1.bf16.msra.mxu0 0
        %3936 = vmatprep.subr.bf16.mxu0 0
        %3937 = vmatpush1.bf16.msra.mxu0 0
        %3938 = vmatprep.subr.bf16.mxu0 0
        %3939 = vmatpush1.bf16.msra.mxu0 0
        %3940 = vmatprep.subr.bf16.mxu0 0
        %3941 = vmatpush1.bf16.msra.mxu0 0
        %3942 = vmatprep.subr.bf16.mxu0 0
        %3943 = vmatpush1.bf16.msra.mxu0 0
        %3944 = vmatprep.subr.bf16.mxu0 0
        %3945 = vmatpush1.bf16.msra.mxu0 0
        %3946 = vmatprep.subr.bf16.mxu0 0
        %3947 = vmatpush1.bf16.msra.mxu0 0
        %3948 = vmatprep.mubr.bf16.mxu0 0
        %3949 = vmatmul.mubr.bf16.gmra.mrb[0].mxu0 %v3914
        %v3950 = vpop.f32.mrb[0].mxu0
        %v3951 = vadd.f32 0.0, %v3950
        %v3952 = vpop.f32.mrb[0].mxu0
        %v3953 = vadd.f32 0.0, %v3952
        %v3954 = vpop.f32.mrb[0].mxu0
        %v3955 = vpop.f32.mrb[0].mxu0
        %3956 = vdwg.mxu0
        %v3961 = vunpack.c.l.b16 %v3233
        %v3962 = vunpack.c.h.b16 %v3233
        %v3963 = vunpack.c.l.b16 %v3234
        %v3964 = vunpack.c.h.b16 %v3234
        %v3965 = vunpack.c.l.b16 %v3235
        %v3966 = vunpack.c.h.b16 %v3235
        %v3967 = vunpack.c.l.b16 %v3236
        %v3968 = vunpack.c.h.b16 %v3236
        %v3969 = vpack.c.b16 %v3963, %v3961
        %v3970 = vpack.c.b16 %v3964, %v3962
        %v3971 = vpack.c.b16 %v3967, %v3965
        %v3972 = vpack.c.b16 %v3968, %v3966
        %v3978 = vsel %vm1555, %v3184, 0
        %3980 = vmatprep.subr.bf16.mxu0 %v3970
        %3981 = vmatpush1.bf16.msra.mxu0 %v3969
        %3982 = vmatprep.subr.bf16.mxu0 %v3972
        %3983 = vmatpush1.bf16.msra.mxu0 %v3971
        %3984 = vmatprep.subr.bf16.mxu0 0
        %3985 = vmatpush1.bf16.msra.mxu0 0
        %3986 = vmatprep.subr.bf16.mxu0 0
        %3987 = vmatpush1.bf16.msra.mxu0 0
        %3988 = vmatprep.subr.bf16.mxu0 0
        %3989 = vmatpush1.bf16.msra.mxu0 0
        %3990 = vmatprep.subr.bf16.mxu0 0
        %3991 = vmatpush1.bf16.msra.mxu0 0
        %3992 = vmatprep.subr.bf16.mxu0 0
        %3993 = vmatpush1.bf16.msra.mxu0 0
        %3994 = vmatprep.subr.bf16.mxu0 0
        %3995 = vmatpush1.bf16.msra.mxu0 0
        %3996 = vmatprep.subr.bf16.mxu0 0
        %3997 = vmatpush1.bf16.msra.mxu0 0
        %3998 = vmatprep.subr.bf16.mxu0 0
        %3999 = vmatpush1.bf16.msra.mxu0 0
        %4000 = vmatprep.subr.bf16.mxu0 0
        %4001 = vmatpush1.bf16.msra.mxu0 0
        %4002 = vmatprep.subr.bf16.mxu0 0
        %4003 = vmatpush1.bf16.msra.mxu0 0
        %4004 = vmatprep.subr.bf16.mxu0 0
        %4005 = vmatpush1.bf16.msra.mxu0 0
        %4006 = vmatprep.subr.bf16.mxu0 0
        %4007 = vmatpush1.bf16.msra.mxu0 0
        %4008 = vmatprep.subr.bf16.mxu0 0
        %4009 = vmatpush1.bf16.msra.mxu0 0
        %4010 = vmatprep.subr.bf16.mxu0 0
        %4011 = vmatpush1.bf16.msra.mxu0 0
        %4012 = vmatprep.mubr.bf16.mxu0 0
        %4013 = vmatmul.mubr.bf16.gmra.mrb[0].mxu0 %v3978
        %v4014 = vpop.f32.mrb[0].mxu0
        %v4015 = vadd.f32 0.0, %v4014
        %v4016 = vpop.f32.mrb[0].mxu0
        %v4017 = vadd.f32 0.0, %v4016
        %v4018 = vpop.f32.mrb[0].mxu0
        %v4019 = vpop.f32.mrb[0].mxu0
        %4020 = vdwg.mxu0
        %v4025 = vunpack.c.l.b16 %v3237
        %v4026 = vunpack.c.h.b16 %v3237
        %v4027 = vunpack.c.l.b16 %v3238
        %v4028 = vunpack.c.h.b16 %v3238
        %v4029 = vunpack.c.l.b16 %v3239
        %v4030 = vunpack.c.h.b16 %v3239
        %v4031 = vunpack.c.l.b16 %v3240
        %v4032 = vunpack.c.h.b16 %v3240
        %v4033 = vpack.c.b16 %v4027, %v4025
        %v4034 = vpack.c.b16 %v4028, %v4026
        %v4035 = vpack.c.b16 %v4031, %v4029
        %v4036 = vpack.c.b16 %v4032, %v4030
        %v4042 = vsel %vm1555, %v3185, 0
        %4044 = vmatprep.subr.bf16.mxu0 %v4034
        %4045 = vmatpush1.bf16.msra.mxu0 %v4033
        %4046 = vmatprep.subr.bf16.mxu0 %v4036
        %4047 = vmatpush1.bf16.msra.mxu0 %v4035
        %4048 = vmatprep.subr.bf16.mxu0 0
        %4049 = vmatpush1.bf16.msra.mxu0 0
        %4050 = vmatprep.subr.bf16.mxu0 0
        %4051 = vmatpush1.bf16.msra.mxu0 0
        %4052 = vmatprep.subr.bf16.mxu0 0
        %4053 = vmatpush1.bf16.msra.mxu0 0
        %4054 = vmatprep.subr.bf16.mxu0 0
        %4055 = vmatpush1.bf16.msra.mxu0 0
        %4056 = vmatprep.subr.bf16.mxu0 0
        %4057 = vmatpush1.bf16.msra.mxu0 0
        %4058 = vmatprep.subr.bf16.mxu0 0
        %4059 = vmatpush1.bf16.msra.mxu0 0
        %4060 = vmatprep.subr.bf16.mxu0 0
        %4061 = vmatpush1.bf16.msra.mxu0 0
        %4062 = vmatprep.subr.bf16.mxu0 0
        %4063 = vmatpush1.bf16.msra.mxu0 0
        %4064 = vmatprep.subr.bf16.mxu0 0
        %4065 = vmatpush1.bf16.msra.mxu0 0
        %4066 = vmatprep.subr.bf16.mxu0 0
        %4067 = vmatpush1.bf16.msra.mxu0 0
        %4068 = vmatprep.subr.bf16.mxu0 0
        %4069 = vmatpush1.bf16.msra.mxu0 0
        %4070 = vmatprep.subr.bf16.mxu0 0
        %4071 = vmatpush1.bf16.msra.mxu0 0
        %4072 = vmatprep.subr.bf16.mxu0 0
        %4073 = vmatpush1.bf16.msra.mxu0 0
        %4074 = vmatprep.subr.bf16.mxu0 0
        %4075 = vmatpush1.bf16.msra.mxu0 0
        %4076 = vmatprep.mubr.bf16.mxu0 0
        %4077 = vmatmul.mubr.bf16.gmra.mrb[0].mxu0 %v4042
        %v4078 = vpop.f32.mrb[0].mxu0
        %v4079 = vadd.f32 0.0, %v4078
        %v4080 = vpop.f32.mrb[0].mxu0
        %v4081 = vadd.f32 0.0, %v4080
        %v4082 = vpop.f32.mrb[0].mxu0
        %v4083 = vpop.f32.mrb[0].mxu0
        %4084 = vdwg.mxu0
        %v4089 = vunpack.c.l.b16 %v3241
        %v4090 = vunpack.c.h.b16 %v3241
        %v4091 = vunpack.c.l.b16 %v3242
        %v4092 = vunpack.c.h.b16 %v3242
        %v4093 = vunpack.c.l.b16 %v3243
        %v4094 = vunpack.c.h.b16 %v3243
        %v4095 = vunpack.c.l.b16 %v3244
        %v4096 = vunpack.c.h.b16 %v3244
        %v4097 = vpack.c.b16 %v4091, %v4089
        %v4098 = vpack.c.b16 %v4092, %v4090
        %v4099 = vpack.c.b16 %v4095, %v4093
        %v4100 = vpack.c.b16 %v4096, %v4094
        %v4106 = vsel %vm1555, %v3186, 0
        %4108 = vmatprep.subr.bf16.mxu0 %v4098
        %4109 = vmatpush1.bf16.msra.mxu0 %v4097
        %4110 = vmatprep.subr.bf16.mxu0 %v4100
        %4111 = vmatpush1.bf16.msra.mxu0 %v4099
        %4112 = vmatprep.subr.bf16.mxu0 0
        %4113 = vmatpush1.bf16.msra.mxu0 0
        %4114 = vmatprep.subr.bf16.mxu0 0
        %4115 = vmatpush1.bf16.msra.mxu0 0
        %4116 = vmatprep.subr.bf16.mxu0 0
        %4117 = vmatpush1.bf16.msra.mxu0 0
        %4118 = vmatprep.subr.bf16.mxu0 0
        %4119 = vmatpush1.bf16.msra.mxu0 0
        %4120 = vmatprep.subr.bf16.mxu0 0
        %4121 = vmatpush1.bf16.msra.mxu0 0
        %4122 = vmatprep.subr.bf16.mxu0 0
        %4123 = vmatpush1.bf16.msra.mxu0 0
        %4124 = vmatprep.subr.bf16.mxu0 0
        %4125 = vmatpush1.bf16.msra.mxu0 0
        %4126 = vmatprep.subr.bf16.mxu0 0
        %4127 = vmatpush1.bf16.msra.mxu0 0
        %4128 = vmatprep.subr.bf16.mxu0 0
        %4129 = vmatpush1.bf16.msra.mxu0 0
        %4130 = vmatprep.subr.bf16.mxu0 0
        %4131 = vmatpush1.bf16.msra.mxu0 0
        %4132 = vmatprep.subr.bf16.mxu0 0
        %4133 = vmatpush1.bf16.msra.mxu0 0
        %4134 = vmatprep.subr.bf16.mxu0 0
        %4135 = vmatpush1.bf16.msra.mxu0 0
        %4136 = vmatprep.subr.bf16.mxu0 0
        %4137 = vmatpush1.bf16.msra.mxu0 0
        %4138 = vmatprep.subr.bf16.mxu0 0
        %4139 = vmatpush1.bf16.msra.mxu0 0
        %4140 = vmatprep.mubr.bf16.mxu0 0
        %4141 = vmatmul.mubr.bf16.gmra.mrb[0].mxu0 %v4106
        %v4142 = vpop.f32.mrb[0].mxu0
        %v4143 = vadd.f32 0.0, %v4142
        %v4144 = vpop.f32.mrb[0].mxu0
        %v4145 = vadd.f32 0.0, %v4144
        %v4146 = vpop.f32.mrb[0].mxu0
        %v4147 = vpop.f32.mrb[0].mxu0
        %4148 = vdwg.mxu0
        %v4153 = vunpack.c.l.b16 %v3245
        %v4154 = vunpack.c.h.b16 %v3245
        %v4155 = vunpack.c.l.b16 %v3246
        %v4156 = vunpack.c.h.b16 %v3246
        %v4157 = vunpack.c.l.b16 %v3247
        %v4158 = vunpack.c.h.b16 %v3247
        %v4159 = vunpack.c.l.b16 %v3248
        %v4160 = vunpack.c.h.b16 %v3248
        %v4161 = vpack.c.b16 %v4155, %v4153
        %v4162 = vpack.c.b16 %v4156, %v4154
        %v4163 = vpack.c.b16 %v4159, %v4157
        %v4164 = vpack.c.b16 %v4160, %v4158
        %v4170 = vsel %vm1555, %v3187, 0
        %4172 = vmatprep.subr.bf16.mxu0 %v4162
        %4173 = vmatpush1.bf16.msra.mxu0 %v4161
        %4174 = vmatprep.subr.bf16.mxu0 %v4164
        %4175 = vmatpush1.bf16.msra.mxu0 %v4163
        %4176 = vmatprep.subr.bf16.mxu0 0
        %4177 = vmatpush1.bf16.msra.mxu0 0
        %4178 = vmatprep.subr.bf16.mxu0 0
        %4179 = vmatpush1.bf16.msra.mxu0 0
        %4180 = vmatprep.subr.bf16.mxu0 0
        %4181 = vmatpush1.bf16.msra.mxu0 0
        %4182 = vmatprep.subr.bf16.mxu0 0
        %4183 = vmatpush1.bf16.msra.mxu0 0
        %4184 = vmatprep.subr.bf16.mxu0 0
        %4185 = vmatpush1.bf16.msra.mxu0 0
        %4186 = vmatprep.subr.bf16.mxu0 0
        %4187 = vmatpush1.bf16.msra.mxu0 0
        %4188 = vmatprep.subr.bf16.mxu0 0
        %4189 = vmatpush1.bf16.msra.mxu0 0
        %4190 = vmatprep.subr.bf16.mxu0 0
        %4191 = vmatpush1.bf16.msra.mxu0 0
        %4192 = vmatprep.subr.bf16.mxu0 0
        %4193 = vmatpush1.bf16.msra.mxu0 0
        %4194 = vmatprep.subr.bf16.mxu0 0
        %4195 = vmatpush1.bf16.msra.mxu0 0
        %4196 = vmatprep.subr.bf16.mxu0 0
        %4197 = vmatpush1.bf16.msra.mxu0 0
        %4198 = vmatprep.subr.bf16.mxu0 0
        %4199 = vmatpush1.bf16.msra.mxu0 0
        %4200 = vmatprep.subr.bf16.mxu0 0
        %4201 = vmatpush1.bf16.msra.mxu0 0
        %4202 = vmatprep.subr.bf16.mxu0 0
        %4203 = vmatpush1.bf16.msra.mxu0 0
        %4204 = vmatprep.mubr.bf16.mxu0 0
        %4205 = vmatmul.mubr.bf16.gmra.mrb[0].mxu0 %v4170
        %v4206 = vpop.f32.mrb[0].mxu0
        %v4207 = vadd.f32 0.0, %v4206
        %v4208 = vpop.f32.mrb[0].mxu0
        %v4209 = vadd.f32 0.0, %v4208
        %v4210 = vpop.f32.mrb[0].mxu0
        %v4211 = vpop.f32.mrb[0].mxu0
        %4212 = vdwg.mxu0
        %v4217 = vunpack.c.l.b16 %v3249
        %v4218 = vunpack.c.h.b16 %v3249
        %v4219 = vunpack.c.l.b16 %v3250
        %v4220 = vunpack.c.h.b16 %v3250
        %v4221 = vunpack.c.l.b16 %v3251
        %v4222 = vunpack.c.h.b16 %v3251
        %v4223 = vunpack.c.l.b16 %v3252
        %v4224 = vunpack.c.h.b16 %v3252
        %v4225 = vpack.c.b16 %v4219, %v4217
        %v4226 = vpack.c.b16 %v4220, %v4218
        %v4227 = vpack.c.b16 %v4223, %v4221
        %v4228 = vpack.c.b16 %v4224, %v4222
        %v4234 = vsel %vm1555, %v3188, 0
        %4236 = vmatprep.subr.bf16.mxu0 %v4226
        %4237 = vmatpush1.bf16.msra.mxu0 %v4225
        %4238 = vmatprep.subr.bf16.mxu0 %v4228
        %4239 = vmatpush1.bf16.msra.mxu0 %v4227
        %4240 = vmatprep.subr.bf16.mxu0 0
        %4241 = vmatpush1.bf16.msra.mxu0 0
        %4242 = vmatprep.subr.bf16.mxu0 0
        %4243 = vmatpush1.bf16.msra.mxu0 0
        %4244 = vmatprep.subr.bf16.mxu0 0
        %4245 = vmatpush1.bf16.msra.mxu0 0
        %4246 = vmatprep.subr.bf16.mxu0 0
        %4247 = vmatpush1.bf16.msra.mxu0 0
        %4248 = vmatprep.subr.bf16.mxu0 0
        %4249 = vmatpush1.bf16.msra.mxu0 0
        %4250 = vmatprep.subr.bf16.mxu0 0
        %4251 = vmatpush1.bf16.msra.mxu0 0
        %4252 = vmatprep.subr.bf16.mxu0 0
        %4253 = vmatpush1.bf16.msra.mxu0 0
        %4254 = vmatprep.subr.bf16.mxu0 0
        %4255 = vmatpush1.bf16.msra.mxu0 0
        %4256 = vmatprep.subr.bf16.mxu0 0
        %4257 = vmatpush1.bf16.msra.mxu0 0
        %4258 = vmatprep.subr.bf16.mxu0 0
        %4259 = vmatpush1.bf16.msra.mxu0 0
        %4260 = vmatprep.subr.bf16.mxu0 0
        %4261 = vmatpush1.bf16.msra.mxu0 0
        %4262 = vmatprep.subr.bf16.mxu0 0
        %4263 = vmatpush1.bf16.msra.mxu0 0
        %4264 = vmatprep.subr.bf16.mxu0 0
        %4265 = vmatpush1.bf16.msra.mxu0 0
        %4266 = vmatprep.subr.bf16.mxu0 0
        %4267 = vmatpush1.bf16.msra.mxu0 0
        %4268 = vmatprep.mubr.bf16.mxu0 0
        %4269 = vmatmul.mubr.bf16.gmra.mrb[0].mxu0 %v4234
        %v4270 = vpop.f32.mrb[0].mxu0
        %v4271 = vadd.f32 0.0, %v4270
        %v4272 = vpop.f32.mrb[0].mxu0
        %v4273 = vadd.f32 0.0, %v4272
        %v4274 = vpop.f32.mrb[0].mxu0
        %v4275 = vpop.f32.mrb[0].mxu0
        %4276 = vdwg.mxu0
        %v4277 = vadd.f32 %v3311, %v3375
        %v4278 = vadd.f32 %v4277, %v3439
        %v4279 = vadd.f32 %v4278, %v3503
        %v4280 = vadd.f32 %v4279, %v3567
        %v4281 = vadd.f32 %v4280, %v3631
        %v4282 = vadd.f32 %v4281, %v3695
        %v4283 = vadd.f32 %v4282, %v3759
        %v4284 = vadd.f32 %v3313, %v3377
        %v4285 = vadd.f32 %v4284, %v3441
        %v4286 = vadd.f32 %v4285, %v3505
        %v4287 = vadd.f32 %v4286, %v3569
        %v4288 = vadd.f32 %v4287, %v3633
        %v4289 = vadd.f32 %v4288, %v3697
        %v4290 = vadd.f32 %v4289, %v3761
        %v4291 = vadd.f32 %v3823, %v3887
        %v4292 = vadd.f32 %v4291, %v3951
        %v4293 = vadd.f32 %v4292, %v4015
        %v4294 = vadd.f32 %v4293, %v4079
        %v4295 = vadd.f32 %v4294, %v4143
        %v4296 = vadd.f32 %v4295, %v4207
        %v4297 = vadd.f32 %v4296, %v4271
        %v4298 = vadd.f32 %v3825, %v3889
        %v4299 = vadd.f32 %v4298, %v3953
        %v4300 = vadd.f32 %v4299, %v4017
        %v4301 = vadd.f32 %v4300, %v4081
        %v4302 = vadd.f32 %v4301, %v4145
        %v4303 = vadd.f32 %v4302, %v4209
        %v4304 = vadd.f32 %v4303, %v4273
        %v4305 = vlaneseq
        %v4306 = vshrl.u32 %v4305, 7
        %v4307 = vsub.s32 3, %v4306
        %v4308 = vrot.slane %v646, %v4307
        %v4309 = vlaneseq
        %v4310 = vshrl.u32 %v4309, 7
        %v4311 = vsub.s32 3, %v4310
        %v4312 = vrot.slane %v647, %v4311
        %v4313 = vadd.f32 %v4283, %v4308
        %v4314 = vadd.f32 %v4290, %v4312
        %v4315 = vadd.f32 %v4297, %v4308
        %v4316 = vadd.f32 %v4304, %v4312
        %v4317 = vadd.f32 %v650, %v4313
        %v4318 = vadd.f32 %v651, %v4314
        %v4319 = vadd.f32 %v652, %v4315
        %v4320 = vadd.f32 %v653, %v4316
        %v4321 = vadd.f32 %v4317, %v4318
        %4322 = vadd.xlane.f32.xlu0 %v4321
        %v4323 = vpop.xlane.xlu0 %4322
        %v4324 = vadd.f32 %v4319, %v4320
        %4325 = vadd.xlane.f32.xlu0 %v4324
        %v4326 = vpop.xlane.xlu0 %4325
        %v4327 = vrcp.pop 256.0
        %v4328 = vmul.f32 %v4323, %v4327
        %v4329 = vmul.f32 %v4326, %v4327
        %v4330 = vsub.f32 %v4317, %v4328
        %v4331 = vsub.f32 %v4318, %v4328
        %v4332 = vsub.f32 %v4319, %v4329
        %v4333 = vsub.f32 %v4320, %v4329
        %v4334 = vmul.f32 %v4330, %v4330
        %v4335 = vmul.f32 %v4331, %v4331
        %v4336 = vmul.f32 %v4332, %v4332
        %v4337 = vmul.f32 %v4333, %v4333
        %v4338 = vadd.f32 %v4334, %v4335
        %4339 = vadd.xlane.f32.xlu0 %v4338
        %v4340 = vpop.xlane.xlu0 %4339
        %v4341 = vadd.f32 %v4336, %v4337
        %4342 = vadd.xlane.f32.xlu0 %v4341
        %v4343 = vpop.xlane.xlu0 %4342
        %v4344 = vmul.f32 %v4340, %v4327
        %v4345 = vmul.f32 %v4343, %v4327
        %v4346 = vadd.f32 %v4344, 1e-05
        %v4347 = vadd.f32 %v4345, 1e-05
        %v4348 = vrsqrt.pop %v4346
        %v4349 = vrsqrt.pop %v4347
        %v4350 = vmul.f32 %v4330, %v4348
        %v4351 = vmul.f32 %v4331, %v4348
        %v4352 = vmul.f32 %v4332, %v4349
        %v4353 = vmul.f32 %v4333, %v4349
        %v4354 = vlaneseq
        %v4355 = vshrl.u32 %v4354, 7
        %v4356 = vsub.s32 4, %v4355
        %v4357 = vrot.slane %v646, %v4356
        %v4358 = vlaneseq
        %v4359 = vshrl.u32 %v4358, 7
        %v4360 = vsub.s32 4, %v4359
        %v4361 = vrot.slane %v647, %v4360
        %v4362 = vmul.f32 %v4350, %v4357
        %v4363 = vmul.f32 %v4351, %v4361
        %v4364 = vmul.f32 %v4352, %v4357
        %v4365 = vmul.f32 %v4353, %v4361
        %v4366 = vlaneseq
        %v4367 = vshrl.u32 %v4366, 7
        %v4368 = vsub.s32 5, %v4367
        %v4369 = vrot.slane %v646, %v4368
        %v4370 = vlaneseq
        %v4371 = vshrl.u32 %v4370, 7
        %v4372 = vsub.s32 5, %v4371
        %v4373 = vrot.slane %v647, %v4372
        %v4374 = vadd.f32 %v4362, %v4369
        %v4375 = vadd.f32 %v4363, %v4373
        %v4376 = vadd.f32 %v4364, %v4369
        %v4377 = vadd.f32 %v4365, %v4373
        %v4378 = vpack.c.bf16 %v4376, %v4374
        %v4379 = vpack.c.bf16 %v4377, %v4375
        %v4380 = vld [vmem:[#allocation16] sm:$0xff]
        %v4381 = vld [vmem:[#allocation16 + $0x8] sm:$0xff]
        %v4382 = vld [vmem:[#allocation16 + $0x10] sm:$0xff]
        %v4383 = vld [vmem:[#allocation16 + $0x18] sm:$0xff]
        %v4384 = vld [vmem:[#allocation16 + $0x20] sm:$0xff]
        %v4385 = vld [vmem:[#allocation16 + $0x28] sm:$0xff]
        %v4386 = vld [vmem:[#allocation16 + $0x30] sm:$0xff]
        %v4387 = vld [vmem:[#allocation16 + $0x38] sm:$0xff]
        %v4388 = vld [vmem:[#allocation16 + $0x40] sm:$0xff]
        %v4389 = vld [vmem:[#allocation16 + $0x48] sm:$0xff]
        %v4390 = vld [vmem:[#allocation16 + $0x50] sm:$0xff]
        %v4391 = vld [vmem:[#allocation16 + $0x58] sm:$0xff]
        %v4392 = vld [vmem:[#allocation16 + $0x60] sm:$0xff]
        %v4393 = vld [vmem:[#allocation16 + $0x68] sm:$0xff]
        %v4394 = vld [vmem:[#allocation16 + $0x70] sm:$0xff]
        %v4395 = vld [vmem:[#allocation16 + $0x78] sm:$0xff]
        %v4396 = vld [vmem:[#allocation16 + $0x80] sm:$0xff]
        %v4397 = vld [vmem:[#allocation16 + $0x88] sm:$0xff]
        %v4398 = vld [vmem:[#allocation16 + $0x90] sm:$0xff]
        %v4399 = vld [vmem:[#allocation16 + $0x98] sm:$0xff]
        %v4400 = vld [vmem:[#allocation16 + $0xa0] sm:$0xff]
        %v4401 = vld [vmem:[#allocation16 + $0xa8] sm:$0xff]
        %v4402 = vld [vmem:[#allocation16 + $0xb0] sm:$0xff]
        %v4403 = vld [vmem:[#allocation16 + $0xb8] sm:$0xff]
        %v4404 = vld [vmem:[#allocation16 + $0xc0] sm:$0xff]
        %v4405 = vld [vmem:[#allocation16 + $0xc8] sm:$0xff]
        %v4406 = vld [vmem:[#allocation16 + $0xd0] sm:$0xff]
        %v4407 = vld [vmem:[#allocation16 + $0xd8] sm:$0xff]
        %v4408 = vld [vmem:[#allocation16 + $0xe0] sm:$0xff]
        %v4409 = vld [vmem:[#allocation16 + $0xe8] sm:$0xff]
        %v4410 = vld [vmem:[#allocation16 + $0xf0] sm:$0xff]
        %v4411 = vld [vmem:[#allocation16 + $0xf8] sm:$0xff]
        %v4412 = vld [vmem:[#allocation16 + $0x100] sm:$0xff]
        %v4413 = vld [vmem:[#allocation16 + $0x108] sm:$0xff]
        %v4414 = vld [vmem:[#allocation16 + $0x110] sm:$0xff]
        %v4415 = vld [vmem:[#allocation16 + $0x118] sm:$0xff]
        %v4416 = vld [vmem:[#allocation16 + $0x120] sm:$0xff]
        %v4417 = vld [vmem:[#allocation16 + $0x128] sm:$0xff]
        %v4418 = vld [vmem:[#allocation16 + $0x130] sm:$0xff]
        %v4419 = vld [vmem:[#allocation16 + $0x138] sm:$0xff]
        %v4420 = vld [vmem:[#allocation16 + $0x140] sm:$0xff]
        %v4421 = vld [vmem:[#allocation16 + $0x148] sm:$0xff]
        %v4422 = vld [vmem:[#allocation16 + $0x150] sm:$0xff]
        %v4423 = vld [vmem:[#allocation16 + $0x158] sm:$0xff]
        %v4424 = vld [vmem:[#allocation16 + $0x160] sm:$0xff]
        %v4425 = vld [vmem:[#allocation16 + $0x168] sm:$0xff]
        %v4426 = vld [vmem:[#allocation16 + $0x170] sm:$0xff]
        %v4427 = vld [vmem:[#allocation16 + $0x178] sm:$0xff]
        %v4428 = vld [vmem:[#allocation16 + $0x180] sm:$0xff]
        %v4429 = vld [vmem:[#allocation16 + $0x188] sm:$0xff]
        %v4430 = vld [vmem:[#allocation16 + $0x190] sm:$0xff]
        %v4431 = vld [vmem:[#allocation16 + $0x198] sm:$0xff]
        %v4432 = vld [vmem:[#allocation16 + $0x1a0] sm:$0xff]
        %v4433 = vld [vmem:[#allocation16 + $0x1a8] sm:$0xff]
        %v4434 = vld [vmem:[#allocation16 + $0x1b0] sm:$0xff]
        %v4435 = vld [vmem:[#allocation16 + $0x1b8] sm:$0xff]
        %v4436 = vld [vmem:[#allocation16 + $0x1c0] sm:$0xff]
        %v4437 = vld [vmem:[#allocation16 + $0x1c8] sm:$0xff]
        %v4438 = vld [vmem:[#allocation16 + $0x1d0] sm:$0xff]
        %v4439 = vld [vmem:[#allocation16 + $0x1d8] sm:$0xff]
        %v4440 = vld [vmem:[#allocation16 + $0x1e0] sm:$0xff]
        %v4441 = vld [vmem:[#allocation16 + $0x1e8] sm:$0xff]
        %v4442 = vld [vmem:[#allocation16 + $0x1f0] sm:$0xff]
        %v4443 = vld [vmem:[#allocation16 + $0x1f8] sm:$0xff]
        %v4444 = vld [vmem:[#allocation16 + $0x200] sm:$0xff]
        %v4445 = vld [vmem:[#allocation16 + $0x208] sm:$0xff]
        %v4446 = vld [vmem:[#allocation16 + $0x210] sm:$0xff]
        %v4447 = vld [vmem:[#allocation16 + $0x218] sm:$0xff]
        %v4448 = vld [vmem:[#allocation16 + $0x220] sm:$0xff]
        %v4449 = vld [vmem:[#allocation16 + $0x228] sm:$0xff]
        %v4450 = vld [vmem:[#allocation16 + $0x230] sm:$0xff]
        %v4451 = vld [vmem:[#allocation16 + $0x238] sm:$0xff]
        %v4452 = vld [vmem:[#allocation16 + $0x240] sm:$0xff]
        %v4453 = vld [vmem:[#allocation16 + $0x248] sm:$0xff]
        %v4454 = vld [vmem:[#allocation16 + $0x250] sm:$0xff]
        %v4455 = vld [vmem:[#allocation16 + $0x258] sm:$0xff]
        %v4456 = vld [vmem:[#allocation16 + $0x260] sm:$0xff]
        %v4457 = vld [vmem:[#allocation16 + $0x268] sm:$0xff]
        %v4458 = vld [vmem:[#allocation16 + $0x270] sm:$0xff]
        %v4459 = vld [vmem:[#allocation16 + $0x278] sm:$0xff]
        %v4460 = vld [vmem:[#allocation16 + $0x280] sm:$0xff]
        %v4461 = vld [vmem:[#allocation16 + $0x288] sm:$0xff]
        %v4462 = vld [vmem:[#allocation16 + $0x290] sm:$0xff]
        %v4463 = vld [vmem:[#allocation16 + $0x298] sm:$0xff]
        %v4464 = vld [vmem:[#allocation16 + $0x2a0] sm:$0xff]
        %v4465 = vld [vmem:[#allocation16 + $0x2a8] sm:$0xff]
        %v4466 = vld [vmem:[#allocation16 + $0x2b0] sm:$0xff]
        %v4467 = vld [vmem:[#allocation16 + $0x2b8] sm:$0xff]
        %v4468 = vld [vmem:[#allocation16 + $0x2c0] sm:$0xff]
        %v4469 = vld [vmem:[#allocation16 + $0x2c8] sm:$0xff]
        %v4470 = vld [vmem:[#allocation16 + $0x2d0] sm:$0xff]
        %v4471 = vld [vmem:[#allocation16 + $0x2d8] sm:$0xff]
        %v4472 = vld [vmem:[#allocation16 + $0x2e0] sm:$0xff]
        %v4473 = vld [vmem:[#allocation16 + $0x2e8] sm:$0xff]
        %v4474 = vld [vmem:[#allocation16 + $0x2f0] sm:$0xff]
        %v4475 = vld [vmem:[#allocation16 + $0x2f8] sm:$0xff]
        %v4476 = vld [vmem:[#allocation16 + $0x300] sm:$0xff]
        %v4477 = vld [vmem:[#allocation16 + $0x308] sm:$0xff]
        %v4478 = vld [vmem:[#allocation16 + $0x310] sm:$0xff]
        %v4479 = vld [vmem:[#allocation16 + $0x318] sm:$0xff]
        %v4480 = vld [vmem:[#allocation16 + $0x320] sm:$0xff]
        %v4481 = vld [vmem:[#allocation16 + $0x328] sm:$0xff]
        %v4482 = vld [vmem:[#allocation16 + $0x330] sm:$0xff]
        %v4483 = vld [vmem:[#allocation16 + $0x338] sm:$0xff]
        %v4484 = vld [vmem:[#allocation16 + $0x340] sm:$0xff]
        %v4485 = vld [vmem:[#allocation16 + $0x348] sm:$0xff]
        %v4486 = vld [vmem:[#allocation16 + $0x350] sm:$0xff]
        %v4487 = vld [vmem:[#allocation16 + $0x358] sm:$0xff]
        %v4488 = vld [vmem:[#allocation16 + $0x360] sm:$0xff]
        %v4489 = vld [vmem:[#allocation16 + $0x368] sm:$0xff]
        %v4490 = vld [vmem:[#allocation16 + $0x370] sm:$0xff]
        %v4491 = vld [vmem:[#allocation16 + $0x378] sm:$0xff]
        %v4492 = vld [vmem:[#allocation16 + $0x380] sm:$0xff]
        %v4493 = vld [vmem:[#allocation16 + $0x388] sm:$0xff]
        %v4494 = vld [vmem:[#allocation16 + $0x390] sm:$0xff]
        %v4495 = vld [vmem:[#allocation16 + $0x398] sm:$0xff]
        %v4496 = vld [vmem:[#allocation16 + $0x3a0] sm:$0xff]
        %v4497 = vld [vmem:[#allocation16 + $0x3a8] sm:$0xff]
        %v4498 = vld [vmem:[#allocation16 + $0x3b0] sm:$0xff]
        %v4499 = vld [vmem:[#allocation16 + $0x3b8] sm:$0xff]
        %v4500 = vld [vmem:[#allocation16 + $0x3c0] sm:$0xff]
        %v4501 = vld [vmem:[#allocation16 + $0x3c8] sm:$0xff]
        %v4502 = vld [vmem:[#allocation16 + $0x3d0] sm:$0xff]
        %v4503 = vld [vmem:[#allocation16 + $0x3d8] sm:$0xff]
        %v4504 = vld [vmem:[#allocation16 + $0x3e0] sm:$0xff]
        %v4505 = vld [vmem:[#allocation16 + $0x3e8] sm:$0xff]
        %v4506 = vld [vmem:[#allocation16 + $0x3f0] sm:$0xff]
        %v4507 = vld [vmem:[#allocation16 + $0x3f8] sm:$0xff]
        %v4508 = vld [vmem:[%s11] sm:$0xff]
        %v4510 = vlaneseq
        %v4511 = vshrl.u32 %v4510, 7
        %v4512 = vsub.s32 0, %v4511
        %v4513 = vrot.slane %v4508, %v4512
        %v4514 = vlaneseq
        %v4515 = vshrl.u32 %v4514, 7
        %v4516 = vsub.s32 1, %v4515
        %v4517 = vrot.slane %v4508, %v4516
        %v4518 = vlaneseq
        %v4519 = vshrl.u32 %v4518, 7
        %v4520 = vsub.s32 2, %v4519
        %v4521 = vrot.slane %v4508, %v4520
        %v4522 = vlaneseq
        %v4523 = vshrl.u32 %v4522, 7
        %v4524 = vsub.s32 3, %v4523
        %v4525 = vrot.slane %v4508, %v4524
        %v4526 = vlaneseq
        %v4527 = vshrl.u32 %v4526, 7
        %v4528 = vsub.s32 4, %v4527
        %v4529 = vrot.slane %v4508, %v4528
        %v4530 = vlaneseq
        %v4531 = vshrl.u32 %v4530, 7
        %v4532 = vsub.s32 5, %v4531
        %v4533 = vrot.slane %v4508, %v4532
        %v4534 = vlaneseq
        %v4535 = vshrl.u32 %v4534, 7
        %v4536 = vsub.s32 6, %v4535
        %v4537 = vrot.slane %v4508, %v4536
        %v4538 = vlaneseq
        %v4539 = vshrl.u32 %v4538, 7
        %v4540 = vsub.s32 7, %v4539
        %v4541 = vrot.slane %v4508, %v4540
        %v4678 = vunpack.c.l.b16 %v4380
        %v4679 = vunpack.c.h.b16 %v4380
        %v4680 = vunpack.c.l.b16 %v4381
        %v4681 = vunpack.c.h.b16 %v4381
        %v4682 = vunpack.c.l.b16 %v4382
        %v4683 = vunpack.c.h.b16 %v4382
        %v4684 = vunpack.c.l.b16 %v4383
        %v4685 = vunpack.c.h.b16 %v4383
        %v4686 = vunpack.c.l.b16 %v4384
        %v4687 = vunpack.c.h.b16 %v4384
        %v4688 = vunpack.c.l.b16 %v4385
        %v4689 = vunpack.c.h.b16 %v4385
        %v4690 = vunpack.c.l.b16 %v4386
        %v4691 = vunpack.c.h.b16 %v4386
        %v4692 = vunpack.c.l.b16 %v4387
        %v4693 = vunpack.c.h.b16 %v4387
        %v4694 = vunpack.c.l.b16 %v4388
        %v4695 = vunpack.c.h.b16 %v4388
        %v4696 = vunpack.c.l.b16 %v4389
        %v4697 = vunpack.c.h.b16 %v4389
        %v4698 = vunpack.c.l.b16 %v4390
        %v4699 = vunpack.c.h.b16 %v4390
        %v4700 = vunpack.c.l.b16 %v4391
        %v4701 = vunpack.c.h.b16 %v4391
        %v4702 = vunpack.c.l.b16 %v4392
        %v4703 = vunpack.c.h.b16 %v4392
        %v4704 = vunpack.c.l.b16 %v4393
        %v4705 = vunpack.c.h.b16 %v4393
        %v4706 = vunpack.c.l.b16 %v4394
        %v4707 = vunpack.c.h.b16 %v4394
        %v4708 = vunpack.c.l.b16 %v4395
        %v4709 = vunpack.c.h.b16 %v4395
        %v4710 = vunpack.c.l.b16 %v4396
        %v4711 = vunpack.c.h.b16 %v4396
        %v4712 = vunpack.c.l.b16 %v4397
        %v4713 = vunpack.c.h.b16 %v4397
        %v4714 = vunpack.c.l.b16 %v4398
        %v4715 = vunpack.c.h.b16 %v4398
        %v4716 = vunpack.c.l.b16 %v4399
        %v4717 = vunpack.c.h.b16 %v4399
        %v4718 = vunpack.c.l.b16 %v4400
        %v4719 = vunpack.c.h.b16 %v4400
        %v4720 = vunpack.c.l.b16 %v4401
        %v4721 = vunpack.c.h.b16 %v4401
        %v4722 = vunpack.c.l.b16 %v4402
        %v4723 = vunpack.c.h.b16 %v4402
        %v4724 = vunpack.c.l.b16 %v4403
        %v4725 = vunpack.c.h.b16 %v4403
        %v4726 = vunpack.c.l.b16 %v4404
        %v4727 = vunpack.c.h.b16 %v4404
        %v4728 = vunpack.c.l.b16 %v4405
        %v4729 = vunpack.c.h.b16 %v4405
        %v4730 = vunpack.c.l.b16 %v4406
        %v4731 = vunpack.c.h.b16 %v4406
        %v4732 = vunpack.c.l.b16 %v4407
        %v4733 = vunpack.c.h.b16 %v4407
        %v4734 = vunpack.c.l.b16 %v4408
        %v4735 = vunpack.c.h.b16 %v4408
        %v4736 = vunpack.c.l.b16 %v4409
        %v4737 = vunpack.c.h.b16 %v4409
        %v4738 = vunpack.c.l.b16 %v4410
        %v4739 = vunpack.c.h.b16 %v4410
        %v4740 = vunpack.c.l.b16 %v4411
        %v4741 = vunpack.c.h.b16 %v4411
        %v4742 = vunpack.c.l.b16 %v4412
        %v4743 = vunpack.c.h.b16 %v4412
        %v4744 = vunpack.c.l.b16 %v4413
        %v4745 = vunpack.c.h.b16 %v4413
        %v4746 = vunpack.c.l.b16 %v4414
        %v4747 = vunpack.c.h.b16 %v4414
        %v4748 = vunpack.c.l.b16 %v4415
        %v4749 = vunpack.c.h.b16 %v4415
        %v4750 = vunpack.c.l.b16 %v4416
        %v4751 = vunpack.c.h.b16 %v4416
        %v4752 = vunpack.c.l.b16 %v4417
        %v4753 = vunpack.c.h.b16 %v4417
        %v4754 = vunpack.c.l.b16 %v4418
        %v4755 = vunpack.c.h.b16 %v4418
        %v4756 = vunpack.c.l.b16 %v4419
        %v4757 = vunpack.c.h.b16 %v4419
        %v4758 = vunpack.c.l.b16 %v4420
        %v4759 = vunpack.c.h.b16 %v4420
        %v4760 = vunpack.c.l.b16 %v4421
        %v4761 = vunpack.c.h.b16 %v4421
        %v4762 = vunpack.c.l.b16 %v4422
        %v4763 = vunpack.c.h.b16 %v4422
        %v4764 = vunpack.c.l.b16 %v4423
        %v4765 = vunpack.c.h.b16 %v4423
        %v4766 = vunpack.c.l.b16 %v4424
        %v4767 = vunpack.c.h.b16 %v4424
        %v4768 = vunpack.c.l.b16 %v4425
        %v4769 = vunpack.c.h.b16 %v4425
        %v4770 = vunpack.c.l.b16 %v4426
        %v4771 = vunpack.c.h.b16 %v4426
        %v4772 = vunpack.c.l.b16 %v4427
        %v4773 = vunpack.c.h.b16 %v4427
        %v4774 = vunpack.c.l.b16 %v4428
        %v4775 = vunpack.c.h.b16 %v4428
        %v4776 = vunpack.c.l.b16 %v4429
        %v4777 = vunpack.c.h.b16 %v4429
        %v4778 = vunpack.c.l.b16 %v4430
        %v4779 = vunpack.c.h.b16 %v4430
        %v4780 = vunpack.c.l.b16 %v4431
        %v4781 = vunpack.c.h.b16 %v4431
        %v4782 = vunpack.c.l.b16 %v4432
        %v4783 = vunpack.c.h.b16 %v4432
        %v4784 = vunpack.c.l.b16 %v4433
        %v4785 = vunpack.c.h.b16 %v4433
        %v4786 = vunpack.c.l.b16 %v4434
        %v4787 = vunpack.c.h.b16 %v4434
        %v4788 = vunpack.c.l.b16 %v4435
        %v4789 = vunpack.c.h.b16 %v4435
        %v4790 = vunpack.c.l.b16 %v4436
        %v4791 = vunpack.c.h.b16 %v4436
        %v4792 = vunpack.c.l.b16 %v4437
        %v4793 = vunpack.c.h.b16 %v4437
        %v4794 = vunpack.c.l.b16 %v4438
        %v4795 = vunpack.c.h.b16 %v4438
        %v4796 = vunpack.c.l.b16 %v4439
        %v4797 = vunpack.c.h.b16 %v4439
        %v4798 = vunpack.c.l.b16 %v4440
        %v4799 = vunpack.c.h.b16 %v4440
        %v4800 = vunpack.c.l.b16 %v4441
        %v4801 = vunpack.c.h.b16 %v4441
        %v4802 = vunpack.c.l.b16 %v4442
        %v4803 = vunpack.c.h.b16 %v4442
        %v4804 = vunpack.c.l.b16 %v4443
        %v4805 = vunpack.c.h.b16 %v4443
        %v4806 = vunpack.c.l.b16 %v4444
        %v4807 = vunpack.c.h.b16 %v4444
        %v4808 = vunpack.c.l.b16 %v4445
        %v4809 = vunpack.c.h.b16 %v4445
        %v4810 = vunpack.c.l.b16 %v4446
        %v4811 = vunpack.c.h.b16 %v4446
        %v4812 = vunpack.c.l.b16 %v4447
        %v4813 = vunpack.c.h.b16 %v4447
        %v4814 = vunpack.c.l.b16 %v4448
        %v4815 = vunpack.c.h.b16 %v4448
        %v4816 = vunpack.c.l.b16 %v4449
        %v4817 = vunpack.c.h.b16 %v4449
        %v4818 = vunpack.c.l.b16 %v4450
        %v4819 = vunpack.c.h.b16 %v4450
        %v4820 = vunpack.c.l.b16 %v4451
        %v4821 = vunpack.c.h.b16 %v4451
        %v4822 = vunpack.c.l.b16 %v4452
        %v4823 = vunpack.c.h.b16 %v4452
        %v4824 = vunpack.c.l.b16 %v4453
        %v4825 = vunpack.c.h.b16 %v4453
        %v4826 = vunpack.c.l.b16 %v4454
        %v4827 = vunpack.c.h.b16 %v4454
        %v4828 = vunpack.c.l.b16 %v4455
        %v4829 = vunpack.c.h.b16 %v4455
        %v4830 = vunpack.c.l.b16 %v4456
        %v4831 = vunpack.c.h.b16 %v4456
        %v4832 = vunpack.c.l.b16 %v4457
        %v4833 = vunpack.c.h.b16 %v4457
        %v4834 = vunpack.c.l.b16 %v4458
        %v4835 = vunpack.c.h.b16 %v4458
        %v4836 = vunpack.c.l.b16 %v4459
        %v4837 = vunpack.c.h.b16 %v4459
        %v4838 = vunpack.c.l.b16 %v4460
        %v4839 = vunpack.c.h.b16 %v4460
        %v4840 = vunpack.c.l.b16 %v4461
        %v4841 = vunpack.c.h.b16 %v4461
        %v4842 = vunpack.c.l.b16 %v4462
        %v4843 = vunpack.c.h.b16 %v4462
        %v4844 = vunpack.c.l.b16 %v4463
        %v4845 = vunpack.c.h.b16 %v4463
        %v4846 = vunpack.c.l.b16 %v4464
        %v4847 = vunpack.c.h.b16 %v4464
        %v4848 = vunpack.c.l.b16 %v4465
        %v4849 = vunpack.c.h.b16 %v4465
        %v4850 = vunpack.c.l.b16 %v4466
        %v4851 = vunpack.c.h.b16 %v4466
        %v4852 = vunpack.c.l.b16 %v4467
        %v4853 = vunpack.c.h.b16 %v4467
        %v4854 = vunpack.c.l.b16 %v4468
        %v4855 = vunpack.c.h.b16 %v4468
        %v4856 = vunpack.c.l.b16 %v4469
        %v4857 = vunpack.c.h.b16 %v4469
        %v4858 = vunpack.c.l.b16 %v4470
        %v4859 = vunpack.c.h.b16 %v4470
        %v4860 = vunpack.c.l.b16 %v4471
        %v4861 = vunpack.c.h.b16 %v4471
        %v4862 = vunpack.c.l.b16 %v4472
        %v4863 = vunpack.c.h.b16 %v4472
        %v4864 = vunpack.c.l.b16 %v4473
        %v4865 = vunpack.c.h.b16 %v4473
        %v4866 = vunpack.c.l.b16 %v4474
        %v4867 = vunpack.c.h.b16 %v4474
        %v4868 = vunpack.c.l.b16 %v4475
        %v4869 = vunpack.c.h.b16 %v4475
        %v4870 = vunpack.c.l.b16 %v4476
        %v4871 = vunpack.c.h.b16 %v4476
        %v4872 = vunpack.c.l.b16 %v4477
        %v4873 = vunpack.c.h.b16 %v4477
        %v4874 = vunpack.c.l.b16 %v4478
        %v4875 = vunpack.c.h.b16 %v4478
        %v4876 = vunpack.c.l.b16 %v4479
        %v4877 = vunpack.c.h.b16 %v4479
        %v4878 = vunpack.c.l.b16 %v4480
        %v4879 = vunpack.c.h.b16 %v4480
        %v4880 = vunpack.c.l.b16 %v4481
        %v4881 = vunpack.c.h.b16 %v4481
        %v4882 = vunpack.c.l.b16 %v4482
        %v4883 = vunpack.c.h.b16 %v4482
        %v4884 = vunpack.c.l.b16 %v4483
        %v4885 = vunpack.c.h.b16 %v4483
        %v4886 = vunpack.c.l.b16 %v4484
        %v4887 = vunpack.c.h.b16 %v4484
        %v4888 = vunpack.c.l.b16 %v4485
        %v4889 = vunpack.c.h.b16 %v4485
        %v4890 = vunpack.c.l.b16 %v4486
        %v4891 = vunpack.c.h.b16 %v4486
        %v4892 = vunpack.c.l.b16 %v4487
        %v4893 = vunpack.c.h.b16 %v4487
        %v4894 = vunpack.c.l.b16 %v4488
        %v4895 = vunpack.c.h.b16 %v4488
        %v4896 = vunpack.c.l.b16 %v4489
        %v4897 = vunpack.c.h.b16 %v4489
        %v4898 = vunpack.c.l.b16 %v4490
        %v4899 = vunpack.c.h.b16 %v4490
        %v4900 = vunpack.c.l.b16 %v4491
        %v4901 = vunpack.c.h.b16 %v4491
        %v4902 = vunpack.c.l.b16 %v4492
        %v4903 = vunpack.c.h.b16 %v4492
        %v4904 = vunpack.c.l.b16 %v4493
        %v4905 = vunpack.c.h.b16 %v4493
        %v4906 = vunpack.c.l.b16 %v4494
        %v4907 = vunpack.c.h.b16 %v4494
        %v4908 = vunpack.c.l.b16 %v4495
        %v4909 = vunpack.c.h.b16 %v4495
        %v4910 = vunpack.c.l.b16 %v4496
        %v4911 = vunpack.c.h.b16 %v4496
        %v4912 = vunpack.c.l.b16 %v4497
        %v4913 = vunpack.c.h.b16 %v4497
        %v4914 = vunpack.c.l.b16 %v4498
        %v4915 = vunpack.c.h.b16 %v4498
        %v4916 = vunpack.c.l.b16 %v4499
        %v4917 = vunpack.c.h.b16 %v4499
        %v4918 = vunpack.c.l.b16 %v4500
        %v4919 = vunpack.c.h.b16 %v4500
        %v4920 = vunpack.c.l.b16 %v4501
        %v4921 = vunpack.c.h.b16 %v4501
        %v4922 = vunpack.c.l.b16 %v4502
        %v4923 = vunpack.c.h.b16 %v4502
        %v4924 = vunpack.c.l.b16 %v4503
        %v4925 = vunpack.c.h.b16 %v4503
        %v4926 = vunpack.c.l.b16 %v4504
        %v4927 = vunpack.c.h.b16 %v4504
        %v4928 = vunpack.c.l.b16 %v4505
        %v4929 = vunpack.c.h.b16 %v4505
        %v4930 = vunpack.c.l.b16 %v4506
        %v4931 = vunpack.c.h.b16 %v4506
        %v4932 = vunpack.c.l.b16 %v4507
        %v4933 = vunpack.c.h.b16 %v4507
        %v4934 = vpack.c.b16 %v4686, %v4678
        %v4935 = vpack.c.b16 %v4687, %v4679
        %v4936 = vpack.c.b16 %v4688, %v4680
        %v4937 = vpack.c.b16 %v4689, %v4681
        %v4938 = vpack.c.b16 %v4690, %v4682
        %v4939 = vpack.c.b16 %v4691, %v4683
        %v4940 = vpack.c.b16 %v4692, %v4684
        %v4941 = vpack.c.b16 %v4693, %v4685
        %v4942 = vpack.c.b16 %v4702, %v4694
        %v4943 = vpack.c.b16 %v4703, %v4695
        %v4944 = vpack.c.b16 %v4704, %v4696
        %v4945 = vpack.c.b16 %v4705, %v4697
        %v4946 = vpack.c.b16 %v4706, %v4698
        %v4947 = vpack.c.b16 %v4707, %v4699
        %v4948 = vpack.c.b16 %v4708, %v4700
        %v4949 = vpack.c.b16 %v4709, %v4701
        %v4950 = vpack.c.b16 %v4718, %v4710
        %v4951 = vpack.c.b16 %v4719, %v4711
        %v4952 = vpack.c.b16 %v4720, %v4712
        %v4953 = vpack.c.b16 %v4721, %v4713
        %v4954 = vpack.c.b16 %v4722, %v4714
        %v4955 = vpack.c.b16 %v4723, %v4715
        %v4956 = vpack.c.b16 %v4724, %v4716
        %v4957 = vpack.c.b16 %v4725, %v4717
        %v4958 = vpack.c.b16 %v4734, %v4726
        %v4959 = vpack.c.b16 %v4735, %v4727
        %v4960 = vpack.c.b16 %v4736, %v4728
        %v4961 = vpack.c.b16 %v4737, %v4729
        %v4962 = vpack.c.b16 %v4738, %v4730
        %v4963 = vpack.c.b16 %v4739, %v4731
        %v4964 = vpack.c.b16 %v4740, %v4732
        %v4965 = vpack.c.b16 %v4741, %v4733
        %v4966 = vpack.c.b16 %v4750, %v4742
        %v4967 = vpack.c.b16 %v4751, %v4743
        %v4968 = vpack.c.b16 %v4752, %v4744
        %v4969 = vpack.c.b16 %v4753, %v4745
        %v4970 = vpack.c.b16 %v4754, %v4746
        %v4971 = vpack.c.b16 %v4755, %v4747
        %v4972 = vpack.c.b16 %v4756, %v4748
        %v4973 = vpack.c.b16 %v4757, %v4749
        %v4974 = vpack.c.b16 %v4766, %v4758
        %v4975 = vpack.c.b16 %v4767, %v4759
        %v4976 = vpack.c.b16 %v4768, %v4760
        %v4977 = vpack.c.b16 %v4769, %v4761
        %v4978 = vpack.c.b16 %v4770, %v4762
        %v4979 = vpack.c.b16 %v4771, %v4763
        %v4980 = vpack.c.b16 %v4772, %v4764
        %v4981 = vpack.c.b16 %v4773, %v4765
        %v4982 = vpack.c.b16 %v4782, %v4774
        %v4983 = vpack.c.b16 %v4783, %v4775
        %v4984 = vpack.c.b16 %v4784, %v4776
        %v4985 = vpack.c.b16 %v4785, %v4777
        %v4986 = vpack.c.b16 %v4786, %v4778
        %v4987 = vpack.c.b16 %v4787, %v4779
        %v4988 = vpack.c.b16 %v4788, %v4780
        %v4989 = vpack.c.b16 %v4789, %v4781
        %v4990 = vpack.c.b16 %v4798, %v4790
        %v4991 = vpack.c.b16 %v4799, %v4791
        %v4992 = vpack.c.b16 %v4800, %v4792
        %v4993 = vpack.c.b16 %v4801, %v4793
        %v4994 = vpack.c.b16 %v4802, %v4794
        %v4995 = vpack.c.b16 %v4803, %v4795
        %v4996 = vpack.c.b16 %v4804, %v4796
        %v4997 = vpack.c.b16 %v4805, %v4797
        %v4998 = vpack.c.b16 %v4814, %v4806
        %v4999 = vpack.c.b16 %v4815, %v4807
        %v5000 = vpack.c.b16 %v4816, %v4808
        %v5001 = vpack.c.b16 %v4817, %v4809
        %v5002 = vpack.c.b16 %v4818, %v4810
        %v5003 = vpack.c.b16 %v4819, %v4811
        %v5004 = vpack.c.b16 %v4820, %v4812
        %v5005 = vpack.c.b16 %v4821, %v4813
        %v5006 = vpack.c.b16 %v4830, %v4822
        %v5007 = vpack.c.b16 %v4831, %v4823
        %v5008 = vpack.c.b16 %v4832, %v4824
        %v5009 = vpack.c.b16 %v4833, %v4825
        %v5010 = vpack.c.b16 %v4834, %v4826
        %v5011 = vpack.c.b16 %v4835, %v4827
        %v5012 = vpack.c.b16 %v4836, %v4828
        %v5013 = vpack.c.b16 %v4837, %v4829
        %v5014 = vpack.c.b16 %v4846, %v4838
        %v5015 = vpack.c.b16 %v4847, %v4839
        %v5016 = vpack.c.b16 %v4848, %v4840
        %v5017 = vpack.c.b16 %v4849, %v4841
        %v5018 = vpack.c.b16 %v4850, %v4842
        %v5019 = vpack.c.b16 %v4851, %v4843
        %v5020 = vpack.c.b16 %v4852, %v4844
        %v5021 = vpack.c.b16 %v4853, %v4845
        %v5022 = vpack.c.b16 %v4862, %v4854
        %v5023 = vpack.c.b16 %v4863, %v4855
        %v5024 = vpack.c.b16 %v4864, %v4856
        %v5025 = vpack.c.b16 %v4865, %v4857
        %v5026 = vpack.c.b16 %v4866, %v4858
        %v5027 = vpack.c.b16 %v4867, %v4859
        %v5028 = vpack.c.b16 %v4868, %v4860
        %v5029 = vpack.c.b16 %v4869, %v4861
        %v5030 = vpack.c.b16 %v4878, %v4870
        %v5031 = vpack.c.b16 %v4879, %v4871
        %v5032 = vpack.c.b16 %v4880, %v4872
        %v5033 = vpack.c.b16 %v4881, %v4873
        %v5034 = vpack.c.b16 %v4882, %v4874
        %v5035 = vpack.c.b16 %v4883, %v4875
        %v5036 = vpack.c.b16 %v4884, %v4876
        %v5037 = vpack.c.b16 %v4885, %v4877
        %v5038 = vpack.c.b16 %v4894, %v4886
        %v5039 = vpack.c.b16 %v4895, %v4887
        %v5040 = vpack.c.b16 %v4896, %v4888
        %v5041 = vpack.c.b16 %v4897, %v4889
        %v5042 = vpack.c.b16 %v4898, %v4890
        %v5043 = vpack.c.b16 %v4899, %v4891
        %v5044 = vpack.c.b16 %v4900, %v4892
        %v5045 = vpack.c.b16 %v4901, %v4893
        %v5046 = vpack.c.b16 %v4910, %v4902
        %v5047 = vpack.c.b16 %v4911, %v4903
        %v5048 = vpack.c.b16 %v4912, %v4904
        %v5049 = vpack.c.b16 %v4913, %v4905
        %v5050 = vpack.c.b16 %v4914, %v4906
        %v5051 = vpack.c.b16 %v4915, %v4907
        %v5052 = vpack.c.b16 %v4916, %v4908
        %v5053 = vpack.c.b16 %v4917, %v4909
        %v5054 = vpack.c.b16 %v4926, %v4918
        %v5055 = vpack.c.b16 %v4927, %v4919
        %v5056 = vpack.c.b16 %v4928, %v4920
        %v5057 = vpack.c.b16 %v4929, %v4921
        %v5058 = vpack.c.b16 %v4930, %v4922
        %v5059 = vpack.c.b16 %v4931, %v4923
        %v5060 = vpack.c.b16 %v4932, %v4924
        %v5061 = vpack.c.b16 %v4933, %v4925
        %5190 = vmatprep.subr.bf16.mxu0 %v4935
        %5191 = vmatpush1.bf16.msra.mxu0 %v4934
        %5192 = vmatprep.subr.bf16.mxu0 %v4943
        %5193 = vmatpush1.bf16.msra.mxu0 %v4942
        %5194 = vmatprep.subr.bf16.mxu0 %v4951
        %5195 = vmatpush1.bf16.msra.mxu0 %v4950
        %5196 = vmatprep.subr.bf16.mxu0 %v4959
        %5197 = vmatpush1.bf16.msra.mxu0 %v4958
        %5198 = vmatprep.subr.bf16.mxu0 %v4967
        %5199 = vmatpush1.bf16.msra.mxu0 %v4966
        %5200 = vmatprep.subr.bf16.mxu0 %v4975
        %5201 = vmatpush1.bf16.msra.mxu0 %v4974
        %5202 = vmatprep.subr.bf16.mxu0 %v4983
        %5203 = vmatpush1.bf16.msra.mxu0 %v4982
        %5204 = vmatprep.subr.bf16.mxu0 %v4991
        %5205 = vmatpush1.bf16.msra.mxu0 %v4990
        %5206 = vmatprep.subr.bf16.mxu0 %v4999
        %5207 = vmatpush1.bf16.msra.mxu0 %v4998
        %5208 = vmatprep.subr.bf16.mxu0 %v5007
        %5209 = vmatpush1.bf16.msra.mxu0 %v5006
        %5210 = vmatprep.subr.bf16.mxu0 %v5015
        %5211 = vmatpush1.bf16.msra.mxu0 %v5014
        %5212 = vmatprep.subr.bf16.mxu0 %v5023
        %5213 = vmatpush1.bf16.msra.mxu0 %v5022
        %5214 = vmatprep.subr.bf16.mxu0 %v5031
        %5215 = vmatpush1.bf16.msra.mxu0 %v5030
        %5216 = vmatprep.subr.bf16.mxu0 %v5039
        %5217 = vmatpush1.bf16.msra.mxu0 %v5038
        %5218 = vmatprep.subr.bf16.mxu0 %v5047
        %5219 = vmatpush1.bf16.msra.mxu0 %v5046
        %5220 = vmatprep.subr.bf16.mxu0 %v5055
        %5221 = vmatpush1.bf16.msra.mxu0 %v5054
        %5222 = vmatprep.mubr.bf16.mxu0 %v4379
        %5223 = vmatmul.mubr.bf16.gmra.mrb[0].mxu0 %v4378
        %v5224 = vpop.f32.mrb[0].mxu0
        %v5225 = vadd.f32 %v4513, %v5224
        %v5226 = vpop.f32.mrb[0].mxu0
        %v5227 = vadd.f32 %v4517, %v5226
        %v5228 = vpop.f32.mrb[0].mxu0
        %v5229 = vadd.f32 %v4513, %v5228
        %v5230 = vpop.f32.mrb[0].mxu0
        %v5231 = vadd.f32 %v4517, %v5230
        %5232 = vdwg.mxu0
        %5233 = vmatprep.subr.bf16.mxu0 %v4937
        %5234 = vmatpush1.bf16.msra.mxu0 %v4936
        %5235 = vmatprep.subr.bf16.mxu0 %v4945
        %5236 = vmatpush1.bf16.msra.mxu0 %v4944
        %5237 = vmatprep.subr.bf16.mxu0 %v4953
        %5238 = vmatpush1.bf16.msra.mxu0 %v4952
        %5239 = vmatprep.subr.bf16.mxu0 %v4961
        %5240 = vmatpush1.bf16.msra.mxu0 %v4960
        %5241 = vmatprep.subr.bf16.mxu0 %v4969
        %5242 = vmatpush1.bf16.msra.mxu0 %v4968
        %5243 = vmatprep.subr.bf16.mxu0 %v4977
        %5244 = vmatpush1.bf16.msra.mxu0 %v4976
        %5245 = vmatprep.subr.bf16.mxu0 %v4985
        %5246 = vmatpush1.bf16.msra.mxu0 %v4984
        %5247 = vmatprep.subr.bf16.mxu0 %v4993
        %5248 = vmatpush1.bf16.msra.mxu0 %v4992
        %5249 = vmatprep.subr.bf16.mxu0 %v5001
        %5250 = vmatpush1.bf16.msra.mxu0 %v5000
        %5251 = vmatprep.subr.bf16.mxu0 %v5009
        %5252 = vmatpush1.bf16.msra.mxu0 %v5008
        %5253 = vmatprep.subr.bf16.mxu0 %v5017
        %5254 = vmatpush1.bf16.msra.mxu0 %v5016
        %5255 = vmatprep.subr.bf16.mxu0 %v5025
        %5256 = vmatpush1.bf16.msra.mxu0 %v5024
        %5257 = vmatprep.subr.bf16.mxu0 %v5033
        %5258 = vmatpush1.bf16.msra.mxu0 %v5032
        %5259 = vmatprep.subr.bf16.mxu0 %v5041
        %5260 = vmatpush1.bf16.msra.mxu0 %v5040
        %5261 = vmatprep.subr.bf16.mxu0 %v5049
        %5262 = vmatpush1.bf16.msra.mxu0 %v5048
        %5263 = vmatprep.subr.bf16.mxu0 %v5057
        %5264 = vmatpush1.bf16.msra.mxu0 %v5056
        %5265 = vmatprep.mubr.bf16.mxu0 %v4379
        %5266 = vmatmul.mubr.bf16.gmra.mrb[0].mxu0 %v4378
        %v5267 = vpop.f32.mrb[0].mxu0
        %v5268 = vadd.f32 %v4521, %v5267
        %v5269 = vpop.f32.mrb[0].mxu0
        %v5270 = vadd.f32 %v4525, %v5269
        %v5271 = vpop.f32.mrb[0].mxu0
        %v5272 = vadd.f32 %v4521, %v5271
        %v5273 = vpop.f32.mrb[0].mxu0
        %v5274 = vadd.f32 %v4525, %v5273
        %5275 = vdwg.mxu0
        %5276 = vmatprep.subr.bf16.mxu0 %v4939
        %5277 = vmatpush1.bf16.msra.mxu0 %v4938
        %5278 = vmatprep.subr.bf16.mxu0 %v4947
        %5279 = vmatpush1.bf16.msra.mxu0 %v4946
        %5280 = vmatprep.subr.bf16.mxu0 %v4955
        %5281 = vmatpush1.bf16.msra.mxu0 %v4954
        %5282 = vmatprep.subr.bf16.mxu0 %v4963
        %5283 = vmatpush1.bf16.msra.mxu0 %v4962
        %5284 = vmatprep.subr.bf16.mxu0 %v4971
        %5285 = vmatpush1.bf16.msra.mxu0 %v4970
        %5286 = vmatprep.subr.bf16.mxu0 %v4979
        %5287 = vmatpush1.bf16.msra.mxu0 %v4978
        %5288 = vmatprep.subr.bf16.mxu0 %v4987
        %5289 = vmatpush1.bf16.msra.mxu0 %v4986
        %5290 = vmatprep.subr.bf16.mxu0 %v4995
        %5291 = vmatpush1.bf16.msra.mxu0 %v4994
        %5292 = vmatprep.subr.bf16.mxu0 %v5003
        %5293 = vmatpush1.bf16.msra.mxu0 %v5002
        %5294 = vmatprep.subr.bf16.mxu0 %v5011
        %5295 = vmatpush1.bf16.msra.mxu0 %v5010
        %5296 = vmatprep.subr.bf16.mxu0 %v5019
        %5297 = vmatpush1.bf16.msra.mxu0 %v5018
        %5298 = vmatprep.subr.bf16.mxu0 %v5027
        %5299 = vmatpush1.bf16.msra.mxu0 %v5026
        %5300 = vmatprep.subr.bf16.mxu0 %v5035
        %5301 = vmatpush1.bf16.msra.mxu0 %v5034
        %5302 = vmatprep.subr.bf16.mxu0 %v5043
        %5303 = vmatpush1.bf16.msra.mxu0 %v5042
        %5304 = vmatprep.subr.bf16.mxu0 %v5051
        %5305 = vmatpush1.bf16.msra.mxu0 %v5050
        %5306 = vmatprep.subr.bf16.mxu0 %v5059
        %5307 = vmatpush1.bf16.msra.mxu0 %v5058
        %5308 = vmatprep.mubr.bf16.mxu0 %v4379
        %5309 = vmatmul.mubr.bf16.gmra.mrb[0].mxu0 %v4378
        %v5310 = vpop.f32.mrb[0].mxu0
        %v5311 = vadd.f32 %v4529, %v5310
        %v5312 = vpop.f32.mrb[0].mxu0
        %v5313 = vadd.f32 %v4533, %v5312
        %v5314 = vpop.f32.mrb[0].mxu0
        %v5315 = vadd.f32 %v4529, %v5314
        %v5316 = vpop.f32.mrb[0].mxu0
        %v5317 = vadd.f32 %v4533, %v5316
        %5318 = vdwg.mxu0
        %5319 = vmatprep.subr.bf16.mxu0 %v4941
        %5320 = vmatpush1.bf16.msra.mxu0 %v4940
        %5321 = vmatprep.subr.bf16.mxu0 %v4949
        %5322 = vmatpush1.bf16.msra.mxu0 %v4948
        %5323 = vmatprep.subr.bf16.mxu0 %v4957
        %5324 = vmatpush1.bf16.msra.mxu0 %v4956
        %5325 = vmatprep.subr.bf16.mxu0 %v4965
        %5326 = vmatpush1.bf16.msra.mxu0 %v4964
        %5327 = vmatprep.subr.bf16.mxu0 %v4973
        %5328 = vmatpush1.bf16.msra.mxu0 %v4972
        %5329 = vmatprep.subr.bf16.mxu0 %v4981
        %5330 = vmatpush1.bf16.msra.mxu0 %v4980
        %5331 = vmatprep.subr.bf16.mxu0 %v4989
        %5332 = vmatpush1.bf16.msra.mxu0 %v4988
        %5333 = vmatprep.subr.bf16.mxu0 %v4997
        %5334 = vmatpush1.bf16.msra.mxu0 %v4996
        %5335 = vmatprep.subr.bf16.mxu0 %v5005
        %5336 = vmatpush1.bf16.msra.mxu0 %v5004
        %5337 = vmatprep.subr.bf16.mxu0 %v5013
        %5338 = vmatpush1.bf16.msra.mxu0 %v5012
        %5339 = vmatprep.subr.bf16.mxu0 %v5021
        %5340 = vmatpush1.bf16.msra.mxu0 %v5020
        %5341 = vmatprep.subr.bf16.mxu0 %v5029
        %5342 = vmatpush1.bf16.msra.mxu0 %v5028
        %5343 = vmatprep.subr.bf16.mxu0 %v5037
        %5344 = vmatpush1.bf16.msra.mxu0 %v5036
        %5345 = vmatprep.subr.bf16.mxu0 %v5045
        %5346 = vmatpush1.bf16.msra.mxu0 %v5044
        %5347 = vmatprep.subr.bf16.mxu0 %v5053
        %5348 = vmatpush1.bf16.msra.mxu0 %v5052
        %5349 = vmatprep.subr.bf16.mxu0 %v5061
        %5350 = vmatpush1.bf16.msra.mxu0 %v5060
        %5351 = vmatprep.mubr.bf16.mxu0 %v4379
        %5352 = vmatmul.mubr.bf16.gmra.mrb[0].mxu0 %v4378
        %v5353 = vpop.f32.mrb[0].mxu0
        %v5354 = vadd.f32 %v4537, %v5353
        %v5355 = vpop.f32.mrb[0].mxu0
        %v5356 = vadd.f32 %v4541, %v5355
        %v5357 = vpop.f32.mrb[0].mxu0
        %v5358 = vadd.f32 %v4537, %v5357
        %v5359 = vpop.f32.mrb[0].mxu0
        %v5360 = vadd.f32 %v4541, %v5359
        %5361 = vdwg.mxu0
        %v5362 = vmax.f32 %v5225, 0.0
        %v5363 = vmax.f32 %v5227, 0.0
        %v5364 = vmax.f32 %v5268, 0.0
        %v5365 = vmax.f32 %v5270, 0.0
        %v5366 = vmax.f32 %v5311, 0.0
        %v5367 = vmax.f32 %v5313, 0.0
        %v5368 = vmax.f32 %v5354, 0.0
        %v5369 = vmax.f32 %v5356, 0.0
        %v5370 = vmax.f32 %v5229, 0.0
        %v5371 = vmax.f32 %v5231, 0.0
        %v5372 = vmax.f32 %v5272, 0.0
        %v5373 = vmax.f32 %v5274, 0.0
        %v5374 = vmax.f32 %v5315, 0.0
        %v5375 = vmax.f32 %v5317, 0.0
        %v5376 = vmax.f32 %v5358, 0.0
        %v5377 = vmax.f32 %v5360, 0.0
        %v5378 = vpack.c.bf16 %v5370, %v5362
        %v5379 = vpack.c.bf16 %v5371, %v5363
        %v5380 = vpack.c.bf16 %v5372, %v5364
        %v5381 = vpack.c.bf16 %v5373, %v5365
        %v5382 = vpack.c.bf16 %v5374, %v5366
        %v5383 = vpack.c.bf16 %v5375, %v5367
        %v5384 = vpack.c.bf16 %v5376, %v5368
        %v5385 = vpack.c.bf16 %v5377, %v5369
        %v5386 = vld [vmem:[#allocation17] sm:$0xff]
        %v5387 = vld [vmem:[#allocation17 + $0x8] sm:$0xff]
        %v5388 = vld [vmem:[#allocation17 + $0x10] sm:$0xff]
        %v5389 = vld [vmem:[#allocation17 + $0x18] sm:$0xff]
        %v5390 = vld [vmem:[#allocation17 + $0x20] sm:$0xff]
        %v5391 = vld [vmem:[#allocation17 + $0x28] sm:$0xff]
        %v5392 = vld [vmem:[#allocation17 + $0x30] sm:$0xff]
        %v5393 = vld [vmem:[#allocation17 + $0x38] sm:$0xff]
        %v5394 = vld [vmem:[#allocation17 + $0x40] sm:$0xff]
        %v5395 = vld [vmem:[#allocation17 + $0x48] sm:$0xff]
        %v5396 = vld [vmem:[#allocation17 + $0x50] sm:$0xff]
        %v5397 = vld [vmem:[#allocation17 + $0x58] sm:$0xff]
        %v5398 = vld [vmem:[#allocation17 + $0x60] sm:$0xff]
        %v5399 = vld [vmem:[#allocation17 + $0x68] sm:$0xff]
        %v5400 = vld [vmem:[#allocation17 + $0x70] sm:$0xff]
        %v5401 = vld [vmem:[#allocation17 + $0x78] sm:$0xff]
        %v5402 = vld [vmem:[#allocation17 + $0x80] sm:$0xff]
        %v5403 = vld [vmem:[#allocation17 + $0x88] sm:$0xff]
        %v5404 = vld [vmem:[#allocation17 + $0x90] sm:$0xff]
        %v5405 = vld [vmem:[#allocation17 + $0x98] sm:$0xff]
        %v5406 = vld [vmem:[#allocation17 + $0xa0] sm:$0xff]
        %v5407 = vld [vmem:[#allocation17 + $0xa8] sm:$0xff]
        %v5408 = vld [vmem:[#allocation17 + $0xb0] sm:$0xff]
        %v5409 = vld [vmem:[#allocation17 + $0xb8] sm:$0xff]
        %v5410 = vld [vmem:[#allocation17 + $0xc0] sm:$0xff]
        %v5411 = vld [vmem:[#allocation17 + $0xc8] sm:$0xff]
        %v5412 = vld [vmem:[#allocation17 + $0xd0] sm:$0xff]
        %v5413 = vld [vmem:[#allocation17 + $0xd8] sm:$0xff]
        %v5414 = vld [vmem:[#allocation17 + $0xe0] sm:$0xff]
        %v5415 = vld [vmem:[#allocation17 + $0xe8] sm:$0xff]
        %v5416 = vld [vmem:[#allocation17 + $0xf0] sm:$0xff]
        %v5417 = vld [vmem:[#allocation17 + $0xf8] sm:$0xff]
        %v5418 = vld [vmem:[#allocation17 + $0x100] sm:$0xff]
        %v5419 = vld [vmem:[#allocation17 + $0x108] sm:$0xff]
        %v5420 = vld [vmem:[#allocation17 + $0x110] sm:$0xff]
        %v5421 = vld [vmem:[#allocation17 + $0x118] sm:$0xff]
        %v5422 = vld [vmem:[#allocation17 + $0x120] sm:$0xff]
        %v5423 = vld [vmem:[#allocation17 + $0x128] sm:$0xff]
        %v5424 = vld [vmem:[#allocation17 + $0x130] sm:$0xff]
        %v5425 = vld [vmem:[#allocation17 + $0x138] sm:$0xff]
        %v5426 = vld [vmem:[#allocation17 + $0x140] sm:$0xff]
        %v5427 = vld [vmem:[#allocation17 + $0x148] sm:$0xff]
        %v5428 = vld [vmem:[#allocation17 + $0x150] sm:$0xff]
        %v5429 = vld [vmem:[#allocation17 + $0x158] sm:$0xff]
        %v5430 = vld [vmem:[#allocation17 + $0x160] sm:$0xff]
        %v5431 = vld [vmem:[#allocation17 + $0x168] sm:$0xff]
        %v5432 = vld [vmem:[#allocation17 + $0x170] sm:$0xff]
        %v5433 = vld [vmem:[#allocation17 + $0x178] sm:$0xff]
        %v5434 = vld [vmem:[#allocation17 + $0x180] sm:$0xff]
        %v5435 = vld [vmem:[#allocation17 + $0x188] sm:$0xff]
        %v5436 = vld [vmem:[#allocation17 + $0x190] sm:$0xff]
        %v5437 = vld [vmem:[#allocation17 + $0x198] sm:$0xff]
        %v5438 = vld [vmem:[#allocation17 + $0x1a0] sm:$0xff]
        %v5439 = vld [vmem:[#allocation17 + $0x1a8] sm:$0xff]
        %v5440 = vld [vmem:[#allocation17 + $0x1b0] sm:$0xff]
        %v5441 = vld [vmem:[#allocation17 + $0x1b8] sm:$0xff]
        %v5442 = vld [vmem:[#allocation17 + $0x1c0] sm:$0xff]
        %v5443 = vld [vmem:[#allocation17 + $0x1c8] sm:$0xff]
        %v5444 = vld [vmem:[#allocation17 + $0x1d0] sm:$0xff]
        %v5445 = vld [vmem:[#allocation17 + $0x1d8] sm:$0xff]
        %v5446 = vld [vmem:[#allocation17 + $0x1e0] sm:$0xff]
        %v5447 = vld [vmem:[#allocation17 + $0x1e8] sm:$0xff]
        %v5448 = vld [vmem:[#allocation17 + $0x1f0] sm:$0xff]
        %v5449 = vld [vmem:[#allocation17 + $0x1f8] sm:$0xff]
        %v5450 = vld [vmem:[#allocation17 + $0x200] sm:$0xff]
        %v5451 = vld [vmem:[#allocation17 + $0x208] sm:$0xff]
        %v5452 = vld [vmem:[#allocation17 + $0x210] sm:$0xff]
        %v5453 = vld [vmem:[#allocation17 + $0x218] sm:$0xff]
        %v5454 = vld [vmem:[#allocation17 + $0x220] sm:$0xff]
        %v5455 = vld [vmem:[#allocation17 + $0x228] sm:$0xff]
        %v5456 = vld [vmem:[#allocation17 + $0x230] sm:$0xff]
        %v5457 = vld [vmem:[#allocation17 + $0x238] sm:$0xff]
        %v5458 = vld [vmem:[#allocation17 + $0x240] sm:$0xff]
        %v5459 = vld [vmem:[#allocation17 + $0x248] sm:$0xff]
        %v5460 = vld [vmem:[#allocation17 + $0x250] sm:$0xff]
        %v5461 = vld [vmem:[#allocation17 + $0x258] sm:$0xff]
        %v5462 = vld [vmem:[#allocation17 + $0x260] sm:$0xff]
        %v5463 = vld [vmem:[#allocation17 + $0x268] sm:$0xff]
        %v5464 = vld [vmem:[#allocation17 + $0x270] sm:$0xff]
        %v5465 = vld [vmem:[#allocation17 + $0x278] sm:$0xff]
        %v5466 = vld [vmem:[#allocation17 + $0x280] sm:$0xff]
        %v5467 = vld [vmem:[#allocation17 + $0x288] sm:$0xff]
        %v5468 = vld [vmem:[#allocation17 + $0x290] sm:$0xff]
        %v5469 = vld [vmem:[#allocation17 + $0x298] sm:$0xff]
        %v5470 = vld [vmem:[#allocation17 + $0x2a0] sm:$0xff]
        %v5471 = vld [vmem:[#allocation17 + $0x2a8] sm:$0xff]
        %v5472 = vld [vmem:[#allocation17 + $0x2b0] sm:$0xff]
        %v5473 = vld [vmem:[#allocation17 + $0x2b8] sm:$0xff]
        %v5474 = vld [vmem:[#allocation17 + $0x2c0] sm:$0xff]
        %v5475 = vld [vmem:[#allocation17 + $0x2c8] sm:$0xff]
        %v5476 = vld [vmem:[#allocation17 + $0x2d0] sm:$0xff]
        %v5477 = vld [vmem:[#allocation17 + $0x2d8] sm:$0xff]
        %v5478 = vld [vmem:[#allocation17 + $0x2e0] sm:$0xff]
        %v5479 = vld [vmem:[#allocation17 + $0x2e8] sm:$0xff]
        %v5480 = vld [vmem:[#allocation17 + $0x2f0] sm:$0xff]
        %v5481 = vld [vmem:[#allocation17 + $0x2f8] sm:$0xff]
        %v5482 = vld [vmem:[#allocation17 + $0x300] sm:$0xff]
        %v5483 = vld [vmem:[#allocation17 + $0x308] sm:$0xff]
        %v5484 = vld [vmem:[#allocation17 + $0x310] sm:$0xff]
        %v5485 = vld [vmem:[#allocation17 + $0x318] sm:$0xff]
        %v5486 = vld [vmem:[#allocation17 + $0x320] sm:$0xff]
        %v5487 = vld [vmem:[#allocation17 + $0x328] sm:$0xff]
        %v5488 = vld [vmem:[#allocation17 + $0x330] sm:$0xff]
        %v5489 = vld [vmem:[#allocation17 + $0x338] sm:$0xff]
        %v5490 = vld [vmem:[#allocation17 + $0x340] sm:$0xff]
        %v5491 = vld [vmem:[#allocation17 + $0x348] sm:$0xff]
        %v5492 = vld [vmem:[#allocation17 + $0x350] sm:$0xff]
        %v5493 = vld [vmem:[#allocation17 + $0x358] sm:$0xff]
        %v5494 = vld [vmem:[#allocation17 + $0x360] sm:$0xff]
        %v5495 = vld [vmem:[#allocation17 + $0x368] sm:$0xff]
        %v5496 = vld [vmem:[#allocation17 + $0x370] sm:$0xff]
        %v5497 = vld [vmem:[#allocation17 + $0x378] sm:$0xff]
        %v5498 = vld [vmem:[#allocation17 + $0x380] sm:$0xff]
        %v5499 = vld [vmem:[#allocation17 + $0x388] sm:$0xff]
        %v5500 = vld [vmem:[#allocation17 + $0x390] sm:$0xff]
        %v5501 = vld [vmem:[#allocation17 + $0x398] sm:$0xff]
        %v5502 = vld [vmem:[#allocation17 + $0x3a0] sm:$0xff]
        %v5503 = vld [vmem:[#allocation17 + $0x3a8] sm:$0xff]
        %v5504 = vld [vmem:[#allocation17 + $0x3b0] sm:$0xff]
        %v5505 = vld [vmem:[#allocation17 + $0x3b8] sm:$0xff]
        %v5506 = vld [vmem:[#allocation17 + $0x3c0] sm:$0xff]
        %v5507 = vld [vmem:[#allocation17 + $0x3c8] sm:$0xff]
        %v5508 = vld [vmem:[#allocation17 + $0x3d0] sm:$0xff]
        %v5509 = vld [vmem:[#allocation17 + $0x3d8] sm:$0xff]
        %v5510 = vld [vmem:[#allocation17 + $0x3e0] sm:$0xff]
        %v5511 = vld [vmem:[#allocation17 + $0x3e8] sm:$0xff]
        %v5512 = vld [vmem:[#allocation17 + $0x3f0] sm:$0xff]
        %v5513 = vld [vmem:[#allocation17 + $0x3f8] sm:$0xff]
        %v5514 = vlaneseq
        %v5515 = vshrl.u32 %v5514, 7
        %v5516 = vsub.s32 6, %v5515
        %v5517 = vrot.slane %v646, %v5516
        %v5518 = vlaneseq
        %v5519 = vshrl.u32 %v5518, 7
        %v5520 = vsub.s32 6, %v5519
        %v5521 = vrot.slane %v647, %v5520
        %v5650 = vunpack.c.l.b16 %v5386
        %v5651 = vunpack.c.h.b16 %v5386
        %v5652 = vunpack.c.l.b16 %v5387
        %v5653 = vunpack.c.h.b16 %v5387
        %v5654 = vunpack.c.l.b16 %v5388
        %v5655 = vunpack.c.h.b16 %v5388
        %v5656 = vunpack.c.l.b16 %v5389
        %v5657 = vunpack.c.h.b16 %v5389
        %v5658 = vunpack.c.l.b16 %v5390
        %v5659 = vunpack.c.h.b16 %v5390
        %v5660 = vunpack.c.l.b16 %v5391
        %v5661 = vunpack.c.h.b16 %v5391
        %v5662 = vunpack.c.l.b16 %v5392
        %v5663 = vunpack.c.h.b16 %v5392
        %v5664 = vunpack.c.l.b16 %v5393
        %v5665 = vunpack.c.h.b16 %v5393
        %v5666 = vunpack.c.l.b16 %v5394
        %v5667 = vunpack.c.h.b16 %v5394
        %v5668 = vunpack.c.l.b16 %v5395
        %v5669 = vunpack.c.h.b16 %v5395
        %v5670 = vunpack.c.l.b16 %v5396
        %v5671 = vunpack.c.h.b16 %v5396
        %v5672 = vunpack.c.l.b16 %v5397
        %v5673 = vunpack.c.h.b16 %v5397
        %v5674 = vunpack.c.l.b16 %v5398
        %v5675 = vunpack.c.h.b16 %v5398
        %v5676 = vunpack.c.l.b16 %v5399
        %v5677 = vunpack.c.h.b16 %v5399
        %v5678 = vunpack.c.l.b16 %v5400
        %v5679 = vunpack.c.h.b16 %v5400
        %v5680 = vunpack.c.l.b16 %v5401
        %v5681 = vunpack.c.h.b16 %v5401
        %v5682 = vunpack.c.l.b16 %v5402
        %v5683 = vunpack.c.h.b16 %v5402
        %v5684 = vunpack.c.l.b16 %v5403
        %v5685 = vunpack.c.h.b16 %v5403
        %v5686 = vunpack.c.l.b16 %v5404
        %v5687 = vunpack.c.h.b16 %v5404
        %v5688 = vunpack.c.l.b16 %v5405
        %v5689 = vunpack.c.h.b16 %v5405
        %v5690 = vunpack.c.l.b16 %v5406
        %v5691 = vunpack.c.h.b16 %v5406
        %v5692 = vunpack.c.l.b16 %v5407
        %v5693 = vunpack.c.h.b16 %v5407
        %v5694 = vunpack.c.l.b16 %v5408
        %v5695 = vunpack.c.h.b16 %v5408
        %v5696 = vunpack.c.l.b16 %v5409
        %v5697 = vunpack.c.h.b16 %v5409
        %v5698 = vunpack.c.l.b16 %v5410
        %v5699 = vunpack.c.h.b16 %v5410
        %v5700 = vunpack.c.l.b16 %v5411
        %v5701 = vunpack.c.h.b16 %v5411
        %v5702 = vunpack.c.l.b16 %v5412
        %v5703 = vunpack.c.h.b16 %v5412
        %v5704 = vunpack.c.l.b16 %v5413
        %v5705 = vunpack.c.h.b16 %v5413
        %v5706 = vunpack.c.l.b16 %v5414
        %v5707 = vunpack.c.h.b16 %v5414
        %v5708 = vunpack.c.l.b16 %v5415
        %v5709 = vunpack.c.h.b16 %v5415
        %v5710 = vunpack.c.l.b16 %v5416
        %v5711 = vunpack.c.h.b16 %v5416
        %v5712 = vunpack.c.l.b16 %v5417
        %v5713 = vunpack.c.h.b16 %v5417
        %v5714 = vunpack.c.l.b16 %v5418
        %v5715 = vunpack.c.h.b16 %v5418
        %v5716 = vunpack.c.l.b16 %v5419
        %v5717 = vunpack.c.h.b16 %v5419
        %v5718 = vunpack.c.l.b16 %v5420
        %v5719 = vunpack.c.h.b16 %v5420
        %v5720 = vunpack.c.l.b16 %v5421
        %v5721 = vunpack.c.h.b16 %v5421
        %v5722 = vunpack.c.l.b16 %v5422
        %v5723 = vunpack.c.h.b16 %v5422
        %v5724 = vunpack.c.l.b16 %v5423
        %v5725 = vunpack.c.h.b16 %v5423
        %v5726 = vunpack.c.l.b16 %v5424
        %v5727 = vunpack.c.h.b16 %v5424
        %v5728 = vunpack.c.l.b16 %v5425
        %v5729 = vunpack.c.h.b16 %v5425
        %v5730 = vunpack.c.l.b16 %v5426
        %v5731 = vunpack.c.h.b16 %v5426
        %v5732 = vunpack.c.l.b16 %v5427
        %v5733 = vunpack.c.h.b16 %v5427
        %v5734 = vunpack.c.l.b16 %v5428
        %v5735 = vunpack.c.h.b16 %v5428
        %v5736 = vunpack.c.l.b16 %v5429
        %v5737 = vunpack.c.h.b16 %v5429
        %v5738 = vunpack.c.l.b16 %v5430
        %v5739 = vunpack.c.h.b16 %v5430
        %v5740 = vunpack.c.l.b16 %v5431
        %v5741 = vunpack.c.h.b16 %v5431
        %v5742 = vunpack.c.l.b16 %v5432
        %v5743 = vunpack.c.h.b16 %v5432
        %v5744 = vunpack.c.l.b16 %v5433
        %v5745 = vunpack.c.h.b16 %v5433
        %v5746 = vunpack.c.l.b16 %v5434
        %v5747 = vunpack.c.h.b16 %v5434
        %v5748 = vunpack.c.l.b16 %v5435
        %v5749 = vunpack.c.h.b16 %v5435
        %v5750 = vunpack.c.l.b16 %v5436
        %v5751 = vunpack.c.h.b16 %v5436
        %v5752 = vunpack.c.l.b16 %v5437
        %v5753 = vunpack.c.h.b16 %v5437
        %v5754 = vunpack.c.l.b16 %v5438
        %v5755 = vunpack.c.h.b16 %v5438
        %v5756 = vunpack.c.l.b16 %v5439
        %v5757 = vunpack.c.h.b16 %v5439
        %v5758 = vunpack.c.l.b16 %v5440
        %v5759 = vunpack.c.h.b16 %v5440
        %v5760 = vunpack.c.l.b16 %v5441
        %v5761 = vunpack.c.h.b16 %v5441
        %v5762 = vunpack.c.l.b16 %v5442
        %v5763 = vunpack.c.h.b16 %v5442
        %v5764 = vunpack.c.l.b16 %v5443
        %v5765 = vunpack.c.h.b16 %v5443
        %v5766 = vunpack.c.l.b16 %v5444
        %v5767 = vunpack.c.h.b16 %v5444
        %v5768 = vunpack.c.l.b16 %v5445
        %v5769 = vunpack.c.h.b16 %v5445
        %v5770 = vunpack.c.l.b16 %v5446
        %v5771 = vunpack.c.h.b16 %v5446
        %v5772 = vunpack.c.l.b16 %v5447
        %v5773 = vunpack.c.h.b16 %v5447
        %v5774 = vunpack.c.l.b16 %v5448
        %v5775 = vunpack.c.h.b16 %v5448
        %v5776 = vunpack.c.l.b16 %v5449
        %v5777 = vunpack.c.h.b16 %v5449
        %v5778 = vunpack.c.l.b16 %v5450
        %v5779 = vunpack.c.h.b16 %v5450
        %v5780 = vunpack.c.l.b16 %v5451
        %v5781 = vunpack.c.h.b16 %v5451
        %v5782 = vunpack.c.l.b16 %v5452
        %v5783 = vunpack.c.h.b16 %v5452
        %v5784 = vunpack.c.l.b16 %v5453
        %v5785 = vunpack.c.h.b16 %v5453
        %v5786 = vunpack.c.l.b16 %v5454
        %v5787 = vunpack.c.h.b16 %v5454
        %v5788 = vunpack.c.l.b16 %v5455
        %v5789 = vunpack.c.h.b16 %v5455
        %v5790 = vunpack.c.l.b16 %v5456
        %v5791 = vunpack.c.h.b16 %v5456
        %v5792 = vunpack.c.l.b16 %v5457
        %v5793 = vunpack.c.h.b16 %v5457
        %v5794 = vunpack.c.l.b16 %v5458
        %v5795 = vunpack.c.h.b16 %v5458
        %v5796 = vunpack.c.l.b16 %v5459
        %v5797 = vunpack.c.h.b16 %v5459
        %v5798 = vunpack.c.l.b16 %v5460
        %v5799 = vunpack.c.h.b16 %v5460
        %v5800 = vunpack.c.l.b16 %v5461
        %v5801 = vunpack.c.h.b16 %v5461
        %v5802 = vunpack.c.l.b16 %v5462
        %v5803 = vunpack.c.h.b16 %v5462
        %v5804 = vunpack.c.l.b16 %v5463
        %v5805 = vunpack.c.h.b16 %v5463
        %v5806 = vunpack.c.l.b16 %v5464
        %v5807 = vunpack.c.h.b16 %v5464
        %v5808 = vunpack.c.l.b16 %v5465
        %v5809 = vunpack.c.h.b16 %v5465
        %v5810 = vunpack.c.l.b16 %v5466
        %v5811 = vunpack.c.h.b16 %v5466
        %v5812 = vunpack.c.l.b16 %v5467
        %v5813 = vunpack.c.h.b16 %v5467
        %v5814 = vunpack.c.l.b16 %v5468
        %v5815 = vunpack.c.h.b16 %v5468
        %v5816 = vunpack.c.l.b16 %v5469
        %v5817 = vunpack.c.h.b16 %v5469
        %v5818 = vunpack.c.l.b16 %v5470
        %v5819 = vunpack.c.h.b16 %v5470
        %v5820 = vunpack.c.l.b16 %v5471
        %v5821 = vunpack.c.h.b16 %v5471
        %v5822 = vunpack.c.l.b16 %v5472
        %v5823 = vunpack.c.h.b16 %v5472
        %v5824 = vunpack.c.l.b16 %v5473
        %v5825 = vunpack.c.h.b16 %v5473
        %v5826 = vunpack.c.l.b16 %v5474
        %v5827 = vunpack.c.h.b16 %v5474
        %v5828 = vunpack.c.l.b16 %v5475
        %v5829 = vunpack.c.h.b16 %v5475
        %v5830 = vunpack.c.l.b16 %v5476
        %v5831 = vunpack.c.h.b16 %v5476
        %v5832 = vunpack.c.l.b16 %v5477
        %v5833 = vunpack.c.h.b16 %v5477
        %v5834 = vunpack.c.l.b16 %v5478
        %v5835 = vunpack.c.h.b16 %v5478
        %v5836 = vunpack.c.l.b16 %v5479
        %v5837 = vunpack.c.h.b16 %v5479
        %v5838 = vunpack.c.l.b16 %v5480
        %v5839 = vunpack.c.h.b16 %v5480
        %v5840 = vunpack.c.l.b16 %v5481
        %v5841 = vunpack.c.h.b16 %v5481
        %v5842 = vunpack.c.l.b16 %v5482
        %v5843 = vunpack.c.h.b16 %v5482
        %v5844 = vunpack.c.l.b16 %v5483
        %v5845 = vunpack.c.h.b16 %v5483
        %v5846 = vunpack.c.l.b16 %v5484
        %v5847 = vunpack.c.h.b16 %v5484
        %v5848 = vunpack.c.l.b16 %v5485
        %v5849 = vunpack.c.h.b16 %v5485
        %v5850 = vunpack.c.l.b16 %v5486
        %v5851 = vunpack.c.h.b16 %v5486
        %v5852 = vunpack.c.l.b16 %v5487
        %v5853 = vunpack.c.h.b16 %v5487
        %v5854 = vunpack.c.l.b16 %v5488
        %v5855 = vunpack.c.h.b16 %v5488
        %v5856 = vunpack.c.l.b16 %v5489
        %v5857 = vunpack.c.h.b16 %v5489
        %v5858 = vunpack.c.l.b16 %v5490
        %v5859 = vunpack.c.h.b16 %v5490
        %v5860 = vunpack.c.l.b16 %v5491
        %v5861 = vunpack.c.h.b16 %v5491
        %v5862 = vunpack.c.l.b16 %v5492
        %v5863 = vunpack.c.h.b16 %v5492
        %v5864 = vunpack.c.l.b16 %v5493
        %v5865 = vunpack.c.h.b16 %v5493
        %v5866 = vunpack.c.l.b16 %v5494
        %v5867 = vunpack.c.h.b16 %v5494
        %v5868 = vunpack.c.l.b16 %v5495
        %v5869 = vunpack.c.h.b16 %v5495
        %v5870 = vunpack.c.l.b16 %v5496
        %v5871 = vunpack.c.h.b16 %v5496
        %v5872 = vunpack.c.l.b16 %v5497
        %v5873 = vunpack.c.h.b16 %v5497
        %v5874 = vunpack.c.l.b16 %v5498
        %v5875 = vunpack.c.h.b16 %v5498
        %v5876 = vunpack.c.l.b16 %v5499
        %v5877 = vunpack.c.h.b16 %v5499
        %v5878 = vunpack.c.l.b16 %v5500
        %v5879 = vunpack.c.h.b16 %v5500
        %v5880 = vunpack.c.l.b16 %v5501
        %v5881 = vunpack.c.h.b16 %v5501
        %v5882 = vunpack.c.l.b16 %v5502
        %v5883 = vunpack.c.h.b16 %v5502
        %v5884 = vunpack.c.l.b16 %v5503
        %v5885 = vunpack.c.h.b16 %v5503
        %v5886 = vunpack.c.l.b16 %v5504
        %v5887 = vunpack.c.h.b16 %v5504
        %v5888 = vunpack.c.l.b16 %v5505
        %v5889 = vunpack.c.h.b16 %v5505
        %v5890 = vunpack.c.l.b16 %v5506
        %v5891 = vunpack.c.h.b16 %v5506
        %v5892 = vunpack.c.l.b16 %v5507
        %v5893 = vunpack.c.h.b16 %v5507
        %v5894 = vunpack.c.l.b16 %v5508
        %v5895 = vunpack.c.h.b16 %v5508
        %v5896 = vunpack.c.l.b16 %v5509
        %v5897 = vunpack.c.h.b16 %v5509
        %v5898 = vunpack.c.l.b16 %v5510
        %v5899 = vunpack.c.h.b16 %v5510
        %v5900 = vunpack.c.l.b16 %v5511
        %v5901 = vunpack.c.h.b16 %v5511
        %v5902 = vunpack.c.l.b16 %v5512
        %v5903 = vunpack.c.h.b16 %v5512
        %v5904 = vunpack.c.l.b16 %v5513
        %v5905 = vunpack.c.h.b16 %v5513
        %v5906 = vpack.c.b16 %v5652, %v5650
        %v5907 = vpack.c.b16 %v5653, %v5651
        %v5908 = vpack.c.b16 %v5656, %v5654
        %v5909 = vpack.c.b16 %v5657, %v5655
        %v5910 = vpack.c.b16 %v5660, %v5658
        %v5911 = vpack.c.b16 %v5661, %v5659
        %v5912 = vpack.c.b16 %v5664, %v5662
        %v5913 = vpack.c.b16 %v5665, %v5663
        %v5914 = vpack.c.b16 %v5668, %v5666
        %v5915 = vpack.c.b16 %v5669, %v5667
        %v5916 = vpack.c.b16 %v5672, %v5670
        %v5917 = vpack.c.b16 %v5673, %v5671
        %v5918 = vpack.c.b16 %v5676, %v5674
        %v5919 = vpack.c.b16 %v5677, %v5675
        %v5920 = vpack.c.b16 %v5680, %v5678
        %v5921 = vpack.c.b16 %v5681, %v5679
        %v5922 = vpack.c.b16 %v5684, %v5682
        %v5923 = vpack.c.b16 %v5685, %v5683
        %v5924 = vpack.c.b16 %v5688, %v5686
        %v5925 = vpack.c.b16 %v5689, %v5687
        %v5926 = vpack.c.b16 %v5692, %v5690
        %v5927 = vpack.c.b16 %v5693, %v5691
        %v5928 = vpack.c.b16 %v5696, %v5694
        %v5929 = vpack.c.b16 %v5697, %v5695
        %v5930 = vpack.c.b16 %v5700, %v5698
        %v5931 = vpack.c.b16 %v5701, %v5699
        %v5932 = vpack.c.b16 %v5704, %v5702
        %v5933 = vpack.c.b16 %v5705, %v5703
        %v5934 = vpack.c.b16 %v5708, %v5706
        %v5935 = vpack.c.b16 %v5709, %v5707
        %v5936 = vpack.c.b16 %v5712, %v5710
        %v5937 = vpack.c.b16 %v5713, %v5711
        %v5938 = vpack.c.b16 %v5716, %v5714
        %v5939 = vpack.c.b16 %v5717, %v5715
        %v5940 = vpack.c.b16 %v5720, %v5718
        %v5941 = vpack.c.b16 %v5721, %v5719
        %v5942 = vpack.c.b16 %v5724, %v5722
        %v5943 = vpack.c.b16 %v5725, %v5723
        %v5944 = vpack.c.b16 %v5728, %v5726
        %v5945 = vpack.c.b16 %v5729, %v5727
        %v5946 = vpack.c.b16 %v5732, %v5730
        %v5947 = vpack.c.b16 %v5733, %v5731
        %v5948 = vpack.c.b16 %v5736, %v5734
        %v5949 = vpack.c.b16 %v5737, %v5735
        %v5950 = vpack.c.b16 %v5740, %v5738
        %v5951 = vpack.c.b16 %v5741, %v5739
        %v5952 = vpack.c.b16 %v5744, %v5742
        %v5953 = vpack.c.b16 %v5745, %v5743
        %v5954 = vpack.c.b16 %v5748, %v5746
        %v5955 = vpack.c.b16 %v5749, %v5747
        %v5956 = vpack.c.b16 %v5752, %v5750
        %v5957 = vpack.c.b16 %v5753, %v5751
        %v5958 = vpack.c.b16 %v5756, %v5754
        %v5959 = vpack.c.b16 %v5757, %v5755
        %v5960 = vpack.c.b16 %v5760, %v5758
        %v5961 = vpack.c.b16 %v5761, %v5759
        %v5962 = vpack.c.b16 %v5764, %v5762
        %v5963 = vpack.c.b16 %v5765, %v5763
        %v5964 = vpack.c.b16 %v5768, %v5766
        %v5965 = vpack.c.b16 %v5769, %v5767
        %v5966 = vpack.c.b16 %v5772, %v5770
        %v5967 = vpack.c.b16 %v5773, %v5771
        %v5968 = vpack.c.b16 %v5776, %v5774
        %v5969 = vpack.c.b16 %v5777, %v5775
        %v5970 = vpack.c.b16 %v5780, %v5778
        %v5971 = vpack.c.b16 %v5781, %v5779
        %v5972 = vpack.c.b16 %v5784, %v5782
        %v5973 = vpack.c.b16 %v5785, %v5783
        %v5974 = vpack.c.b16 %v5788, %v5786
        %v5975 = vpack.c.b16 %v5789, %v5787
        %v5976 = vpack.c.b16 %v5792, %v5790
        %v5977 = vpack.c.b16 %v5793, %v5791
        %v5978 = vpack.c.b16 %v5796, %v5794
        %v5979 = vpack.c.b16 %v5797, %v5795
        %v5980 = vpack.c.b16 %v5800, %v5798
        %v5981 = vpack.c.b16 %v5801, %v5799
        %v5982 = vpack.c.b16 %v5804, %v5802
        %v5983 = vpack.c.b16 %v5805, %v5803
        %v5984 = vpack.c.b16 %v5808, %v5806
        %v5985 = vpack.c.b16 %v5809, %v5807
        %v5986 = vpack.c.b16 %v5812, %v5810
        %v5987 = vpack.c.b16 %v5813, %v5811
        %v5988 = vpack.c.b16 %v5816, %v5814
        %v5989 = vpack.c.b16 %v5817, %v5815
        %v5990 = vpack.c.b16 %v5820, %v5818
        %v5991 = vpack.c.b16 %v5821, %v5819
        %v5992 = vpack.c.b16 %v5824, %v5822
        %v5993 = vpack.c.b16 %v5825, %v5823
        %v5994 = vpack.c.b16 %v5828, %v5826
        %v5995 = vpack.c.b16 %v5829, %v5827
        %v5996 = vpack.c.b16 %v5832, %v5830
        %v5997 = vpack.c.b16 %v5833, %v5831
        %v5998 = vpack.c.b16 %v5836, %v5834
        %v5999 = vpack.c.b16 %v5837, %v5835
        %v6000 = vpack.c.b16 %v5840, %v5838
        %v6001 = vpack.c.b16 %v5841, %v5839
        %v6002 = vpack.c.b16 %v5844, %v5842
        %v6003 = vpack.c.b16 %v5845, %v5843
        %v6004 = vpack.c.b16 %v5848, %v5846
        %v6005 = vpack.c.b16 %v5849, %v5847
        %v6006 = vpack.c.b16 %v5852, %v5850
        %v6007 = vpack.c.b16 %v5853, %v5851
        %v6008 = vpack.c.b16 %v5856, %v5854
        %v6009 = vpack.c.b16 %v5857, %v5855
        %v6010 = vpack.c.b16 %v5860, %v5858
        %v6011 = vpack.c.b16 %v5861, %v5859
        %v6012 = vpack.c.b16 %v5864, %v5862
        %v6013 = vpack.c.b16 %v5865, %v5863
        %v6014 = vpack.c.b16 %v5868, %v5866
        %v6015 = vpack.c.b16 %v5869, %v5867
        %v6016 = vpack.c.b16 %v5872, %v5870
        %v6017 = vpack.c.b16 %v5873, %v5871
        %v6018 = vpack.c.b16 %v5876, %v5874
        %v6019 = vpack.c.b16 %v5877, %v5875
        %v6020 = vpack.c.b16 %v5880, %v5878
        %v6021 = vpack.c.b16 %v5881, %v5879
        %v6022 = vpack.c.b16 %v5884, %v5882
        %v6023 = vpack.c.b16 %v5885, %v5883
        %v6024 = vpack.c.b16 %v5888, %v5886
        %v6025 = vpack.c.b16 %v5889, %v5887
        %v6026 = vpack.c.b16 %v5892, %v5890
        %v6027 = vpack.c.b16 %v5893, %v5891
        %v6028 = vpack.c.b16 %v5896, %v5894
        %v6029 = vpack.c.b16 %v5897, %v5895
        %v6030 = vpack.c.b16 %v5900, %v5898
        %v6031 = vpack.c.b16 %v5901, %v5899
        %v6032 = vpack.c.b16 %v5904, %v5902
        %v6033 = vpack.c.b16 %v5905, %v5903
        %6162 = vmatprep.subr.bf16.mxu0 %v5907
        %6163 = vmatpush1.bf16.msra.mxu0 %v5906
        %6164 = vmatprep.subr.bf16.mxu0 %v5909
        %6165 = vmatpush1.bf16.msra.mxu0 %v5908
        %6166 = vmatprep.subr.bf16.mxu0 %v5911
        %6167 = vmatpush1.bf16.msra.mxu0 %v5910
        %6168 = vmatprep.subr.bf16.mxu0 %v5913
        %6169 = vmatpush1.bf16.msra.mxu0 %v5912
        %6170 = vmatprep.subr.bf16.mxu0 %v5915
        %6171 = vmatpush1.bf16.msra.mxu0 %v5914
        %6172 = vmatprep.subr.bf16.mxu0 %v5917
        %6173 = vmatpush1.bf16.msra.mxu0 %v5916
        %6174 = vmatprep.subr.bf16.mxu0 %v5919
        %6175 = vmatpush1.bf16.msra.mxu0 %v5918
        %6176 = vmatprep.subr.bf16.mxu0 %v5921
        %6177 = vmatpush1.bf16.msra.mxu0 %v5920
        %6178 = vmatprep.subr.bf16.mxu0 %v5923
        %6179 = vmatpush1.bf16.msra.mxu0 %v5922
        %6180 = vmatprep.subr.bf16.mxu0 %v5925
        %6181 = vmatpush1.bf16.msra.mxu0 %v5924
        %6182 = vmatprep.subr.bf16.mxu0 %v5927
        %6183 = vmatpush1.bf16.msra.mxu0 %v5926
        %6184 = vmatprep.subr.bf16.mxu0 %v5929
        %6185 = vmatpush1.bf16.msra.mxu0 %v5928
        %6186 = vmatprep.subr.bf16.mxu0 %v5931
        %6187 = vmatpush1.bf16.msra.mxu0 %v5930
        %6188 = vmatprep.subr.bf16.mxu0 %v5933
        %6189 = vmatpush1.bf16.msra.mxu0 %v5932
        %6190 = vmatprep.subr.bf16.mxu0 %v5935
        %6191 = vmatpush1.bf16.msra.mxu0 %v5934
        %6192 = vmatprep.subr.bf16.mxu0 %v5937
        %6193 = vmatpush1.bf16.msra.mxu0 %v5936
        %6194 = vmatprep.mubr.bf16.mxu0 %v5379
        %6195 = vmatmul.mubr.bf16.gmra.mrb[0].mxu0 %v5378
        %v6196 = vpop.f32.mrb[0].mxu0
        %v6197 = vadd.f32 %v5517, %v6196
        %v6198 = vpop.f32.mrb[0].mxu0
        %v6199 = vadd.f32 %v5521, %v6198
        %v6200 = vpop.f32.mrb[0].mxu0
        %v6201 = vadd.f32 %v5517, %v6200
        %v6202 = vpop.f32.mrb[0].mxu0
        %v6203 = vadd.f32 %v5521, %v6202
        %6204 = vdwg.mxu0
        %6205 = vmatprep.subr.bf16.mxu0 %v5939
        %6206 = vmatpush1.bf16.msra.mxu0 %v5938
        %6207 = vmatprep.subr.bf16.mxu0 %v5941
        %6208 = vmatpush1.bf16.msra.mxu0 %v5940
        %6209 = vmatprep.subr.bf16.mxu0 %v5943
        %6210 = vmatpush1.bf16.msra.mxu0 %v5942
        %6211 = vmatprep.subr.bf16.mxu0 %v5945
        %6212 = vmatpush1.bf16.msra.mxu0 %v5944
        %6213 = vmatprep.subr.bf16.mxu0 %v5947
        %6214 = vmatpush1.bf16.msra.mxu0 %v5946
        %6215 = vmatprep.subr.bf16.mxu0 %v5949
        %6216 = vmatpush1.bf16.msra.mxu0 %v5948
        %6217 = vmatprep.subr.bf16.mxu0 %v5951
        %6218 = vmatpush1.bf16.msra.mxu0 %v5950
        %6219 = vmatprep.subr.bf16.mxu0 %v5953
        %6220 = vmatpush1.bf16.msra.mxu0 %v5952
        %6221 = vmatprep.subr.bf16.mxu0 %v5955
        %6222 = vmatpush1.bf16.msra.mxu0 %v5954
        %6223 = vmatprep.subr.bf16.mxu0 %v5957
        %6224 = vmatpush1.bf16.msra.mxu0 %v5956
        %6225 = vmatprep.subr.bf16.mxu0 %v5959
        %6226 = vmatpush1.bf16.msra.mxu0 %v5958
        %6227 = vmatprep.subr.bf16.mxu0 %v5961
        %6228 = vmatpush1.bf16.msra.mxu0 %v5960
        %6229 = vmatprep.subr.bf16.mxu0 %v5963
        %6230 = vmatpush1.bf16.msra.mxu0 %v5962
        %6231 = vmatprep.subr.bf16.mxu0 %v5965
        %6232 = vmatpush1.bf16.msra.mxu0 %v5964
        %6233 = vmatprep.subr.bf16.mxu0 %v5967
        %6234 = vmatpush1.bf16.msra.mxu0 %v5966
        %6235 = vmatprep.subr.bf16.mxu0 %v5969
        %6236 = vmatpush1.bf16.msra.mxu0 %v5968
        %6237 = vmatprep.mubr.bf16.mxu0 %v5381
        %6238 = vmatmul.mubr.bf16.gmra.mrb[0].mxu0 %v5380
        %v6239 = vpop.f32.mrb[0].mxu0
        %v6240 = vadd.f32 %v6197, %v6239
        %v6241 = vpop.f32.mrb[0].mxu0
        %v6242 = vadd.f32 %v6199, %v6241
        %v6243 = vpop.f32.mrb[0].mxu0
        %v6244 = vadd.f32 %v6201, %v6243
        %v6245 = vpop.f32.mrb[0].mxu0
        %v6246 = vadd.f32 %v6203, %v6245
        %6247 = vdwg.mxu0
        %6248 = vmatprep.subr.bf16.mxu0 %v5971
        %6249 = vmatpush1.bf16.msra.mxu0 %v5970
        %6250 = vmatprep.subr.bf16.mxu0 %v5973
        %6251 = vmatpush1.bf16.msra.mxu0 %v5972
        %6252 = vmatprep.subr.bf16.mxu0 %v5975
        %6253 = vmatpush1.bf16.msra.mxu0 %v5974
        %6254 = vmatprep.subr.bf16.mxu0 %v5977
        %6255 = vmatpush1.bf16.msra.mxu0 %v5976
        %6256 = vmatprep.subr.bf16.mxu0 %v5979
        %6257 = vmatpush1.bf16.msra.mxu0 %v5978
        %6258 = vmatprep.subr.bf16.mxu0 %v5981
        %6259 = vmatpush1.bf16.msra.mxu0 %v5980
        %6260 = vmatprep.subr.bf16.mxu0 %v5983
        %6261 = vmatpush1.bf16.msra.mxu0 %v5982
        %6262 = vmatprep.subr.bf16.mxu0 %v5985
        %6263 = vmatpush1.bf16.msra.mxu0 %v5984
        %6264 = vmatprep.subr.bf16.mxu0 %v5987
        %6265 = vmatpush1.bf16.msra.mxu0 %v5986
        %6266 = vmatprep.subr.bf16.mxu0 %v5989
        %6267 = vmatpush1.bf16.msra.mxu0 %v5988
        %6268 = vmatprep.subr.bf16.mxu0 %v5991
        %6269 = vmatpush1.bf16.msra.mxu0 %v5990
        %6270 = vmatprep.subr.bf16.mxu0 %v5993
        %6271 = vmatpush1.bf16.msra.mxu0 %v5992
        %6272 = vmatprep.subr.bf16.mxu0 %v5995
        %6273 = vmatpush1.bf16.msra.mxu0 %v5994
        %6274 = vmatprep.subr.bf16.mxu0 %v5997
        %6275 = vmatpush1.bf16.msra.mxu0 %v5996
        %6276 = vmatprep.subr.bf16.mxu0 %v5999
        %6277 = vmatpush1.bf16.msra.mxu0 %v5998
        %6278 = vmatprep.subr.bf16.mxu0 %v6001
        %6279 = vmatpush1.bf16.msra.mxu0 %v6000
        %6280 = vmatprep.mubr.bf16.mxu0 %v5383
        %6281 = vmatmul.mubr.bf16.gmra.mrb[0].mxu0 %v5382
        %v6282 = vpop.f32.mrb[0].mxu0
        %v6283 = vadd.f32 %v6240, %v6282
        %v6284 = vpop.f32.mrb[0].mxu0
        %v6285 = vadd.f32 %v6242, %v6284
        %v6286 = vpop.f32.mrb[0].mxu0
        %v6287 = vadd.f32 %v6244, %v6286
        %v6288 = vpop.f32.mrb[0].mxu0
        %v6289 = vadd.f32 %v6246, %v6288
        %6290 = vdwg.mxu0
        %6291 = vmatprep.subr.bf16.mxu0 %v6003
        %6292 = vmatpush1.bf16.msra.mxu0 %v6002
        %6293 = vmatprep.subr.bf16.mxu0 %v6005
        %6294 = vmatpush1.bf16.msra.mxu0 %v6004
        %6295 = vmatprep.subr.bf16.mxu0 %v6007
        %6296 = vmatpush1.bf16.msra.mxu0 %v6006
        %6297 = vmatprep.subr.bf16.mxu0 %v6009
        %6298 = vmatpush1.bf16.msra.mxu0 %v6008
        %6299 = vmatprep.subr.bf16.mxu0 %v6011
        %6300 = vmatpush1.bf16.msra.mxu0 %v6010
        %6301 = vmatprep.subr.bf16.mxu0 %v6013
        %6302 = vmatpush1.bf16.msra.mxu0 %v6012
        %6303 = vmatprep.subr.bf16.mxu0 %v6015
        %6304 = vmatpush1.bf16.msra.mxu0 %v6014
        %6305 = vmatprep.subr.bf16.mxu0 %v6017
        %6306 = vmatpush1.bf16.msra.mxu0 %v6016
        %6307 = vmatprep.subr.bf16.mxu0 %v6019
        %6308 = vmatpush1.bf16.msra.mxu0 %v6018
        %6309 = vmatprep.subr.bf16.mxu0 %v6021
        %6310 = vmatpush1.bf16.msra.mxu0 %v6020
        %6311 = vmatprep.subr.bf16.mxu0 %v6023
        %6312 = vmatpush1.bf16.msra.mxu0 %v6022
        %6313 = vmatprep.subr.bf16.mxu0 %v6025
        %6314 = vmatpush1.bf16.msra.mxu0 %v6024
        %6315 = vmatprep.subr.bf16.mxu0 %v6027
        %6316 = vmatpush1.bf16.msra.mxu0 %v6026
        %6317 = vmatprep.subr.bf16.mxu0 %v6029
        %6318 = vmatpush1.bf16.msra.mxu0 %v6028
        %6319 = vmatprep.subr.bf16.mxu0 %v6031
        %6320 = vmatpush1.bf16.msra.mxu0 %v6030
        %6321 = vmatprep.subr.bf16.mxu0 %v6033
        %6322 = vmatpush1.bf16.msra.mxu0 %v6032
        %6323 = vmatprep.mubr.bf16.mxu0 %v5385
        %6324 = vmatmul.mubr.bf16.gmra.mrb[0].mxu0 %v5384
        %v6325 = vpop.f32.mrb[0].mxu0
        %v6326 = vadd.f32 %v6283, %v6325
        %v6327 = vpop.f32.mrb[0].mxu0
        %v6328 = vadd.f32 %v6285, %v6327
        %v6329 = vpop.f32.mrb[0].mxu0
        %v6330 = vadd.f32 %v6287, %v6329
        %v6331 = vpop.f32.mrb[0].mxu0
        %v6332 = vadd.f32 %v6289, %v6331
        %6333 = vdwg.mxu0
        %v6334 = vadd.f32 %v4374, %v6326
        %v6335 = vadd.f32 %v4375, %v6328
        %v6336 = vadd.f32 %v4376, %v6330
        %v6337 = vadd.f32 %v4377, %v6332
        %v6338 = vadd.f32 %v6334, %v6335
        %6339 = vadd.xlane.f32.xlu0 %v6338
        %v6340 = vpop.xlane.xlu0 %6339
        %v6341 = vadd.f32 %v6336, %v6337
        %6342 = vadd.xlane.f32.xlu0 %v6341
        %v6343 = vpop.xlane.xlu0 %6342
        %v6344 = vmul.f32 %v6340, %v4327
        %v6345 = vmul.f32 %v6343, %v4327
        %v6346 = vsub.f32 %v6334, %v6344
        %v6347 = vsub.f32 %v6335, %v6344
        %v6348 = vsub.f32 %v6336, %v6345
        %v6349 = vsub.f32 %v6337, %v6345
        %v6350 = vmul.f32 %v6346, %v6346
        %v6351 = vmul.f32 %v6347, %v6347
        %v6352 = vmul.f32 %v6348, %v6348
        %v6353 = vmul.f32 %v6349, %v6349
        %v6354 = vadd.f32 %v6350, %v6351
        %6355 = vadd.xlane.f32.xlu0 %v6354
        %v6356 = vpop.xlane.xlu0 %6355
        %v6357 = vadd.f32 %v6352, %v6353
        %6358 = vadd.xlane.f32.xlu0 %v6357
        %v6359 = vpop.xlane.xlu0 %6358
        %v6360 = vmul.f32 %v6356, %v4327
        %v6361 = vmul.f32 %v6359, %v4327
        %v6362 = vadd.f32 %v6360, 1e-05
        %v6363 = vadd.f32 %v6361, 1e-05
        %v6364 = vrsqrt.pop %v6362
        %v6365 = vrsqrt.pop %v6363
        %v6366 = vmul.f32 %v6346, %v6364
        %v6367 = vmul.f32 %v6347, %v6364
        %v6368 = vmul.f32 %v6348, %v6365
        %v6369 = vmul.f32 %v6349, %v6365
        %v6370 = vlaneseq
        %v6371 = vshrl.u32 %v6370, 7
        %v6372 = vsub.s32 7, %v6371
        %v6373 = vrot.slane %v646, %v6372
        %v6374 = vlaneseq
        %v6375 = vshrl.u32 %v6374, 7
        %v6376 = vsub.s32 7, %v6375
        %v6377 = vrot.slane %v647, %v6376
        %v6378 = vmul.f32 %v6366, %v6373
        %v6379 = vmul.f32 %v6367, %v6377
        %v6380 = vmul.f32 %v6368, %v6373
        %v6381 = vmul.f32 %v6369, %v6377
        %v6382 = vlaneseq
        %v6383 = vshrl.u32 %v6382, 7
        %v6384 = vsub.s32 0, %v6383
        %v6385 = vrot.slane %v648, %v6384
        %v6386 = vlaneseq
        %v6387 = vshrl.u32 %v6386, 7
        %v6388 = vsub.s32 0, %v6387
        %v6389 = vrot.slane %v649, %v6388
        %v6390 = vadd.f32 %v6378, %v6385
        %v6391 = vadd.f32 %v6379, %v6389
        %v6392 = vadd.f32 %v6380, %v6385
        %v6393 = vadd.f32 %v6381, %v6389
        %6394 = vst [vmem:[%s639] sm:$0xff] %v6390
        %6395 = vst [vmem:[%s639 + $0x8] sm:$0xff] %v6391
        %6396 = vst [vmem:[%s639 + $0x10] sm:$0xff] %v6392
        %6397 = vst [vmem:[%s639 + $0x18] sm:$0xff] %v6393
        %s6398 = sand.u32 %s318, 1
        %s6399 = scalar_lea.sflag [#allocation4], %s6398
        %s6400 = sand.u32 %s318, 1
        %s6401 = smul.addr %s6400, 32
        %s6402 = scalar_lea.vmem [#allocation19], %s6401
        // Predicated region
        $region109: #{tpu_custom_call.1} parent=67 // pred_check
          %p6403 = pneg %p328
        $region110: #{tpu_custom_call.1} parent=67 // pred_check_branch
          %6405 = sbr.rel (%p6403) target = $region112
        $region111: #{tpu_custom_call.1} parent=67 // pred_region
          %s6406 = smul.u32 2, %s38
          %s6408 = ssub.s32 512, 512
          %6409 = vsyncadd %s6399, %s6408
          %s6410 = smul.addr %s6406, 2
          %s6411 = smul.addr %s6410, 128
          %s6412 = scalar_lea.hbm %s12, %s6411
          %s6413 = sshll.u32 %s6402, 4
          %s6414 = int_to_ptr.vmem [resolvable:$true] %s6413
          %6419 = dma.vmem_to_hbm [thread:$0]  %s6414, 512, %s6412, %s6399, 256, 256, 16
        $region112: #{tpu_custom_call.1} parent=67 // pred_fallthru
          _
      $region68: #{tpu_custom_call.1} parent=5 // pred_fallthru
        _
      %p6420 = scmp.le.s32.totalorder 2, %s33
      // Predicated region
      $region113: #{tpu_custom_call.1} parent=5 // pred_check
        %p6421 = pneg %p6420
      $region114: #{tpu_custom_call.1} parent=5 // pred_check_branch
        %6423 = sbr.rel (%p6421) target = $region116
      $region115: #{tpu_custom_call.1} parent=5 // pred_region
        %s6424 = ssub.s32 %s33, 2
        // Predicated region
        $region117: #{tpu_custom_call.1} parent=115 // pred_check
          %p6425 = pneg %p334
        $region118: #{tpu_custom_call.1} parent=115 // pred_check_branch
          %6427 = sbr.rel (%p6425) target = $region120
        $region119: #{tpu_custom_call.1} parent=115 // pred_region
          %s6428 = sand.u32 %s319, 1
          %s6429 = scalar_lea.sflag [#allocation4], %s6428
          %s6430 = sand.u32 %s319, 1
          %s6431 = smul.addr %s6430, 32
          %s6432 = scalar_lea.vmem [#allocation19], %s6431
          %6433 = dma.done %s6429, 512
        $region120: #{tpu_custom_call.1} parent=115 // pred_fallthru
          _
      $region116: #{tpu_custom_call.1} parent=5 // pred_fallthru
        _
    $region6: #{tpu_custom_call.1} parent=1 // loop_footer
      %s37 = sadd.s32 1, %s33
    $region7: #{tpu_custom_call.1} parent=1 // loop_footer_branch
      %32 = sbr.rel target = $region3
    $region8: #{tpu_custom_call.1} parent=1 // loop_exit
      _
    %6434 = vsyncpa [#allocation3], 1
    %s6435 = scalar_lea.sflag [#allocation3], 1
    %6436 = vsyncpa %s6435, 1
    %6437 = vsyncpa [#allocation6], 1
    %s6438 = scalar_lea.sflag [#allocation6], 1
    %6439 = vsyncpa %s6438, 1
    %6440 = vsyncpa [#allocation9], 1
    %s6441 = scalar_lea.sflag [#allocation9], 1
    %6442 = vsyncpa %s6441, 1
    %6443 = vsyncpa [#allocation12], 1
    %6444 = vsyncpa [#allocation15], 1
    %6445 = vsyncpa [#allocation18], 1
    %6446 = vsyncpa [#allocation4], 1
    %s6447 = scalar_lea.sflag [#allocation4], 1
    %6448 = vsyncpa %s6447, 1

</llo_original>
